<compile_context>
chip_gen: v5e
topology: v5e:2x2
jax: 0.10.0
libtpu: 0.0.40
codegen_flags: <defaults>
</compile_context>

<pallas_src>
import functools

import jax
import jax.numpy as jnp
from jax import lax
from jax.experimental import pallas as pl
from jax.experimental.pallas import tpu as pltpu


def _basic_block_kernel(H, W,
                        x_ref, w1_ref, s1_ref, b1_ref,
                        w2_ref, s2_ref, b2_ref,
                        o_ref):
    HW = H * W

    # Column-index masks for the horizontal taps (hoisted; reused by both convs).
    col = lax.broadcasted_iota(jnp.int32, (HW, 1), 0) % W
    not_left = col >= 1          # valid when the tap reads column w-1
    not_right = col <= (W - 2)   # valid when the tap reads column w+1

    def conv3x3(src, w_ref):
        """src: (H*W, Cin) bf16, flat NHWC.  w_ref: (9, Cin, Cout) bf16 ref.

        Returns (H*W, Cout) f32.  Vertical boundary handled by an aligned
        zero-pad of 2*W rows on each side of the flat buffer; horizontal
        boundary handled by the iota column masks.  Each tap is a static
        row-shifted slice -> bf16 matmul with f32 accumulation on the MXU.
        """
        cin = src.shape[-1]
        zpad = jnp.zeros((2 * W, cin), src.dtype)
        padded = jnp.concatenate([zpad, src, zpad], axis=0)   # ((H+4)*W, Cin)
        acc = None
        for kh in range(3):
            dh = kh - 1
            for kw in range(3):
                dw = kw - 1
                start = 2 * W + dh * W + dw                   # always in-bounds
                tap = padded[start:start + HW, :]             # (H*W, Cin) bf16
                if dw == -1:
                    tap = jnp.where(not_left, tap, jnp.zeros_like(tap))
                elif dw == 1:
                    tap = jnp.where(not_right, tap, jnp.zeros_like(tap))
                contrib = jnp.dot(tap, w_ref[kh * 3 + kw],
                                  preferred_element_type=jnp.float32)
                acc = contrib if acc is None else acc + contrib
        return acc

    x_bf16 = x_ref[0]                                         # (H*W, C) bf16

    # conv1 (3x3) + bn1 (folded) + relu
    t1 = conv3x3(x_bf16, w1_ref)                              # f32
    t1 = jnp.maximum(t1 * s1_ref[...] + b1_ref[...], 0.0)

    # conv2 (3x3) + bn2 (folded)
    t2 = conv3x3(t1.astype(jnp.bfloat16), w2_ref)             # f32
    t2 = t2 * s2_ref[...] + b2_ref[...]

    # residual add (re-read x here to keep its live range short) + relu
    out = jnp.maximum(t2 + x_ref[0].astype(jnp.float32), 0.0)
    o_ref[0] = out.astype(o_ref.dtype)


def basic_block_pallas(x_nhwc, params):
    """x_nhwc: (N, H, W, C) with inplanes == planes (stride=1, downsample=None)."""
    w1, s1, b1, w2, s2, b2 = params
    N, H, W, Cin = x_nhwc.shape
    P = w1.shape[-1]
    assert Cin == P, "residual add requires inplanes == planes (downsample=None)"

    # bf16 streaming I/O and bf16 MXU weights; BN scale/bias stay f32.
    x_flat = x_nhwc.reshape(N, H * W, Cin).astype(jnp.bfloat16)
    w1 = w1.astype(jnp.bfloat16)
    w2 = w2.astype(jnp.bfloat16)
    s1 = s1.astype(jnp.float32)
    b1 = b1.astype(jnp.float32)
    s2 = s2.astype(jnp.float32)
    b2 = b2.astype(jnp.float32)

    def full_spec(shape):
        return pl.BlockSpec(shape, lambda n, _s=shape: (0,) * len(_s))

    kernel = functools.partial(_basic_block_kernel, H, W)
    out = pl.pallas_call(
        kernel,
        out_shape=jax.ShapeDtypeStruct((N, H * W, P), jnp.bfloat16),
        grid=(N,),
        in_specs=[
            pl.BlockSpec((1, H * W, Cin), lambda n: (n, 0, 0)),
            full_spec(w1.shape), full_spec(s1.shape), full_spec(b1.shape),
            full_spec(w2.shape), full_spec(s2.shape), full_spec(b2.shape),
        ],
        out_specs=pl.BlockSpec((1, H * W, P), lambda n: (n, 0, 0)),
        compiler_params=pltpu.CompilerParams(
            dimension_semantics=("parallel",),
            vmem_limit_bytes=32 * 1024 * 1024),
    )(x_flat, w1, s1, b1, w2, s2, b2)
    return out.reshape(N, H, W, P)


def ref_basic_block(x, w1_hwio, s1, b1, w2_hwio, s2, b2, quantize_mid=False):
    """Pure-JAX reference (eval-mode BN folded).  quantize_mid=True mirrors the
    kernel's bf16 intermediate-activation policy for a tight comparison."""
    dn = ('NHWC', 'HWIO', 'NHWC')
    y = lax.conv_general_dilated(x, w1_hwio, (1, 1), ((1, 1), (1, 1)),
                                 dimension_numbers=dn)
    y = jnp.maximum(y * s1 + b1, 0.0)
    if quantize_mid:
        y = y.astype(jnp.bfloat16).astype(jnp.float32)
    y = lax.conv_general_dilated(y, w2_hwio, (1, 1), ((1, 1), (1, 1)),
                                 dimension_numbers=dn)
    y = y * s2 + b2
    return jnp.maximum(y + x, 0.0)


if __name__ == "__main__":
    key = jax.random.PRNGKey(0)
    N, H, W = 2, 16, 16
    planes = 128                 # lane-dense channel dim (>=128) per perf feedback
    inplanes = planes            # BasicBlock, stride=1, downsample=None

    ks = jax.random.split(key, 11)
    x_nchw = jax.random.normal(ks[0], (N, inplanes, H, W), jnp.float32)

    # PyTorch-shaped (OIHW) conv weights, bias=False.
    w1_t = jax.random.normal(ks[1], (planes, inplanes, 3, 3), jnp.float32) * 0.05
    w2_t = jax.random.normal(ks[2], (planes, planes, 3, 3), jnp.float32) * 0.05

    def bn_fold(kg, kb, km, kv, c, eps=1e-5):
        gamma = jax.random.uniform(kg, (c,), jnp.float32, 0.5, 1.5)
        beta = jax.random.normal(kb, (c,), jnp.float32) * 0.1
        mean = jax.random.normal(km, (c,), jnp.float32) * 0.1
        var = jax.random.uniform(kv, (c,), jnp.float32, 0.5, 1.5)
        scale = gamma * lax.rsqrt(var + eps)
        bias = beta - mean * scale
        return scale.reshape(1, c), bias.reshape(1, c)

    s1, b1 = bn_fold(ks[3], ks[4], ks[5], ks[6], planes)
    s2, b2 = bn_fold(ks[7], ks[8], ks[9], ks[10], planes)

    # Quantize x / weights to bf16 once so kernel and reference see identical values.
    x_nhwc = jnp.transpose(x_nchw, (0, 2, 3, 1))                     # NCHW -> NHWC
    x_q = x_nhwc.astype(jnp.bfloat16).astype(jnp.float32)
    w1_hwio = jnp.transpose(w1_t, (2, 3, 1, 0))                      # (3,3,Cin,Cout)
    w2_hwio = jnp.transpose(w2_t, (2, 3, 1, 0))
    w1_q = w1_hwio.astype(jnp.bfloat16).astype(jnp.float32)
    w2_q = w2_hwio.astype(jnp.bfloat16).astype(jnp.float32)
    w1_taps = w1_q.reshape(9, inplanes, planes)                      # tap = kh*3+kw
    w2_taps = w2_q.reshape(9, planes, planes)

    out = basic_block_pallas(x_q, (w1_taps, s1, b1, w2_taps, s2, b2))
    out = jax.block_until_ready(out)
    out_f32 = out.astype(jnp.float32)

    # Tight check against a reference that mirrors the kernel's bf16 intermediate
    # policy, and a looser check against the pure-f32 reference.
    ref_mixed = ref_basic_block(x_q, w1_q, s1, b1, w2_q, s2, b2, quantize_mid=True)
    ref_f32 = ref_basic_block(x_q, w1_q, s1, b1, w2_q, s2, b2, quantize_mid=False)

    err_mixed = float(jnp.max(jnp.abs(out_f32 - ref_mixed)))
    err_f32 = float(jnp.max(jnp.abs(out_f32 - ref_f32)))
    assert jnp.allclose(out_f32, ref_mixed, rtol=2e-2, atol=2e-2), \
        f"mixed-precision reference mismatch: max err {err_mixed}"
    assert jnp.allclose(out_f32, ref_f32, rtol=1e-1, atol=1e-1), \
        f"f32 reference mismatch: max err {err_f32}"
    print("KERNEL_OK")
</pallas_src>

<mosaic_0001>
module attributes {stable_mosaic.version = 11 : i64} {
  func.func @_basic_block_kernel(%arg0: i32, %arg1: memref<1x256x128xbf16, #tpu.memory_space<vmem>>, %arg2: memref<9x128x128xbf16, #tpu.memory_space<vmem>>, %arg3: memref<1x128xf32, #tpu.memory_space<vmem>>, %arg4: memref<1x128xf32, #tpu.memory_space<vmem>>, %arg5: memref<9x128x128xbf16, #tpu.memory_space<vmem>>, %arg6: memref<1x128xf32, #tpu.memory_space<vmem>>, %arg7: memref<1x128xf32, #tpu.memory_space<vmem>>, %arg8: memref<1x256x128xbf16, #tpu.memory_space<vmem>>) attributes {dimension_semantics = [#tpu.dimension_semantics<parallel>], iteration_bounds = array<i64: 2>, scalar_prefetch = 0 : i64, scratch_operands = 0 : i64, tpu.core_type = #tpu.core_type<tc>, window_params = [{transform_indices = @transform_0, window_bounds = array<i64: 1, 256, 128>}, {pipeline_mode = #tpu.pipeline_mode<synchronous>, transform_indices = @transform_1, window_bounds = array<i64: 9, 128, 128>}, {pipeline_mode = #tpu.pipeline_mode<synchronous>, transform_indices = @transform_2, window_bounds = array<i64: 1, 128>}, {pipeline_mode = #tpu.pipeline_mode<synchronous>, transform_indices = @transform_3, window_bounds = array<i64: 1, 128>}, {pipeline_mode = #tpu.pipeline_mode<synchronous>, transform_indices = @transform_4, window_bounds = array<i64: 9, 128, 128>}, {pipeline_mode = #tpu.pipeline_mode<synchronous>, transform_indices = @transform_5, window_bounds = array<i64: 1, 128>}, {pipeline_mode = #tpu.pipeline_mode<synchronous>, transform_indices = @transform_6, window_bounds = array<i64: 1, 128>}, {transform_indices = @transform_7, window_bounds = array<i64: 1, 256, 128>}]} {
    %0 = tpu.iota {dimensions = array<i32: 0>} : vector<256x1xi32>
    %c16_i32 = arith.constant 16 : i32
    %c0_i32 = arith.constant 0 : i32
    %1 = arith.cmpi eq, %c16_i32, %c0_i32 : i32
    %c1_i32 = arith.constant 1 : i32
    %2 = arith.select %1, %c1_i32, %c16_i32 : i32
    %3 = vector.broadcast %2 : i32 to vector<256x1xi32>
    %4 = arith.remsi %0, %3 : vector<256x1xi32>
    %c0_i32_0 = arith.constant 0 : i32
    %5 = vector.broadcast %c0_i32_0 : i32 to vector<256x1xi32>
    %6 = arith.cmpi ne, %4, %5 : vector<256x1xi32>
    %c0_i32_1 = arith.constant 0 : i32
    %7 = vector.broadcast %c0_i32_1 : i32 to vector<256x1xi32>
    %8 = arith.cmpi slt, %4, %7 : vector<256x1xi32>
    %c0_i32_2 = arith.constant 0 : i32
    %9 = arith.cmpi slt, %2, %c0_i32_2 : i32
    %10 = vector.broadcast %9 : i1 to vector<256x1xi1>
    %11 = vector.broadcast %10 : vector<256x1xi1> to vector<256x1xi1>
    %12 = arith.xori %8, %11 : vector<256x1xi1>
    %13 = arith.andi %12, %6 : vector<256x1xi1>
    %14 = vector.broadcast %2 : i32 to vector<256x1xi32>
    %15 = arith.addi %4, %14 : vector<256x1xi32>
    %16 = arith.select %13, %15, %4 : vector<256x1xi1>, vector<256x1xi32>
    %c1_i32_3 = arith.constant 1 : i32
    %17 = vector.broadcast %c1_i32_3 : i32 to vector<256x1xi32>
    %18 = arith.cmpi sge, %16, %17 : vector<256x1xi32>
    %c14_i32 = arith.constant 14 : i32
    %19 = vector.broadcast %c14_i32 : i32 to vector<256x1xi32>
    %20 = arith.cmpi sle, %16, %19 : vector<256x1xi32>
    %c0 = arith.constant 0 : index
    %c0_4 = arith.constant 0 : index
    %c0_5 = arith.constant 0 : index
    %21 = vector.load %arg1[%c0, %c0_4, %c0_5] : memref<1x256x128xbf16, #tpu.memory_space<vmem>>, vector<1x256x128xbf16>
    %22 = vector.shape_cast %21 : vector<1x256x128xbf16> to vector<256x128xbf16>
    %cst = arith.constant 0.000000e+00 : bf16
    %23 = vector.broadcast %cst : bf16 to vector<32x128xbf16>
    %24 = tpu.concatenate %23, %22, %23 in 0 : vector<32x128xbf16>, vector<256x128xbf16>, vector<32x128xbf16> -> vector<320x128xbf16>
    %25 = vector.extract_strided_slice %24 {offsets = [15, 0], sizes = [256, 128], strides = [1, 1]} : vector<320x128xbf16> to vector<256x128xbf16>
    %cst_6 = arith.constant 0.000000e+00 : bf16
    %26 = vector.broadcast %cst_6 : bf16 to vector<256x128xbf16>
    %27 = vector.shape_cast %18 : vector<256x1xi1> to vector<256x1xi1>
    %28 = vector.broadcast %27 : vector<256x1xi1> to vector<256x128xi1>
    %29 = arith.select %28, %25, %26 : vector<256x128xi1>, vector<256x128xbf16>
    %c0_7 = arith.constant 0 : index
    %c0_8 = arith.constant 0 : index
    %c0_9 = arith.constant 0 : index
    %30 = vector.load %arg2[%c0_7, %c0_8, %c0_9] : memref<9x128x128xbf16, #tpu.memory_space<vmem>>, vector<1x128x128xbf16>
    %31 = vector.shape_cast %30 : vector<1x128x128xbf16> to vector<128x128xbf16>
    %cst_10 = arith.constant dense<0.000000e+00> : vector<256x128xf32>
    %32 = tpu.matmul %29, %31, %cst_10 {dimension_numbers = #tpu.dot_dimension_numbers<[1], [0], [0], [1], [0, 0, 1, 1], [], []>} : vector<256x128xbf16>, vector<128x128xbf16>, vector<256x128xf32> -> vector<256x128xf32>
    %33 = vector.extract_strided_slice %24 {offsets = [16, 0], sizes = [256, 128], strides = [1, 1]} : vector<320x128xbf16> to vector<256x128xbf16>
    %c1 = arith.constant 1 : index
    %c0_11 = arith.constant 0 : index
    %c0_12 = arith.constant 0 : index
    %34 = vector.load %arg2[%c1, %c0_11, %c0_12] : memref<9x128x128xbf16, #tpu.memory_space<vmem>>, vector<1x128x128xbf16>
    %35 = vector.shape_cast %34 : vector<1x128x128xbf16> to vector<128x128xbf16>
    %cst_13 = arith.constant dense<0.000000e+00> : vector<256x128xf32>
    %36 = tpu.matmul %33, %35, %cst_13 {dimension_numbers = #tpu.dot_dimension_numbers<[1], [0], [0], [1], [0, 0, 1, 1], [], []>} : vector<256x128xbf16>, vector<128x128xbf16>, vector<256x128xf32> -> vector<256x128xf32>
    %37 = arith.addf %32, %36 : vector<256x128xf32>
    %38 = vector.extract_strided_slice %24 {offsets = [17, 0], sizes = [256, 128], strides = [1, 1]} : vector<320x128xbf16> to vector<256x128xbf16>
    %cst_14 = arith.constant 0.000000e+00 : bf16
    %39 = vector.broadcast %cst_14 : bf16 to vector<256x128xbf16>
    %40 = vector.shape_cast %20 : vector<256x1xi1> to vector<256x1xi1>
    %41 = vector.broadcast %40 : vector<256x1xi1> to vector<256x128xi1>
    %42 = arith.select %41, %38, %39 : vector<256x128xi1>, vector<256x128xbf16>
    %c2 = arith.constant 2 : index
    %c0_15 = arith.constant 0 : index
    %c0_16 = arith.constant 0 : index
    %43 = vector.load %arg2[%c2, %c0_15, %c0_16] : memref<9x128x128xbf16, #tpu.memory_space<vmem>>, vector<1x128x128xbf16>
    %44 = vector.shape_cast %43 : vector<1x128x128xbf16> to vector<128x128xbf16>
    %cst_17 = arith.constant dense<0.000000e+00> : vector<256x128xf32>
    %45 = tpu.matmul %42, %44, %cst_17 {dimension_numbers = #tpu.dot_dimension_numbers<[1], [0], [0], [1], [0, 0, 1, 1], [], []>} : vector<256x128xbf16>, vector<128x128xbf16>, vector<256x128xf32> -> vector<256x128xf32>
    %46 = arith.addf %37, %45 : vector<256x128xf32>
    %47 = vector.extract_strided_slice %24 {offsets = [31, 0], sizes = [256, 128], strides = [1, 1]} : vector<320x128xbf16> to vector<256x128xbf16>
    %cst_18 = arith.constant 0.000000e+00 : bf16
    %48 = vector.broadcast %cst_18 : bf16 to vector<256x128xbf16>
    %49 = vector.shape_cast %18 : vector<256x1xi1> to vector<256x1xi1>
    %50 = vector.broadcast %49 : vector<256x1xi1> to vector<256x128xi1>
    %51 = arith.select %50, %47, %48 : vector<256x128xi1>, vector<256x128xbf16>
    %c3 = arith.constant 3 : index
    %c0_19 = arith.constant 0 : index
    %c0_20 = arith.constant 0 : index
    %52 = vector.load %arg2[%c3, %c0_19, %c0_20] : memref<9x128x128xbf16, #tpu.memory_space<vmem>>, vector<1x128x128xbf16>
    %53 = vector.shape_cast %52 : vector<1x128x128xbf16> to vector<128x128xbf16>
    %cst_21 = arith.constant dense<0.000000e+00> : vector<256x128xf32>
    %54 = tpu.matmul %51, %53, %cst_21 {dimension_numbers = #tpu.dot_dimension_numbers<[1], [0], [0], [1], [0, 0, 1, 1], [], []>} : vector<256x128xbf16>, vector<128x128xbf16>, vector<256x128xf32> -> vector<256x128xf32>
    %55 = arith.addf %46, %54 : vector<256x128xf32>
    %56 = vector.extract_strided_slice %24 {offsets = [32, 0], sizes = [256, 128], strides = [1, 1]} : vector<320x128xbf16> to vector<256x128xbf16>
    %c4 = arith.constant 4 : index
    %c0_22 = arith.constant 0 : index
    %c0_23 = arith.constant 0 : index
    %57 = vector.load %arg2[%c4, %c0_22, %c0_23] : memref<9x128x128xbf16, #tpu.memory_space<vmem>>, vector<1x128x128xbf16>
    %58 = vector.shape_cast %57 : vector<1x128x128xbf16> to vector<128x128xbf16>
    %cst_24 = arith.constant dense<0.000000e+00> : vector<256x128xf32>
    %59 = tpu.matmul %56, %58, %cst_24 {dimension_numbers = #tpu.dot_dimension_numbers<[1], [0], [0], [1], [0, 0, 1, 1], [], []>} : vector<256x128xbf16>, vector<128x128xbf16>, vector<256x128xf32> -> vector<256x128xf32>
    %60 = arith.addf %55, %59 : vector<256x128xf32>
    %61 = vector.extract_strided_slice %24 {offsets = [33, 0], sizes = [256, 128], strides = [1, 1]} : vector<320x128xbf16> to vector<256x128xbf16>
    %cst_25 = arith.constant 0.000000e+00 : bf16
    %62 = vector.broadcast %cst_25 : bf16 to vector<256x128xbf16>
    %63 = vector.shape_cast %20 : vector<256x1xi1> to vector<256x1xi1>
    %64 = vector.broadcast %63 : vector<256x1xi1> to vector<256x128xi1>
    %65 = arith.select %64, %61, %62 : vector<256x128xi1>, vector<256x128xbf16>
    %c5 = arith.constant 5 : index
    %c0_26 = arith.constant 0 : index
    %c0_27 = arith.constant 0 : index
    %66 = vector.load %arg2[%c5, %c0_26, %c0_27] : memref<9x128x128xbf16, #tpu.memory_space<vmem>>, vector<1x128x128xbf16>
    %67 = vector.shape_cast %66 : vector<1x128x128xbf16> to vector<128x128xbf16>
    %cst_28 = arith.constant dense<0.000000e+00> : vector<256x128xf32>
    %68 = tpu.matmul %65, %67, %cst_28 {dimension_numbers = #tpu.dot_dimension_numbers<[1], [0], [0], [1], [0, 0, 1, 1], [], []>} : vector<256x128xbf16>, vector<128x128xbf16>, vector<256x128xf32> -> vector<256x128xf32>
    %69 = arith.addf %60, %68 : vector<256x128xf32>
    %70 = vector.extract_strided_slice %24 {offsets = [47, 0], sizes = [256, 128], strides = [1, 1]} : vector<320x128xbf16> to vector<256x128xbf16>
    %cst_29 = arith.constant 0.000000e+00 : bf16
    %71 = vector.broadcast %cst_29 : bf16 to vector<256x128xbf16>
    %72 = vector.shape_cast %18 : vector<256x1xi1> to vector<256x1xi1>
    %73 = vector.broadcast %72 : vector<256x1xi1> to vector<256x128xi1>
    %74 = arith.select %73, %70, %71 : vector<256x128xi1>, vector<256x128xbf16>
    %c6 = arith.constant 6 : index
    %c0_30 = arith.constant 0 : index
    %c0_31 = arith.constant 0 : index
    %75 = vector.load %arg2[%c6, %c0_30, %c0_31] : memref<9x128x128xbf16, #tpu.memory_space<vmem>>, vector<1x128x128xbf16>
    %76 = vector.shape_cast %75 : vector<1x128x128xbf16> to vector<128x128xbf16>
    %cst_32 = arith.constant dense<0.000000e+00> : vector<256x128xf32>
    %77 = tpu.matmul %74, %76, %cst_32 {dimension_numbers = #tpu.dot_dimension_numbers<[1], [0], [0], [1], [0, 0, 1, 1], [], []>} : vector<256x128xbf16>, vector<128x128xbf16>, vector<256x128xf32> -> vector<256x128xf32>
    %78 = arith.addf %69, %77 : vector<256x128xf32>
    %79 = vector.extract_strided_slice %24 {offsets = [48, 0], sizes = [256, 128], strides = [1, 1]} : vector<320x128xbf16> to vector<256x128xbf16>
    %c7 = arith.constant 7 : index
    %c0_33 = arith.constant 0 : index
    %c0_34 = arith.constant 0 : index
    %80 = vector.load %arg2[%c7, %c0_33, %c0_34] : memref<9x128x128xbf16, #tpu.memory_space<vmem>>, vector<1x128x128xbf16>
    %81 = vector.shape_cast %80 : vector<1x128x128xbf16> to vector<128x128xbf16>
    %cst_35 = arith.constant dense<0.000000e+00> : vector<256x128xf32>
    %82 = tpu.matmul %79, %81, %cst_35 {dimension_numbers = #tpu.dot_dimension_numbers<[1], [0], [0], [1], [0, 0, 1, 1], [], []>} : vector<256x128xbf16>, vector<128x128xbf16>, vector<256x128xf32> -> vector<256x128xf32>
    %83 = arith.addf %78, %82 : vector<256x128xf32>
    %84 = vector.extract_strided_slice %24 {offsets = [49, 0], sizes = [256, 128], strides = [1, 1]} : vector<320x128xbf16> to vector<256x128xbf16>
    %cst_36 = arith.constant 0.000000e+00 : bf16
    %85 = vector.broadcast %cst_36 : bf16 to vector<256x128xbf16>
    %86 = vector.shape_cast %20 : vector<256x1xi1> to vector<256x1xi1>
    %87 = vector.broadcast %86 : vector<256x1xi1> to vector<256x128xi1>
    %88 = arith.select %87, %84, %85 : vector<256x128xi1>, vector<256x128xbf16>
    %c8 = arith.constant 8 : index
    %c0_37 = arith.constant 0 : index
    %c0_38 = arith.constant 0 : index
    %89 = vector.load %arg2[%c8, %c0_37, %c0_38] : memref<9x128x128xbf16, #tpu.memory_space<vmem>>, vector<1x128x128xbf16>
    %90 = vector.shape_cast %89 : vector<1x128x128xbf16> to vector<128x128xbf16>
    %cst_39 = arith.constant dense<0.000000e+00> : vector<256x128xf32>
    %91 = tpu.matmul %88, %90, %cst_39 {dimension_numbers = #tpu.dot_dimension_numbers<[1], [0], [0], [1], [0, 0, 1, 1], [], []>} : vector<256x128xbf16>, vector<128x128xbf16>, vector<256x128xf32> -> vector<256x128xf32>
    %92 = arith.addf %83, %91 : vector<256x128xf32>
    %c0_40 = arith.constant 0 : index
    %c0_41 = arith.constant 0 : index
    %93 = vector.load %arg3[%c0_40, %c0_41] : memref<1x128xf32, #tpu.memory_space<vmem>>, vector<1x128xf32>
    %94 = vector.broadcast %93 : vector<1x128xf32> to vector<256x128xf32>
    %95 = arith.mulf %92, %94 : vector<256x128xf32>
    %c0_42 = arith.constant 0 : index
    %c0_43 = arith.constant 0 : index
    %96 = vector.load %arg4[%c0_42, %c0_43] : memref<1x128xf32, #tpu.memory_space<vmem>>, vector<1x128xf32>
    %97 = vector.broadcast %96 : vector<1x128xf32> to vector<256x128xf32>
    %98 = arith.addf %95, %97 : vector<256x128xf32>
    %cst_44 = arith.constant 0.000000e+00 : f32
    %99 = vector.broadcast %cst_44 : f32 to vector<256x128xf32>
    %100 = arith.maximumf %98, %99 : vector<256x128xf32>
    %101 = arith.truncf %100 : vector<256x128xf32> to vector<256x128xbf16>
    %cst_45 = arith.constant 0.000000e+00 : bf16
    %102 = vector.broadcast %cst_45 : bf16 to vector<32x128xbf16>
    %103 = tpu.concatenate %102, %101, %102 in 0 : vector<32x128xbf16>, vector<256x128xbf16>, vector<32x128xbf16> -> vector<320x128xbf16>
    %104 = vector.extract_strided_slice %103 {offsets = [15, 0], sizes = [256, 128], strides = [1, 1]} : vector<320x128xbf16> to vector<256x128xbf16>
    %cst_46 = arith.constant 0.000000e+00 : bf16
    %105 = vector.broadcast %cst_46 : bf16 to vector<256x128xbf16>
    %106 = vector.shape_cast %18 : vector<256x1xi1> to vector<256x1xi1>
    %107 = vector.broadcast %106 : vector<256x1xi1> to vector<256x128xi1>
    %108 = arith.select %107, %104, %105 : vector<256x128xi1>, vector<256x128xbf16>
    %c0_47 = arith.constant 0 : index
    %c0_48 = arith.constant 0 : index
    %c0_49 = arith.constant 0 : index
    %109 = vector.load %arg5[%c0_47, %c0_48, %c0_49] : memref<9x128x128xbf16, #tpu.memory_space<vmem>>, vector<1x128x128xbf16>
    %110 = vector.shape_cast %109 : vector<1x128x128xbf16> to vector<128x128xbf16>
    %cst_50 = arith.constant dense<0.000000e+00> : vector<256x128xf32>
    %111 = tpu.matmul %108, %110, %cst_50 {dimension_numbers = #tpu.dot_dimension_numbers<[1], [0], [0], [1], [0, 0, 1, 1], [], []>} : vector<256x128xbf16>, vector<128x128xbf16>, vector<256x128xf32> -> vector<256x128xf32>
    %112 = vector.extract_strided_slice %103 {offsets = [16, 0], sizes = [256, 128], strides = [1, 1]} : vector<320x128xbf16> to vector<256x128xbf16>
    %c1_51 = arith.constant 1 : index
    %c0_52 = arith.constant 0 : index
    %c0_53 = arith.constant 0 : index
    %113 = vector.load %arg5[%c1_51, %c0_52, %c0_53] : memref<9x128x128xbf16, #tpu.memory_space<vmem>>, vector<1x128x128xbf16>
    %114 = vector.shape_cast %113 : vector<1x128x128xbf16> to vector<128x128xbf16>
    %cst_54 = arith.constant dense<0.000000e+00> : vector<256x128xf32>
    %115 = tpu.matmul %112, %114, %cst_54 {dimension_numbers = #tpu.dot_dimension_numbers<[1], [0], [0], [1], [0, 0, 1, 1], [], []>} : vector<256x128xbf16>, vector<128x128xbf16>, vector<256x128xf32> -> vector<256x128xf32>
    %116 = arith.addf %111, %115 : vector<256x128xf32>
    %117 = vector.extract_strided_slice %103 {offsets = [17, 0], sizes = [256, 128], strides = [1, 1]} : vector<320x128xbf16> to vector<256x128xbf16>
    %cst_55 = arith.constant 0.000000e+00 : bf16
    %118 = vector.broadcast %cst_55 : bf16 to vector<256x128xbf16>
    %119 = vector.shape_cast %20 : vector<256x1xi1> to vector<256x1xi1>
    %120 = vector.broadcast %119 : vector<256x1xi1> to vector<256x128xi1>
    %121 = arith.select %120, %117, %118 : vector<256x128xi1>, vector<256x128xbf16>
    %c2_56 = arith.constant 2 : index
    %c0_57 = arith.constant 0 : index
    %c0_58 = arith.constant 0 : index
    %122 = vector.load %arg5[%c2_56, %c0_57, %c0_58] : memref<9x128x128xbf16, #tpu.memory_space<vmem>>, vector<1x128x128xbf16>
    %123 = vector.shape_cast %122 : vector<1x128x128xbf16> to vector<128x128xbf16>
    %cst_59 = arith.constant dense<0.000000e+00> : vector<256x128xf32>
    %124 = tpu.matmul %121, %123, %cst_59 {dimension_numbers = #tpu.dot_dimension_numbers<[1], [0], [0], [1], [0, 0, 1, 1], [], []>} : vector<256x128xbf16>, vector<128x128xbf16>, vector<256x128xf32> -> vector<256x128xf32>
    %125 = arith.addf %116, %124 : vector<256x128xf32>
    %126 = vector.extract_strided_slice %103 {offsets = [31, 0], sizes = [256, 128], strides = [1, 1]} : vector<320x128xbf16> to vector<256x128xbf16>
    %cst_60 = arith.constant 0.000000e+00 : bf16
    %127 = vector.broadcast %cst_60 : bf16 to vector<256x128xbf16>
    %128 = vector.shape_cast %18 : vector<256x1xi1> to vector<256x1xi1>
    %129 = vector.broadcast %128 : vector<256x1xi1> to vector<256x128xi1>
    %130 = arith.select %129, %126, %127 : vector<256x128xi1>, vector<256x128xbf16>
    %c3_61 = arith.constant 3 : index
    %c0_62 = arith.constant 0 : index
    %c0_63 = arith.constant 0 : index
    %131 = vector.load %arg5[%c3_61, %c0_62, %c0_63] : memref<9x128x128xbf16, #tpu.memory_space<vmem>>, vector<1x128x128xbf16>
    %132 = vector.shape_cast %131 : vector<1x128x128xbf16> to vector<128x128xbf16>
    %cst_64 = arith.constant dense<0.000000e+00> : vector<256x128xf32>
    %133 = tpu.matmul %130, %132, %cst_64 {dimension_numbers = #tpu.dot_dimension_numbers<[1], [0], [0], [1], [0, 0, 1, 1], [], []>} : vector<256x128xbf16>, vector<128x128xbf16>, vector<256x128xf32> -> vector<256x128xf32>
    %134 = arith.addf %125, %133 : vector<256x128xf32>
    %135 = vector.extract_strided_slice %103 {offsets = [32, 0], sizes = [256, 128], strides = [1, 1]} : vector<320x128xbf16> to vector<256x128xbf16>
    %c4_65 = arith.constant 4 : index
    %c0_66 = arith.constant 0 : index
    %c0_67 = arith.constant 0 : index
    %136 = vector.load %arg5[%c4_65, %c0_66, %c0_67] : memref<9x128x128xbf16, #tpu.memory_space<vmem>>, vector<1x128x128xbf16>
    %137 = vector.shape_cast %136 : vector<1x128x128xbf16> to vector<128x128xbf16>
    %cst_68 = arith.constant dense<0.000000e+00> : vector<256x128xf32>
    %138 = tpu.matmul %135, %137, %cst_68 {dimension_numbers = #tpu.dot_dimension_numbers<[1], [0], [0], [1], [0, 0, 1, 1], [], []>} : vector<256x128xbf16>, vector<128x128xbf16>, vector<256x128xf32> -> vector<256x128xf32>
    %139 = arith.addf %134, %138 : vector<256x128xf32>
    %140 = vector.extract_strided_slice %103 {offsets = [33, 0], sizes = [256, 128], strides = [1, 1]} : vector<320x128xbf16> to vector<256x128xbf16>
    %cst_69 = arith.constant 0.000000e+00 : bf16
    %141 = vector.broadcast %cst_69 : bf16 to vector<256x128xbf16>
    %142 = vector.shape_cast %20 : vector<256x1xi1> to vector<256x1xi1>
    %143 = vector.broadcast %142 : vector<256x1xi1> to vector<256x128xi1>
    %144 = arith.select %143, %140, %141 : vector<256x128xi1>, vector<256x128xbf16>
    %c5_70 = arith.constant 5 : index
    %c0_71 = arith.constant 0 : index
    %c0_72 = arith.constant 0 : index
    %145 = vector.load %arg5[%c5_70, %c0_71, %c0_72] : memref<9x128x128xbf16, #tpu.memory_space<vmem>>, vector<1x128x128xbf16>
    %146 = vector.shape_cast %145 : vector<1x128x128xbf16> to vector<128x128xbf16>
    %cst_73 = arith.constant dense<0.000000e+00> : vector<256x128xf32>
    %147 = tpu.matmul %144, %146, %cst_73 {dimension_numbers = #tpu.dot_dimension_numbers<[1], [0], [0], [1], [0, 0, 1, 1], [], []>} : vector<256x128xbf16>, vector<128x128xbf16>, vector<256x128xf32> -> vector<256x128xf32>
    %148 = arith.addf %139, %147 : vector<256x128xf32>
    %149 = vector.extract_strided_slice %103 {offsets = [47, 0], sizes = [256, 128], strides = [1, 1]} : vector<320x128xbf16> to vector<256x128xbf16>
    %cst_74 = arith.constant 0.000000e+00 : bf16
    %150 = vector.broadcast %cst_74 : bf16 to vector<256x128xbf16>
    %151 = vector.shape_cast %18 : vector<256x1xi1> to vector<256x1xi1>
    %152 = vector.broadcast %151 : vector<256x1xi1> to vector<256x128xi1>
    %153 = arith.select %152, %149, %150 : vector<256x128xi1>, vector<256x128xbf16>
    %c6_75 = arith.constant 6 : index
    %c0_76 = arith.constant 0 : index
    %c0_77 = arith.constant 0 : index
    %154 = vector.load %arg5[%c6_75, %c0_76, %c0_77] : memref<9x128x128xbf16, #tpu.memory_space<vmem>>, vector<1x128x128xbf16>
    %155 = vector.shape_cast %154 : vector<1x128x128xbf16> to vector<128x128xbf16>
    %cst_78 = arith.constant dense<0.000000e+00> : vector<256x128xf32>
    %156 = tpu.matmul %153, %155, %cst_78 {dimension_numbers = #tpu.dot_dimension_numbers<[1], [0], [0], [1], [0, 0, 1, 1], [], []>} : vector<256x128xbf16>, vector<128x128xbf16>, vector<256x128xf32> -> vector<256x128xf32>
    %157 = arith.addf %148, %156 : vector<256x128xf32>
    %158 = vector.extract_strided_slice %103 {offsets = [48, 0], sizes = [256, 128], strides = [1, 1]} : vector<320x128xbf16> to vector<256x128xbf16>
    %c7_79 = arith.constant 7 : index
    %c0_80 = arith.constant 0 : index
    %c0_81 = arith.constant 0 : index
    %159 = vector.load %arg5[%c7_79, %c0_80, %c0_81] : memref<9x128x128xbf16, #tpu.memory_space<vmem>>, vector<1x128x128xbf16>
    %160 = vector.shape_cast %159 : vector<1x128x128xbf16> to vector<128x128xbf16>
    %cst_82 = arith.constant dense<0.000000e+00> : vector<256x128xf32>
    %161 = tpu.matmul %158, %160, %cst_82 {dimension_numbers = #tpu.dot_dimension_numbers<[1], [0], [0], [1], [0, 0, 1, 1], [], []>} : vector<256x128xbf16>, vector<128x128xbf16>, vector<256x128xf32> -> vector<256x128xf32>
    %162 = arith.addf %157, %161 : vector<256x128xf32>
    %163 = vector.extract_strided_slice %103 {offsets = [49, 0], sizes = [256, 128], strides = [1, 1]} : vector<320x128xbf16> to vector<256x128xbf16>
    %cst_83 = arith.constant 0.000000e+00 : bf16
    %164 = vector.broadcast %cst_83 : bf16 to vector<256x128xbf16>
    %165 = vector.shape_cast %20 : vector<256x1xi1> to vector<256x1xi1>
    %166 = vector.broadcast %165 : vector<256x1xi1> to vector<256x128xi1>
    %167 = arith.select %166, %163, %164 : vector<256x128xi1>, vector<256x128xbf16>
    %c8_84 = arith.constant 8 : index
    %c0_85 = arith.constant 0 : index
    %c0_86 = arith.constant 0 : index
    %168 = vector.load %arg5[%c8_84, %c0_85, %c0_86] : memref<9x128x128xbf16, #tpu.memory_space<vmem>>, vector<1x128x128xbf16>
    %169 = vector.shape_cast %168 : vector<1x128x128xbf16> to vector<128x128xbf16>
    %cst_87 = arith.constant dense<0.000000e+00> : vector<256x128xf32>
    %170 = tpu.matmul %167, %169, %cst_87 {dimension_numbers = #tpu.dot_dimension_numbers<[1], [0], [0], [1], [0, 0, 1, 1], [], []>} : vector<256x128xbf16>, vector<128x128xbf16>, vector<256x128xf32> -> vector<256x128xf32>
    %171 = arith.addf %162, %170 : vector<256x128xf32>
    %c0_88 = arith.constant 0 : index
    %c0_89 = arith.constant 0 : index
    %172 = vector.load %arg6[%c0_88, %c0_89] : memref<1x128xf32, #tpu.memory_space<vmem>>, vector<1x128xf32>
    %173 = vector.broadcast %172 : vector<1x128xf32> to vector<256x128xf32>
    %174 = arith.mulf %171, %173 : vector<256x128xf32>
    %c0_90 = arith.constant 0 : index
    %c0_91 = arith.constant 0 : index
    %175 = vector.load %arg7[%c0_90, %c0_91] : memref<1x128xf32, #tpu.memory_space<vmem>>, vector<1x128xf32>
    %176 = vector.broadcast %175 : vector<1x128xf32> to vector<256x128xf32>
    %177 = arith.addf %174, %176 : vector<256x128xf32>
    %c0_92 = arith.constant 0 : index
    %c0_93 = arith.constant 0 : index
    %c0_94 = arith.constant 0 : index
    %178 = vector.load %arg1[%c0_92, %c0_93, %c0_94] : memref<1x256x128xbf16, #tpu.memory_space<vmem>>, vector<1x256x128xbf16>
    %179 = vector.shape_cast %178 : vector<1x256x128xbf16> to vector<256x128xbf16>
    %180 = arith.extf %179 : vector<256x128xbf16> to vector<256x128xf32>
    %181 = arith.addf %177, %180 : vector<256x128xf32>
    %cst_95 = arith.constant 0.000000e+00 : f32
    %182 = vector.broadcast %cst_95 : f32 to vector<256x128xf32>
    %183 = arith.maximumf %181, %182 : vector<256x128xf32>
    %184 = arith.truncf %183 : vector<256x128xf32> to vector<256x128xbf16>
    %c0_96 = arith.constant 0 : index
    %c0_97 = arith.constant 0 : index
    %c0_98 = arith.constant 0 : index
    %185 = vector.load %arg8[%c0_96, %c0_97, %c0_98] : memref<1x256x128xbf16, #tpu.memory_space<vmem>>, vector<1x256x128xbf16>
    %186 = vector.shape_cast %185 : vector<1x256x128xbf16> to vector<256x128xbf16>
    %187 = vector.shape_cast %184 : vector<256x128xbf16> to vector<1x256x128xbf16>
    tpu.vector_store %arg8[%c0_96, %c0_97, %c0_98], %187 {strides = array<i32>} : memref<1x256x128xbf16, #tpu.memory_space<vmem>>, vector<1x256x128xbf16>,
    return
  }
  func.func @transform_0(%arg0: i32) -> (i32, i32, i32) {
    %c0_i32 = arith.constant 0 : i32
    %c0_i32_0 = arith.constant 0 : i32
    %c0_i32_1 = arith.constant 0 : i32
    return %arg0, %c0_i32, %c0_i32_0 : i32, i32, i32
  }
  func.func @transform_1(%arg0: i32) -> (i32, i32, i32) {
    %c0_i32 = arith.constant 0 : i32
    %c0_i32_0 = arith.constant 0 : i32
    %c0_i32_1 = arith.constant 0 : i32
    %c0_i32_2 = arith.constant 0 : i32
    return %c0_i32, %c0_i32_0, %c0_i32_1 : i32, i32, i32
  }
  func.func @transform_2(%arg0: i32) -> (i32, i32) {
    %c0_i32 = arith.constant 0 : i32
    %c0_i32_0 = arith.constant 0 : i32
    %c0_i32_1 = arith.constant 0 : i32
    return %c0_i32, %c0_i32_0 : i32, i32
  }
  func.func @transform_3(%arg0: i32) -> (i32, i32) {
    %c0_i32 = arith.constant 0 : i32
    %c0_i32_0 = arith.constant 0 : i32
    %c0_i32_1 = arith.constant 0 : i32
    return %c0_i32, %c0_i32_0 : i32, i32
  }
  func.func @transform_4(%arg0: i32) -> (i32, i32, i32) {
    %c0_i32 = arith.constant 0 : i32
    %c0_i32_0 = arith.constant 0 : i32
    %c0_i32_1 = arith.constant 0 : i32
    %c0_i32_2 = arith.constant 0 : i32
    return %c0_i32, %c0_i32_0, %c0_i32_1 : i32, i32, i32
  }
  func.func @transform_5(%arg0: i32) -> (i32, i32) {
    %c0_i32 = arith.constant 0 : i32
    %c0_i32_0 = arith.constant 0 : i32
    %c0_i32_1 = arith.constant 0 : i32
    return %c0_i32, %c0_i32_0 : i32, i32
  }
  func.func @transform_6(%arg0: i32) -> (i32, i32) {
    %c0_i32 = arith.constant 0 : i32
    %c0_i32_0 = arith.constant 0 : i32
    %c0_i32_1 = arith.constant 0 : i32
    return %c0_i32, %c0_i32_0 : i32, i32
  }
  func.func @transform_7(%arg0: i32) -> (i32, i32, i32) {
    %c0_i32 = arith.constant 0 : i32
    %c0_i32_0 = arith.constant 0 : i32
    %c0_i32_1 = arith.constant 0 : i32
    return %arg0, %c0_i32, %c0_i32_0 : i32, i32, i32
  }
}

</mosaic_0001>

<llo_original>
// kernel: tpu_custom_call.1
$region0: #{tpu_custom_call.1}
  #allocation0 [shape = 'u32[]', space=smem, size = 0x4, offset = 0x4, fixed_abs, tag = 'smem constant byte address 0x4 - core index']
  #allocation1 [shape = 'u32[72,128]{1,0:T(1,128)}', space=vmem, size = 0x9000, scoped, tag = 'internal scratch']
  %s0 = inlined_call_operand.hbm [shape: bf16[2,256,128], index: 0, kind: input, shape index: {}]
  %s1 = inlined_call_operand.hbm [shape: bf16[9,128,128], index: 1, kind: input, shape index: {}]
  %s2 = inlined_call_operand.vmem [shape: f32[1,128], index: 2, kind: input, shape index: {}]
  %s3 = inlined_call_operand.vmem [shape: f32[1,128], index: 3, kind: input, shape index: {}]
  %s4 = inlined_call_operand.hbm [shape: bf16[9,128,128], index: 4, kind: input, shape index: {}]
  %s5 = inlined_call_operand.vmem [shape: f32[1,128], index: 5, kind: input, shape index: {}]
  %s6 = inlined_call_operand.vmem [shape: f32[1,128], index: 6, kind: input, shape index: {}]
  %s7 = inlined_call_operand.hbm [shape: bf16[2,256,128], index: 7, kind: output, shape index: {}]
  %s8 = sld [smem:[#allocation0]]
  $region73: #{tpu_custom_call.1} parent=0
    _
  %s10 = ssub.s32 1, %s8
  %s11 = scalar_select 0, %s10, %s8
  $region1: #{tpu_custom_call.1} parent=0
    #allocation2 [shape = 'u8[131072]{0}', space=vmem, size = 0x20000, scoped, tag = 'input window, operand 0']
    #allocation3 [shape = 's32[2]{0}', space=sflag, size = 0x8, scoped, tag = 'scoped memory for tpu_custom_call.1']
    #allocation4 [shape = 's32[2]{0}', space=sflag, size = 0x8, scoped, tag = 'scoped memory for tpu_custom_call.1']
    #allocation5 [shape = 'u8[294912]{0}', space=vmem, size = 0x48000, scoped, tag = 'input window, operand 1, single buffered']
    #allocation6 [shape = 's32[1]{0}', space=sflag, size = 0x4, scoped, tag = 'scoped memory for tpu_custom_call.1']
    #allocation7 [shape = 'u8[294912]{0}', space=vmem, size = 0x48000, scoped, tag = 'input window, operand 4, single buffered']
    #allocation8 [shape = 'u8[131072]{0}', space=vmem, size = 0x20000, scoped, tag = 'output window, operand 0']
    %12 = vsyncpa [#allocation3], 0
    %s13 = scalar_lea.sflag [#allocation3], 1
    %14 = vsyncpa %s13, 0
    %15 = vsyncpa [#allocation6], 0
    %16 = vsyncpa [#allocation4], 0
    %s17 = scalar_lea.sflag [#allocation4], 1
    %18 = vsyncpa %s17, 0
    loop: start=0, step=1, limit=4
    $region2: #{tpu_custom_call.1} parent=1 // loop_pre_header
      _
    $region3: #{tpu_custom_call.1} parent=1 // loop_header
      %s20 = sphi 0, %s24
      %p21 = scmp.ge.s32.totalorder %s20, 4
      %s30 = sphi 0, %s32
      %s33 = sphi 0, %s30
      %s34 = sphi 0, %s33
      %s50 = sphi 0, %s34
      %s54 = sphi 0, %s54
      %s56 = sphi 0, %s54
      %s57 = sphi 0, %s56
      %s71 = sphi 0, %s57
      %s75 = sphi 0, %s75
      %s77 = sphi 0, %s75
      %s78 = sphi 0, %s77
      %s92 = sphi 0, %s78
      %s96 = sphi 0, %s96
      %s98 = sphi 0, %s96
      %s99 = sphi 0, %s98
      %s113 = sphi 0, %s99
      %s117 = sphi 0, %s117
      %s119 = sphi 0, %s117
      %s120 = sphi 0, %s119
      %s134 = sphi 0, %s120
      %s138 = sphi 0, %s138
      %s140 = sphi 0, %s138
      %s141 = sphi 0, %s140
      %s155 = sphi 0, %s141
      %s159 = sphi 0, %s159
      %s161 = sphi 0, %s159
      %s162 = sphi 0, %s161
      %s176 = sphi 0, %s162
      %s182 = sphi 0, %s184
      %s185 = sphi 0, %s182
      %s186 = sphi 0, %s185
      %s202 = sphi 0, %s186
    $region4: #{tpu_custom_call.1} parent=1 // loop_header_branch
      %23 = sbr.rel (%p21) target = $region8
    $region5: #{tpu_custom_call.1} parent=1 // loop_body
      %s25 = ssub.s32 %s20, 1
      %s26 = ssub.s32 %s20, 2
      %s27 = sadd.s32 %s20, 1
      %s28 = ssub.s32 %s20, %s27
      %p29 = scmp.eq.s32.totalorder %s28, 0
      %s31 = sadd.s32 %s30, 1
      %s32 = scalar_select %p29, %s30, %s31
      %p35 = pneg %p29
      %p36 = scmp.eq.s32.totalorder %s20, 1
      %p37 = por %p35, %p36
      %p38 = scmp.ne.s32.totalorder %s30, %s33
      %p39 = scmp.eq.s32.totalorder %s20, 0
      %p40 = por %p38, %p39
      %p41 = scmp.ne.s32.totalorder %s30, %s33
      %p42 = scmp.eq.s32.totalorder %s25, 1
      %p43 = por %p41, %p42
      %p44 = scmp.ne.s32.totalorder %s33, %s34
      %p45 = scmp.eq.s32.totalorder %s25, 0
      %p46 = por %p44, %p45
      %p47 = scmp.ne.s32.totalorder %s33, %s34
      %p48 = scmp.eq.s32.totalorder %s26, 1
      %p49 = por %p47, %p48
      %p51 = scmp.ne.s32.totalorder %s34, %s50
      %p52 = scmp.eq.s32.totalorder %s26, 0
      %p53 = por %p51, %p52
      %s55 = sadd.s32 %s54, 1
      %p58 = scmp.eq.s32.totalorder %s20, 1
      %p59 = scmp.ne.s32.totalorder %s54, %s56
      %p60 = scmp.eq.s32.totalorder %s20, 0
      %p61 = por %p59, %p60
      %p62 = scmp.ne.s32.totalorder %s54, %s56
      %p63 = scmp.eq.s32.totalorder %s25, 1
      %p64 = por %p62, %p63
      %p65 = scmp.ne.s32.totalorder %s56, %s57
      %p66 = scmp.eq.s32.totalorder %s25, 0
      %p67 = por %p65, %p66
      %p68 = scmp.ne.s32.totalorder %s56, %s57
      %p69 = scmp.eq.s32.totalorder %s26, 1
      %p70 = por %p68, %p69
      %p72 = scmp.ne.s32.totalorder %s57, %s71
      %p73 = scmp.eq.s32.totalorder %s26, 0
      %p74 = por %p72, %p73
      %s76 = sadd.s32 %s75, 1
      %p79 = scmp.eq.s32.totalorder %s20, 1
      %p80 = scmp.ne.s32.totalorder %s75, %s77
      %p81 = scmp.eq.s32.totalorder %s20, 0
      %p82 = por %p80, %p81
      %p83 = scmp.ne.s32.totalorder %s75, %s77
      %p84 = scmp.eq.s32.totalorder %s25, 1
      %p85 = por %p83, %p84
      %p86 = scmp.ne.s32.totalorder %s77, %s78
      %p87 = scmp.eq.s32.totalorder %s25, 0
      %p88 = por %p86, %p87
      %p89 = scmp.ne.s32.totalorder %s77, %s78
      %p90 = scmp.eq.s32.totalorder %s26, 1
      %p91 = por %p89, %p90
      %p93 = scmp.ne.s32.totalorder %s78, %s92
      %p94 = scmp.eq.s32.totalorder %s26, 0
      %p95 = por %p93, %p94
      %s97 = sadd.s32 %s96, 1
      %p100 = scmp.eq.s32.totalorder %s20, 1
      %p101 = scmp.ne.s32.totalorder %s96, %s98
      %p102 = scmp.eq.s32.totalorder %s20, 0
      %p103 = por %p101, %p102
      %p104 = scmp.ne.s32.totalorder %s96, %s98
      %p105 = scmp.eq.s32.totalorder %s25, 1
      %p106 = por %p104, %p105
      %p107 = scmp.ne.s32.totalorder %s98, %s99
      %p108 = scmp.eq.s32.totalorder %s25, 0
      %p109 = por %p107, %p108
      %p110 = scmp.ne.s32.totalorder %s98, %s99
      %p111 = scmp.eq.s32.totalorder %s26, 1
      %p112 = por %p110, %p111
      %p114 = scmp.ne.s32.totalorder %s99, %s113
      %p115 = scmp.eq.s32.totalorder %s26, 0
      %p116 = por %p114, %p115
      %s118 = sadd.s32 %s117, 1
      %p121 = scmp.eq.s32.totalorder %s20, 1
      %p122 = scmp.ne.s32.totalorder %s117, %s119
      %p123 = scmp.eq.s32.totalorder %s20, 0
      %p124 = por %p122, %p123
      %p125 = scmp.ne.s32.totalorder %s117, %s119
      %p126 = scmp.eq.s32.totalorder %s25, 1
      %p127 = por %p125, %p126
      %p128 = scmp.ne.s32.totalorder %s119, %s120
      %p129 = scmp.eq.s32.totalorder %s25, 0
      %p130 = por %p128, %p129
      %p131 = scmp.ne.s32.totalorder %s119, %s120
      %p132 = scmp.eq.s32.totalorder %s26, 1
      %p133 = por %p131, %p132
      %p135 = scmp.ne.s32.totalorder %s120, %s134
      %p136 = scmp.eq.s32.totalorder %s26, 0
      %p137 = por %p135, %p136
      %s139 = sadd.s32 %s138, 1
      %p142 = scmp.eq.s32.totalorder %s20, 1
      %p143 = scmp.ne.s32.totalorder %s138, %s140
      %p144 = scmp.eq.s32.totalorder %s20, 0
      %p145 = por %p143, %p144
      %p146 = scmp.ne.s32.totalorder %s138, %s140
      %p147 = scmp.eq.s32.totalorder %s25, 1
      %p148 = por %p146, %p147
      %p149 = scmp.ne.s32.totalorder %s140, %s141
      %p150 = scmp.eq.s32.totalorder %s25, 0
      %p151 = por %p149, %p150
      %p152 = scmp.ne.s32.totalorder %s140, %s141
      %p153 = scmp.eq.s32.totalorder %s26, 1
      %p154 = por %p152, %p153
      %p156 = scmp.ne.s32.totalorder %s141, %s155
      %p157 = scmp.eq.s32.totalorder %s26, 0
      %p158 = por %p156, %p157
      %s160 = sadd.s32 %s159, 1
      %p163 = scmp.eq.s32.totalorder %s20, 1
      %p164 = scmp.ne.s32.totalorder %s159, %s161
      %p165 = scmp.eq.s32.totalorder %s20, 0
      %p166 = por %p164, %p165
      %p167 = scmp.ne.s32.totalorder %s159, %s161
      %p168 = scmp.eq.s32.totalorder %s25, 1
      %p169 = por %p167, %p168
      %p170 = scmp.ne.s32.totalorder %s161, %s162
      %p171 = scmp.eq.s32.totalorder %s25, 0
      %p172 = por %p170, %p171
      %p173 = scmp.ne.s32.totalorder %s161, %s162
      %p174 = scmp.eq.s32.totalorder %s26, 1
      %p175 = por %p173, %p174
      %p177 = scmp.ne.s32.totalorder %s162, %s176
      %p178 = scmp.eq.s32.totalorder %s26, 0
      %p179 = por %p177, %p178
      %s180 = ssub.s32 %s20, %s27
      %p181 = scmp.eq.s32.totalorder %s180, 0
      %s183 = sadd.s32 %s182, 1
      %s184 = scalar_select %p181, %s182, %s183
      %p187 = pneg %p181
      %p188 = scmp.eq.s32.totalorder %s20, 1
      %p189 = por %p187, %p188
      %p190 = scmp.ne.s32.totalorder %s182, %s185
      %p191 = scmp.eq.s32.totalorder %s20, 0
      %p192 = por %p190, %p191
      %p193 = scmp.ne.s32.totalorder %s182, %s185
      %p194 = scmp.eq.s32.totalorder %s25, 1
      %p195 = por %p193, %p194
      %p196 = scmp.ne.s32.totalorder %s185, %s186
      %p197 = scmp.eq.s32.totalorder %s25, 0
      %p198 = por %p196, %p197
      %p199 = scmp.ne.s32.totalorder %s185, %s186
      %p200 = scmp.eq.s32.totalorder %s26, 1
      %p201 = por %p199, %p200
      %p203 = scmp.ne.s32.totalorder %s186, %s202
      %p204 = scmp.eq.s32.totalorder %s26, 0
      %p205 = por %p203, %p204
      %p206 = scmp.le.s32.totalorder 1, %s20
      %p207 = scmp.lt.s32.totalorder %s20, 3
      %p208 = pnand %p206, %p207
      %p209 = pneg %p208
      // Predicated region
      $region9: #{tpu_custom_call.1} parent=5 // pred_check
        _
      $region10: #{tpu_custom_call.1} parent=5 // pred_check_branch
        %211 = sbr.rel (%p208) target = $region12
      $region11: #{tpu_custom_call.1} parent=5 // pred_region
        %s212 = ssub.s32 %s20, 1
        // Predicated region
        $region13: #{tpu_custom_call.1} parent=11 // pred_check
          %p213 = pneg %p67
        $region14: #{tpu_custom_call.1} parent=11 // pred_check_branch
          %215 = sbr.rel (%p213) target = $region16
        $region15: #{tpu_custom_call.1} parent=11 // pred_region
          %217 = vsyncadd [#allocation6], 0
          %s218 = sshll.u32 %s1, 4
          %s219 = int_to_ptr.hbm [resolvable:$true] %s218
          %s220 = sshll.u32 [#allocation5], 4
          %s221 = int_to_ptr.vmem [resolvable:$true] %s220
          %226 = dma.hbm_to_vmem [thread:$0]  %s219, 9216, %s221, [#allocation6], 64, 64, 4
        $region16: #{tpu_custom_call.1} parent=11 // pred_fallthru
          _
        // Predicated region
        $region17: #{tpu_custom_call.1} parent=11 // pred_check
          %p227 = pneg %p88
        $region18: #{tpu_custom_call.1} parent=11 // pred_check_branch
          %229 = sbr.rel (%p227) target = $region20
        $region19: #{tpu_custom_call.1} parent=11 // pred_region
          _
        $region20: #{tpu_custom_call.1} parent=11 // pred_fallthru
          _
        // Predicated region
        $region21: #{tpu_custom_call.1} parent=11 // pred_check
          %p230 = pneg %p109
        $region22: #{tpu_custom_call.1} parent=11 // pred_check_branch
          %232 = sbr.rel (%p230) target = $region24
        $region23: #{tpu_custom_call.1} parent=11 // pred_region
          _
        $region24: #{tpu_custom_call.1} parent=11 // pred_fallthru
          _
        // Predicated region
        $region25: #{tpu_custom_call.1} parent=11 // pred_check
          %p233 = pneg %p130
        $region26: #{tpu_custom_call.1} parent=11 // pred_check_branch
          %235 = sbr.rel (%p233) target = $region28
        $region27: #{tpu_custom_call.1} parent=11 // pred_region
          %237 = vsyncadd [#allocation6], 0
          %s238 = sshll.u32 %s4, 4
          %s239 = int_to_ptr.hbm [resolvable:$true] %s238
          %s240 = sshll.u32 [#allocation7], 4
          %s241 = int_to_ptr.vmem [resolvable:$true] %s240
          %246 = dma.hbm_to_vmem [thread:$0]  %s239, 9216, %s241, [#allocation6], 64, 64, 4
        $region28: #{tpu_custom_call.1} parent=11 // pred_fallthru
          _
        // Predicated region
        $region29: #{tpu_custom_call.1} parent=11 // pred_check
          %p247 = pneg %p151
        $region30: #{tpu_custom_call.1} parent=11 // pred_check_branch
          %249 = sbr.rel (%p247) target = $region32
        $region31: #{tpu_custom_call.1} parent=11 // pred_region
          _
        $region32: #{tpu_custom_call.1} parent=11 // pred_fallthru
          _
        // Predicated region
        $region33: #{tpu_custom_call.1} parent=11 // pred_check
          %p250 = pneg %p172
        $region34: #{tpu_custom_call.1} parent=11 // pred_check_branch
          %252 = sbr.rel (%p250) target = $region36
        $region35: #{tpu_custom_call.1} parent=11 // pred_region
          _
        $region36: #{tpu_custom_call.1} parent=11 // pred_fallthru
          _
      $region12: #{tpu_custom_call.1} parent=5 // pred_fallthru
        _
      %p253 = scmp.lt.s32.totalorder %s20, 2
      // Predicated region
      $region37: #{tpu_custom_call.1} parent=5 // pred_check
        %p254 = pneg %p253
      $region38: #{tpu_custom_call.1} parent=5 // pred_check_branch
        %256 = sbr.rel (%p254) target = $region40
      $region39: #{tpu_custom_call.1} parent=5 // pred_region
        // Predicated region
        $region41: #{tpu_custom_call.1} parent=39 // pred_check
          %p257 = pneg %p40
        $region42: #{tpu_custom_call.1} parent=39 // pred_check_branch
          %259 = sbr.rel (%p257) target = $region44
        $region43: #{tpu_custom_call.1} parent=39 // pred_region
          %s260 = sand.u32 %s30, 1
          %s261 = scalar_lea.sflag [#allocation3], %s260
          %s262 = sand.u32 %s30, 1
          %s263 = smul.addr %s262, 128
          %s264 = scalar_lea.vmem [#allocation2], %s263
          %266 = vsyncadd %s261, 0
          %s267 = smul.addr %s20, 32
          %s268 = smul.addr %s267, 4
          %s269 = scalar_lea.hbm %s0, %s268
          %s270 = sshll.u32 %s269, 4
          %s271 = int_to_ptr.hbm [resolvable:$true] %s270
          %s272 = sshll.u32 %s264, 4
          %s273 = int_to_ptr.vmem [resolvable:$true] %s272
          %278 = dma.hbm_to_vmem [thread:$0]  %s271, 2048, %s273, %s261, 64, 64, 4
        $region44: #{tpu_custom_call.1} parent=39 // pred_fallthru
          _
      $region40: #{tpu_custom_call.1} parent=5 // pred_fallthru
        _
      %p279 = scmp.le.s32.totalorder 1, %s20
      %p280 = scmp.lt.s32.totalorder %s20, 3
      %p281 = pnand %p279, %p280
      %p282 = pneg %p281
      // Predicated region
      $region45: #{tpu_custom_call.1} parent=5 // pred_check
        _
      $region46: #{tpu_custom_call.1} parent=5 // pred_check_branch
        %284 = sbr.rel (%p281) target = $region48
      $region47: #{tpu_custom_call.1} parent=5 // pred_region
        %s285 = ssub.s32 %s20, 1
        %s286 = sand.u32 %s33, 1
        %s287 = scalar_lea.sflag [#allocation3], %s286
        %s288 = sand.u32 %s33, 1
        %s289 = smul.addr %s288, 128
        %s290 = scalar_lea.vmem [#allocation2], %s289
        // Predicated region
        $region49: #{tpu_custom_call.1} parent=47 // pred_check
          %p291 = pneg %p46
        $region50: #{tpu_custom_call.1} parent=47 // pred_check_branch
          %293 = sbr.rel (%p291) target = $region52
        $region51: #{tpu_custom_call.1} parent=47 // pred_region
          %295 = dma.done %s287, 2048
        $region52: #{tpu_custom_call.1} parent=47 // pred_fallthru
          _
        // Predicated region
        $region53: #{tpu_custom_call.1} parent=47 // pred_check
          %p296 = pneg %p67
        $region54: #{tpu_custom_call.1} parent=47 // pred_check_branch
          %298 = sbr.rel (%p296) target = $region56
        $region55: #{tpu_custom_call.1} parent=47 // pred_region
          %300 = dma.done [#allocation6], 9216
        $region56: #{tpu_custom_call.1} parent=47 // pred_fallthru
          _
        // Predicated region
        $region57: #{tpu_custom_call.1} parent=47 // pred_check
          %p301 = pneg %p130
        $region58: #{tpu_custom_call.1} parent=47 // pred_check_branch
          %303 = sbr.rel (%p301) target = $region60
        $region59: #{tpu_custom_call.1} parent=47 // pred_region
          %305 = dma.done [#allocation6], 9216
        $region60: #{tpu_custom_call.1} parent=47 // pred_fallthru
          _
        %s306 = sand.u32 %s33, 1
        %s307 = scalar_lea.sflag [#allocation3], %s306
        %s308 = sand.u32 %s33, 1
        %s309 = smul.addr %s308, 128
        %s310 = scalar_lea.vmem [#allocation2], %s309
        %p311 = pneg %p46
        %p312 = pneg %p43
        %p313 = pneg %p67
        %p314 = pneg %p64
        %p315 = pneg %p88
        %p316 = pneg %p85
        %p317 = pneg %p109
        %p318 = pneg %p106
        %p319 = pneg %p130
        %p320 = pneg %p127
        %p321 = pneg %p151
        %p322 = pneg %p148
        %p323 = pneg %p172
        %p324 = pneg %p169
        %p325 = pneg %p198
        %p326 = pneg %p195
        %s327 = sand.u32 %s185, 1
        %s328 = scalar_lea.sflag [#allocation4], %s327
        %s329 = sand.u32 %s185, 1
        %s330 = smul.addr %s329, 128
        %s331 = scalar_lea.vmem [#allocation8], %s330
        %v335 = vlaneseq
        %v336 = vshrl.u32 %v335, 7
        %v337 = vadd.s32 %v336, 8
        %v338 = vadd.s32 %v336, 16
        %v339 = vadd.s32 %v336, 24
        %v340 = vadd.s32 %v336, 32
        %v341 = vadd.s32 %v336, 40
        %v342 = vadd.s32 %v336, 48
        %v343 = vadd.s32 %v336, 56
        %v344 = vadd.s32 %v336, 64
        %v345 = vadd.s32 %v336, 72
        %v346 = vadd.s32 %v336, 80
        %v347 = vadd.s32 %v336, 88
        %v348 = vadd.s32 %v336, 96
        %v349 = vadd.s32 %v336, 104
        %v350 = vadd.s32 %v336, 112
        %v351 = vadd.s32 %v336, 120
        %v352 = vadd.s32 %v336, 128
        %v353 = vadd.s32 %v336, 136
        %v354 = vadd.s32 %v336, 144
        %v355 = vadd.s32 %v336, 152
        %v356 = vadd.s32 %v336, 160
        %v357 = vadd.s32 %v336, 168
        %v358 = vadd.s32 %v336, 176
        %v359 = vadd.s32 %v336, 184
        %v360 = vadd.s32 %v336, 192
        %v361 = vadd.s32 %v336, 200
        %v362 = vadd.s32 %v336, 208
        %v363 = vadd.s32 %v336, 216
        %v364 = vadd.s32 %v336, 224
        %v365 = vadd.s32 %v336, 232
        %v366 = vadd.s32 %v336, 240
        %v367 = vadd.s32 %v336, 248
        %vm368 = vcmp.lt.s32.totalorder %v336, 0
        %v369 = vsub.s32 0, %v336
        %v370 = vsel %vm368, %v369, %v336
        %v371 = vshrl.u32 %v370, 4
        %v372 = vand.u32 %v370, 15
        %v373 = vsub.s32 0, %v372
        %v374 = vsel %vm368, %v373, %v372
        %vm375 = vcmp.lt.s32.totalorder %v337, 0
        %v376 = vsub.s32 0, %v337
        %v377 = vsel %vm375, %v376, %v337
        %v378 = vshrl.u32 %v377, 4
        %v379 = vand.u32 %v377, 15
        %v380 = vsub.s32 0, %v379
        %v381 = vsel %vm375, %v380, %v379
        %vm382 = vcmp.lt.s32.totalorder %v338, 0
        %v383 = vsub.s32 0, %v338
        %v384 = vsel %vm382, %v383, %v338
        %v385 = vshrl.u32 %v384, 4
        %v386 = vand.u32 %v384, 15
        %v387 = vsub.s32 0, %v386
        %v388 = vsel %vm382, %v387, %v386
        %vm389 = vcmp.lt.s32.totalorder %v339, 0
        %v390 = vsub.s32 0, %v339
        %v391 = vsel %vm389, %v390, %v339
        %v392 = vshrl.u32 %v391, 4
        %v393 = vand.u32 %v391, 15
        %v394 = vsub.s32 0, %v393
        %v395 = vsel %vm389, %v394, %v393
        %vm396 = vcmp.lt.s32.totalorder %v340, 0
        %v397 = vsub.s32 0, %v340
        %v398 = vsel %vm396, %v397, %v340
        %v399 = vshrl.u32 %v398, 4
        %v400 = vand.u32 %v398, 15
        %v401 = vsub.s32 0, %v400
        %v402 = vsel %vm396, %v401, %v400
        %vm403 = vcmp.lt.s32.totalorder %v341, 0
        %v404 = vsub.s32 0, %v341
        %v405 = vsel %vm403, %v404, %v341
        %v406 = vshrl.u32 %v405, 4
        %v407 = vand.u32 %v405, 15
        %v408 = vsub.s32 0, %v407
        %v409 = vsel %vm403, %v408, %v407
        %vm410 = vcmp.lt.s32.totalorder %v342, 0
        %v411 = vsub.s32 0, %v342
        %v412 = vsel %vm410, %v411, %v342
        %v413 = vshrl.u32 %v412, 4
        %v414 = vand.u32 %v412, 15
        %v415 = vsub.s32 0, %v414
        %v416 = vsel %vm410, %v415, %v414
        %vm417 = vcmp.lt.s32.totalorder %v343, 0
        %v418 = vsub.s32 0, %v343
        %v419 = vsel %vm417, %v418, %v343
        %v420 = vshrl.u32 %v419, 4
        %v421 = vand.u32 %v419, 15
        %v422 = vsub.s32 0, %v421
        %v423 = vsel %vm417, %v422, %v421
        %vm424 = vcmp.lt.s32.totalorder %v344, 0
        %v425 = vsub.s32 0, %v344
        %v426 = vsel %vm424, %v425, %v344
        %v427 = vshrl.u32 %v426, 4
        %v428 = vand.u32 %v426, 15
        %v429 = vsub.s32 0, %v428
        %v430 = vsel %vm424, %v429, %v428
        %vm431 = vcmp.lt.s32.totalorder %v345, 0
        %v432 = vsub.s32 0, %v345
        %v433 = vsel %vm431, %v432, %v345
        %v434 = vshrl.u32 %v433, 4
        %v435 = vand.u32 %v433, 15
        %v436 = vsub.s32 0, %v435
        %v437 = vsel %vm431, %v436, %v435
        %vm438 = vcmp.lt.s32.totalorder %v346, 0
        %v439 = vsub.s32 0, %v346
        %v440 = vsel %vm438, %v439, %v346
        %v441 = vshrl.u32 %v440, 4
        %v442 = vand.u32 %v440, 15
        %v443 = vsub.s32 0, %v442
        %v444 = vsel %vm438, %v443, %v442
        %vm445 = vcmp.lt.s32.totalorder %v347, 0
        %v446 = vsub.s32 0, %v347
        %v447 = vsel %vm445, %v446, %v347
        %v448 = vshrl.u32 %v447, 4
        %v449 = vand.u32 %v447, 15
        %v450 = vsub.s32 0, %v449
        %v451 = vsel %vm445, %v450, %v449
        %vm452 = vcmp.lt.s32.totalorder %v348, 0
        %v453 = vsub.s32 0, %v348
        %v454 = vsel %vm452, %v453, %v348
        %v455 = vshrl.u32 %v454, 4
        %v456 = vand.u32 %v454, 15
        %v457 = vsub.s32 0, %v456
        %v458 = vsel %vm452, %v457, %v456
        %vm459 = vcmp.lt.s32.totalorder %v349, 0
        %v460 = vsub.s32 0, %v349
        %v461 = vsel %vm459, %v460, %v349
        %v462 = vshrl.u32 %v461, 4
        %v463 = vand.u32 %v461, 15
        %v464 = vsub.s32 0, %v463
        %v465 = vsel %vm459, %v464, %v463
        %vm466 = vcmp.lt.s32.totalorder %v350, 0
        %v467 = vsub.s32 0, %v350
        %v468 = vsel %vm466, %v467, %v350
        %v469 = vshrl.u32 %v468, 4
        %v470 = vand.u32 %v468, 15
        %v471 = vsub.s32 0, %v470
        %v472 = vsel %vm466, %v471, %v470
        %vm473 = vcmp.lt.s32.totalorder %v351, 0
        %v474 = vsub.s32 0, %v351
        %v475 = vsel %vm473, %v474, %v351
        %v476 = vshrl.u32 %v475, 4
        %v477 = vand.u32 %v475, 15
        %v478 = vsub.s32 0, %v477
        %v479 = vsel %vm473, %v478, %v477
        %vm480 = vcmp.lt.s32.totalorder %v352, 0
        %v481 = vsub.s32 0, %v352
        %v482 = vsel %vm480, %v481, %v352
        %v483 = vshrl.u32 %v482, 4
        %v484 = vand.u32 %v482, 15
        %v485 = vsub.s32 0, %v484
        %v486 = vsel %vm480, %v485, %v484
        %vm487 = vcmp.lt.s32.totalorder %v353, 0
        %v488 = vsub.s32 0, %v353
        %v489 = vsel %vm487, %v488, %v353
        %v490 = vshrl.u32 %v489, 4
        %v491 = vand.u32 %v489, 15
        %v492 = vsub.s32 0, %v491
        %v493 = vsel %vm487, %v492, %v491
        %vm494 = vcmp.lt.s32.totalorder %v354, 0
        %v495 = vsub.s32 0, %v354
        %v496 = vsel %vm494, %v495, %v354
        %v497 = vshrl.u32 %v496, 4
        %v498 = vand.u32 %v496, 15
        %v499 = vsub.s32 0, %v498
        %v500 = vsel %vm494, %v499, %v498
        %vm501 = vcmp.lt.s32.totalorder %v355, 0
        %v502 = vsub.s32 0, %v355
        %v503 = vsel %vm501, %v502, %v355
        %v504 = vshrl.u32 %v503, 4
        %v505 = vand.u32 %v503, 15
        %v506 = vsub.s32 0, %v505
        %v507 = vsel %vm501, %v506, %v505
        %vm508 = vcmp.lt.s32.totalorder %v356, 0
        %v509 = vsub.s32 0, %v356
        %v510 = vsel %vm508, %v509, %v356
        %v511 = vshrl.u32 %v510, 4
        %v512 = vand.u32 %v510, 15
        %v513 = vsub.s32 0, %v512
        %v514 = vsel %vm508, %v513, %v512
        %vm515 = vcmp.lt.s32.totalorder %v357, 0
        %v516 = vsub.s32 0, %v357
        %v517 = vsel %vm515, %v516, %v357
        %v518 = vshrl.u32 %v517, 4
        %v519 = vand.u32 %v517, 15
        %v520 = vsub.s32 0, %v519
        %v521 = vsel %vm515, %v520, %v519
        %vm522 = vcmp.lt.s32.totalorder %v358, 0
        %v523 = vsub.s32 0, %v358
        %v524 = vsel %vm522, %v523, %v358
        %v525 = vshrl.u32 %v524, 4
        %v526 = vand.u32 %v524, 15
        %v527 = vsub.s32 0, %v526
        %v528 = vsel %vm522, %v527, %v526
        %vm529 = vcmp.lt.s32.totalorder %v359, 0
        %v530 = vsub.s32 0, %v359
        %v531 = vsel %vm529, %v530, %v359
        %v532 = vshrl.u32 %v531, 4
        %v533 = vand.u32 %v531, 15
        %v534 = vsub.s32 0, %v533
        %v535 = vsel %vm529, %v534, %v533
        %vm536 = vcmp.lt.s32.totalorder %v360, 0
        %v537 = vsub.s32 0, %v360
        %v538 = vsel %vm536, %v537, %v360
        %v539 = vshrl.u32 %v538, 4
        %v540 = vand.u32 %v538, 15
        %v541 = vsub.s32 0, %v540
        %v542 = vsel %vm536, %v541, %v540
        %vm543 = vcmp.lt.s32.totalorder %v361, 0
        %v544 = vsub.s32 0, %v361
        %v545 = vsel %vm543, %v544, %v361
        %v546 = vshrl.u32 %v545, 4
        %v547 = vand.u32 %v545, 15
        %v548 = vsub.s32 0, %v547
        %v549 = vsel %vm543, %v548, %v547
        %vm550 = vcmp.lt.s32.totalorder %v362, 0
        %v551 = vsub.s32 0, %v362
        %v552 = vsel %vm550, %v551, %v362
        %v553 = vshrl.u32 %v552, 4
        %v554 = vand.u32 %v552, 15
        %v555 = vsub.s32 0, %v554
        %v556 = vsel %vm550, %v555, %v554
        %vm557 = vcmp.lt.s32.totalorder %v363, 0
        %v558 = vsub.s32 0, %v363
        %v559 = vsel %vm557, %v558, %v363
        %v560 = vshrl.u32 %v559, 4
        %v561 = vand.u32 %v559, 15
        %v562 = vsub.s32 0, %v561
        %v563 = vsel %vm557, %v562, %v561
        %vm564 = vcmp.lt.s32.totalorder %v364, 0
        %v565 = vsub.s32 0, %v364
        %v566 = vsel %vm564, %v565, %v364
        %v567 = vshrl.u32 %v566, 4
        %v568 = vand.u32 %v566, 15
        %v569 = vsub.s32 0, %v568
        %v570 = vsel %vm564, %v569, %v568
        %vm571 = vcmp.lt.s32.totalorder %v365, 0
        %v572 = vsub.s32 0, %v365
        %v573 = vsel %vm571, %v572, %v365
        %v574 = vshrl.u32 %v573, 4
        %v575 = vand.u32 %v573, 15
        %v576 = vsub.s32 0, %v575
        %v577 = vsel %vm571, %v576, %v575
        %vm578 = vcmp.lt.s32.totalorder %v366, 0
        %v579 = vsub.s32 0, %v366
        %v580 = vsel %vm578, %v579, %v366
        %v581 = vshrl.u32 %v580, 4
        %v582 = vand.u32 %v580, 15
        %v583 = vsub.s32 0, %v582
        %v584 = vsel %vm578, %v583, %v582
        %vm585 = vcmp.lt.s32.totalorder %v367, 0
        %v586 = vsub.s32 0, %v367
        %v587 = vsel %vm585, %v586, %v367
        %v588 = vshrl.u32 %v587, 4
        %v589 = vand.u32 %v587, 15
        %v590 = vsub.s32 0, %v589
        %v591 = vsel %vm585, %v590, %v589
        %vm592 = vcmp.ne.s32.totalorder %v374, 0
        %vm593 = vcmp.ne.s32.totalorder %v381, 0
        %vm594 = vcmp.ne.s32.totalorder %v388, 0
        %vm595 = vcmp.ne.s32.totalorder %v395, 0
        %vm596 = vcmp.ne.s32.totalorder %v402, 0
        %vm597 = vcmp.ne.s32.totalorder %v409, 0
        %vm598 = vcmp.ne.s32.totalorder %v416, 0
        %vm599 = vcmp.ne.s32.totalorder %v423, 0
        %vm600 = vcmp.ne.s32.totalorder %v430, 0
        %vm601 = vcmp.ne.s32.totalorder %v437, 0
        %vm602 = vcmp.ne.s32.totalorder %v444, 0
        %vm603 = vcmp.ne.s32.totalorder %v451, 0
        %vm604 = vcmp.ne.s32.totalorder %v458, 0
        %vm605 = vcmp.ne.s32.totalorder %v465, 0
        %vm606 = vcmp.ne.s32.totalorder %v472, 0
        %vm607 = vcmp.ne.s32.totalorder %v479, 0
        %vm608 = vcmp.ne.s32.totalorder %v486, 0
        %vm609 = vcmp.ne.s32.totalorder %v493, 0
        %vm610 = vcmp.ne.s32.totalorder %v500, 0
        %vm611 = vcmp.ne.s32.totalorder %v507, 0
        %vm612 = vcmp.ne.s32.totalorder %v514, 0
        %vm613 = vcmp.ne.s32.totalorder %v521, 0
        %vm614 = vcmp.ne.s32.totalorder %v528, 0
        %vm615 = vcmp.ne.s32.totalorder %v535, 0
        %vm616 = vcmp.ne.s32.totalorder %v542, 0
        %vm617 = vcmp.ne.s32.totalorder %v549, 0
        %vm618 = vcmp.ne.s32.totalorder %v556, 0
        %vm619 = vcmp.ne.s32.totalorder %v563, 0
        %vm620 = vcmp.ne.s32.totalorder %v570, 0
        %vm621 = vcmp.ne.s32.totalorder %v577, 0
        %vm622 = vcmp.ne.s32.totalorder %v584, 0
        %vm623 = vcmp.ne.s32.totalorder %v591, 0
        %vm624 = vcmp.lt.s32.totalorder %v374, 0
        %vm625 = vcmp.lt.s32.totalorder %v381, 0
        %vm626 = vcmp.lt.s32.totalorder %v388, 0
        %vm627 = vcmp.lt.s32.totalorder %v395, 0
        %vm628 = vcmp.lt.s32.totalorder %v402, 0
        %vm629 = vcmp.lt.s32.totalorder %v409, 0
        %vm630 = vcmp.lt.s32.totalorder %v416, 0
        %vm631 = vcmp.lt.s32.totalorder %v423, 0
        %vm632 = vcmp.lt.s32.totalorder %v430, 0
        %vm633 = vcmp.lt.s32.totalorder %v437, 0
        %vm634 = vcmp.lt.s32.totalorder %v444, 0
        %vm635 = vcmp.lt.s32.totalorder %v451, 0
        %vm636 = vcmp.lt.s32.totalorder %v458, 0
        %vm637 = vcmp.lt.s32.totalorder %v465, 0
        %vm638 = vcmp.lt.s32.totalorder %v472, 0
        %vm639 = vcmp.lt.s32.totalorder %v479, 0
        %vm640 = vcmp.lt.s32.totalorder %v486, 0
        %vm641 = vcmp.lt.s32.totalorder %v493, 0
        %vm642 = vcmp.lt.s32.totalorder %v500, 0
        %vm643 = vcmp.lt.s32.totalorder %v507, 0
        %vm644 = vcmp.lt.s32.totalorder %v514, 0
        %vm645 = vcmp.lt.s32.totalorder %v521, 0
        %vm646 = vcmp.lt.s32.totalorder %v528, 0
        %vm647 = vcmp.lt.s32.totalorder %v535, 0
        %vm648 = vcmp.lt.s32.totalorder %v542, 0
        %vm649 = vcmp.lt.s32.totalorder %v549, 0
        %vm650 = vcmp.lt.s32.totalorder %v556, 0
        %vm651 = vcmp.lt.s32.totalorder %v563, 0
        %vm652 = vcmp.lt.s32.totalorder %v570, 0
        %vm653 = vcmp.lt.s32.totalorder %v577, 0
        %vm654 = vcmp.lt.s32.totalorder %v584, 0
        %vm655 = vcmp.lt.s32.totalorder %v591, 0
        %vm656 = vmand %vm624, %vm592
        %vm657 = vmand %vm625, %vm593
        %vm658 = vmand %vm626, %vm594
        %vm659 = vmand %vm627, %vm595
        %vm660 = vmand %vm628, %vm596
        %vm661 = vmand %vm629, %vm597
        %vm662 = vmand %vm630, %vm598
        %vm663 = vmand %vm631, %vm599
        %vm664 = vmand %vm632, %vm600
        %vm665 = vmand %vm633, %vm601
        %vm666 = vmand %vm634, %vm602
        %vm667 = vmand %vm635, %vm603
        %vm668 = vmand %vm636, %vm604
        %vm669 = vmand %vm637, %vm605
        %vm670 = vmand %vm638, %vm606
        %vm671 = vmand %vm639, %vm607
        %vm672 = vmand %vm640, %vm608
        %vm673 = vmand %vm641, %vm609
        %vm674 = vmand %vm642, %vm610
        %vm675 = vmand %vm643, %vm611
        %vm676 = vmand %vm644, %vm612
        %vm677 = vmand %vm645, %vm613
        %vm678 = vmand %vm646, %vm614
        %vm679 = vmand %vm647, %vm615
        %vm680 = vmand %vm648, %vm616
        %vm681 = vmand %vm649, %vm617
        %vm682 = vmand %vm650, %vm618
        %vm683 = vmand %vm651, %vm619
        %vm684 = vmand %vm652, %vm620
        %vm685 = vmand %vm653, %vm621
        %vm686 = vmand %vm654, %vm622
        %vm687 = vmand %vm655, %vm623
        %v688 = vadd.s32 %v374, 16
        %v689 = vadd.s32 %v381, 16
        %v690 = vadd.s32 %v388, 16
        %v691 = vadd.s32 %v395, 16
        %v692 = vadd.s32 %v402, 16
        %v693 = vadd.s32 %v409, 16
        %v694 = vadd.s32 %v416, 16
        %v695 = vadd.s32 %v423, 16
        %v696 = vadd.s32 %v430, 16
        %v697 = vadd.s32 %v437, 16
        %v698 = vadd.s32 %v444, 16
        %v699 = vadd.s32 %v451, 16
        %v700 = vadd.s32 %v458, 16
        %v701 = vadd.s32 %v465, 16
        %v702 = vadd.s32 %v472, 16
        %v703 = vadd.s32 %v479, 16
        %v704 = vadd.s32 %v486, 16
        %v705 = vadd.s32 %v493, 16
        %v706 = vadd.s32 %v500, 16
        %v707 = vadd.s32 %v507, 16
        %v708 = vadd.s32 %v514, 16
        %v709 = vadd.s32 %v521, 16
        %v710 = vadd.s32 %v528, 16
        %v711 = vadd.s32 %v535, 16
        %v712 = vadd.s32 %v542, 16
        %v713 = vadd.s32 %v549, 16
        %v714 = vadd.s32 %v556, 16
        %v715 = vadd.s32 %v563, 16
        %v716 = vadd.s32 %v570, 16
        %v717 = vadd.s32 %v577, 16
        %v718 = vadd.s32 %v584, 16
        %v719 = vadd.s32 %v591, 16
        %v720 = vsel %vm656, %v688, %v374
        %v721 = vsel %vm657, %v689, %v381
        %v722 = vsel %vm658, %v690, %v388
        %v723 = vsel %vm659, %v691, %v395
        %v724 = vsel %vm660, %v692, %v402
        %v725 = vsel %vm661, %v693, %v409
        %v726 = vsel %vm662, %v694, %v416
        %v727 = vsel %vm663, %v695, %v423
        %v728 = vsel %vm664, %v696, %v430
        %v729 = vsel %vm665, %v697, %v437
        %v730 = vsel %vm666, %v698, %v444
        %v731 = vsel %vm667, %v699, %v451
        %v732 = vsel %vm668, %v700, %v458
        %v733 = vsel %vm669, %v701, %v465
        %v734 = vsel %vm670, %v702, %v472
        %v735 = vsel %vm671, %v703, %v479
        %v736 = vsel %vm672, %v704, %v486
        %v737 = vsel %vm673, %v705, %v493
        %v738 = vsel %vm674, %v706, %v500
        %v739 = vsel %vm675, %v707, %v507
        %v740 = vsel %vm676, %v708, %v514
        %v741 = vsel %vm677, %v709, %v521
        %v742 = vsel %vm678, %v710, %v528
        %v743 = vsel %vm679, %v711, %v535
        %v744 = vsel %vm680, %v712, %v542
        %v745 = vsel %vm681, %v713, %v549
        %v746 = vsel %vm682, %v714, %v556
        %v747 = vsel %vm683, %v715, %v563
        %v748 = vsel %vm684, %v716, %v570
        %v749 = vsel %vm685, %v717, %v577
        %v750 = vsel %vm686, %v718, %v584
        %v751 = vsel %vm687, %v719, %v591
        %vm752 = vcmp.ge.s32.totalorder %v720, 1
        %vm753 = vcmp.ge.s32.totalorder %v721, 1
        %vm754 = vcmp.ge.s32.totalorder %v722, 1
        %vm755 = vcmp.ge.s32.totalorder %v723, 1
        %vm756 = vcmp.ge.s32.totalorder %v724, 1
        %vm757 = vcmp.ge.s32.totalorder %v725, 1
        %vm758 = vcmp.ge.s32.totalorder %v726, 1
        %vm759 = vcmp.ge.s32.totalorder %v727, 1
        %vm760 = vcmp.ge.s32.totalorder %v728, 1
        %vm761 = vcmp.ge.s32.totalorder %v729, 1
        %vm762 = vcmp.ge.s32.totalorder %v730, 1
        %vm763 = vcmp.ge.s32.totalorder %v731, 1
        %vm764 = vcmp.ge.s32.totalorder %v732, 1
        %vm765 = vcmp.ge.s32.totalorder %v733, 1
        %vm766 = vcmp.ge.s32.totalorder %v734, 1
        %vm767 = vcmp.ge.s32.totalorder %v735, 1
        %vm768 = vcmp.ge.s32.totalorder %v736, 1
        %vm769 = vcmp.ge.s32.totalorder %v737, 1
        %vm770 = vcmp.ge.s32.totalorder %v738, 1
        %vm771 = vcmp.ge.s32.totalorder %v739, 1
        %vm772 = vcmp.ge.s32.totalorder %v740, 1
        %vm773 = vcmp.ge.s32.totalorder %v741, 1
        %vm774 = vcmp.ge.s32.totalorder %v742, 1
        %vm775 = vcmp.ge.s32.totalorder %v743, 1
        %vm776 = vcmp.ge.s32.totalorder %v744, 1
        %vm777 = vcmp.ge.s32.totalorder %v745, 1
        %vm778 = vcmp.ge.s32.totalorder %v746, 1
        %vm779 = vcmp.ge.s32.totalorder %v747, 1
        %vm780 = vcmp.ge.s32.totalorder %v748, 1
        %vm781 = vcmp.ge.s32.totalorder %v749, 1
        %vm782 = vcmp.ge.s32.totalorder %v750, 1
        %vm783 = vcmp.ge.s32.totalorder %v751, 1
        %vm784 = vcmp.le.s32.totalorder %v720, 14
        %vm785 = vcmp.le.s32.totalorder %v721, 14
        %vm786 = vcmp.le.s32.totalorder %v722, 14
        %vm787 = vcmp.le.s32.totalorder %v723, 14
        %vm788 = vcmp.le.s32.totalorder %v724, 14
        %vm789 = vcmp.le.s32.totalorder %v725, 14
        %vm790 = vcmp.le.s32.totalorder %v726, 14
        %vm791 = vcmp.le.s32.totalorder %v727, 14
        %vm792 = vcmp.le.s32.totalorder %v728, 14
        %vm793 = vcmp.le.s32.totalorder %v729, 14
        %vm794 = vcmp.le.s32.totalorder %v730, 14
        %vm795 = vcmp.le.s32.totalorder %v731, 14
        %vm796 = vcmp.le.s32.totalorder %v732, 14
        %vm797 = vcmp.le.s32.totalorder %v733, 14
        %vm798 = vcmp.le.s32.totalorder %v734, 14
        %vm799 = vcmp.le.s32.totalorder %v735, 14
        %vm800 = vcmp.le.s32.totalorder %v736, 14
        %vm801 = vcmp.le.s32.totalorder %v737, 14
        %vm802 = vcmp.le.s32.totalorder %v738, 14
        %vm803 = vcmp.le.s32.totalorder %v739, 14
        %vm804 = vcmp.le.s32.totalorder %v740, 14
        %vm805 = vcmp.le.s32.totalorder %v741, 14
        %vm806 = vcmp.le.s32.totalorder %v742, 14
        %vm807 = vcmp.le.s32.totalorder %v743, 14
        %vm808 = vcmp.le.s32.totalorder %v744, 14
        %vm809 = vcmp.le.s32.totalorder %v745, 14
        %vm810 = vcmp.le.s32.totalorder %v746, 14
        %vm811 = vcmp.le.s32.totalorder %v747, 14
        %vm812 = vcmp.le.s32.totalorder %v748, 14
        %vm813 = vcmp.le.s32.totalorder %v749, 14
        %vm814 = vcmp.le.s32.totalorder %v750, 14
        %vm815 = vcmp.le.s32.totalorder %v751, 14
        %v816 = vld [vmem:[%s290] sm:$0xf]
        %v817 = vld [vmem:[%s290 + $0x4] sm:$0xf]
        %v818 = vld [vmem:[%s290 + $0x8] sm:$0xf]
        %v819 = vld [vmem:[%s290 + $0xc] sm:$0xf]
        %v820 = vld [vmem:[%s290 + $0x10] sm:$0xf]
        %v821 = vld [vmem:[%s290 + $0x14] sm:$0xf]
        %v822 = vld [vmem:[%s290 + $0x18] sm:$0xf]
        %v823 = vld [vmem:[%s290 + $0x1c] sm:$0xf]
        %v824 = vld [vmem:[%s290 + $0x20] sm:$0xf]
        %v825 = vld [vmem:[%s290 + $0x24] sm:$0xf]
        %v826 = vld [vmem:[%s290 + $0x28] sm:$0xf]
        %v827 = vld [vmem:[%s290 + $0x2c] sm:$0xf]
        %v828 = vld [vmem:[%s290 + $0x30] sm:$0xf]
        %v829 = vld [vmem:[%s290 + $0x34] sm:$0xf]
        %v830 = vld [vmem:[%s290 + $0x38] sm:$0xf]
        %v831 = vld [vmem:[%s290 + $0x3c] sm:$0xf]
        %v832 = vld [vmem:[%s290 + $0x40] sm:$0xf]
        %v833 = vld [vmem:[%s290 + $0x44] sm:$0xf]
        %v834 = vld [vmem:[%s290 + $0x48] sm:$0xf]
        %v835 = vld [vmem:[%s290 + $0x4c] sm:$0xf]
        %v836 = vld [vmem:[%s290 + $0x50] sm:$0xf]
        %v837 = vld [vmem:[%s290 + $0x54] sm:$0xf]
        %v838 = vld [vmem:[%s290 + $0x58] sm:$0xf]
        %v839 = vld [vmem:[%s290 + $0x5c] sm:$0xf]
        %v840 = vld [vmem:[%s290 + $0x60] sm:$0xf]
        %v841 = vld [vmem:[%s290 + $0x64] sm:$0xf]
        %v842 = vld [vmem:[%s290 + $0x68] sm:$0xf]
        %v843 = vld [vmem:[%s290 + $0x6c] sm:$0xf]
        %v844 = vld [vmem:[%s290 + $0x70] sm:$0xf]
        %v845 = vld [vmem:[%s290 + $0x74] sm:$0xf]
        %v846 = vld [vmem:[%s290 + $0x78] sm:$0xf]
        %v847 = vld [vmem:[%s290 + $0x7c] sm:$0xf]
        %v880 = vunpack.c.l.b16 %v816
        %v881 = vunpack.c.l.b16 %v817
        %v882 = vunpack.c.l.b16 %v818
        %v883 = vunpack.c.l.b16 %v819
        %v884 = vunpack.c.l.b16 %v820
        %v885 = vunpack.c.l.b16 %v821
        %v886 = vunpack.c.l.b16 %v822
        %v887 = vunpack.c.l.b16 %v823
        %v888 = vunpack.c.l.b16 %v824
        %v889 = vunpack.c.l.b16 %v825
        %v890 = vunpack.c.l.b16 %v826
        %v891 = vunpack.c.l.b16 %v827
        %v892 = vunpack.c.l.b16 %v828
        %v893 = vunpack.c.l.b16 %v829
        %v894 = vunpack.c.l.b16 %v830
        %v895 = vunpack.c.l.b16 %v831
        %v896 = vunpack.c.l.b16 %v832
        %v897 = vunpack.c.l.b16 %v833
        %v898 = vunpack.c.l.b16 %v834
        %v899 = vunpack.c.l.b16 %v835
        %v900 = vunpack.c.l.b16 %v836
        %v901 = vunpack.c.l.b16 %v837
        %v902 = vunpack.c.l.b16 %v838
        %v903 = vunpack.c.l.b16 %v839
        %v904 = vunpack.c.l.b16 %v840
        %v905 = vunpack.c.l.b16 %v841
        %v906 = vunpack.c.l.b16 %v842
        %v907 = vunpack.c.l.b16 %v843
        %v908 = vunpack.c.l.b16 %v844
        %v909 = vunpack.c.l.b16 %v845
        %v910 = vunpack.c.l.b16 %v846
        %v911 = vunpack.c.l.b16 %v847
        %v912 = vpack.c.b16 %v881, %v880
        %v913 = vpack.c.b16 %v883, %v882
        %v914 = vpack.c.b16 %v885, %v884
        %v915 = vpack.c.b16 %v887, %v886
        %v916 = vpack.c.b16 %v889, %v888
        %v917 = vpack.c.b16 %v891, %v890
        %v918 = vpack.c.b16 %v893, %v892
        %v919 = vpack.c.b16 %v895, %v894
        %v920 = vpack.c.b16 %v897, %v896
        %v921 = vpack.c.b16 %v899, %v898
        %v922 = vpack.c.b16 %v901, %v900
        %v923 = vpack.c.b16 %v903, %v902
        %v924 = vpack.c.b16 %v905, %v904
        %v925 = vpack.c.b16 %v907, %v906
        %v926 = vpack.c.b16 %v909, %v908
        %v927 = vpack.c.b16 %v911, %v910
        %v944 = vsel %vm752, 1, 0
        %v945 = vsel %vm753, 1, 0
        %v946 = vsel %vm754, 1, 0
        %v947 = vsel %vm755, 1, 0
        %v948 = vsel %vm756, 1, 0
        %v949 = vsel %vm757, 1, 0
        %v950 = vsel %vm758, 1, 0
        %v951 = vsel %vm759, 1, 0
        %v952 = vsel %vm760, 1, 0
        %v953 = vsel %vm761, 1, 0
        %v954 = vsel %vm762, 1, 0
        %v955 = vsel %vm763, 1, 0
        %v956 = vsel %vm764, 1, 0
        %v957 = vsel %vm765, 1, 0
        %v958 = vsel %vm766, 1, 0
        %v959 = vsel %vm767, 1, 0
        %v960 = vsel %vm768, 1, 0
        %v961 = vsel %vm769, 1, 0
        %v962 = vsel %vm770, 1, 0
        %v963 = vsel %vm771, 1, 0
        %v964 = vsel %vm772, 1, 0
        %v965 = vsel %vm773, 1, 0
        %v966 = vsel %vm774, 1, 0
        %v967 = vsel %vm775, 1, 0
        %v968 = vsel %vm776, 1, 0
        %v969 = vsel %vm777, 1, 0
        %v970 = vsel %vm778, 1, 0
        %v971 = vsel %vm779, 1, 0
        %v972 = vsel %vm780, 1, 0
        %v973 = vsel %vm781, 1, 0
        %v974 = vsel %vm782, 1, 0
        %v975 = vsel %vm783, 1, 0
        %vm976 = vcmp.eq.s32.totalorder %v944, 1
        %vm977 = vcmp.eq.s32.totalorder %v945, 1
        %vm978 = vcmp.eq.s32.totalorder %v946, 1
        %vm979 = vcmp.eq.s32.totalorder %v947, 1
        %vm980 = vcmp.eq.s32.totalorder %v948, 1
        %vm981 = vcmp.eq.s32.totalorder %v949, 1
        %vm982 = vcmp.eq.s32.totalorder %v950, 1
        %vm983 = vcmp.eq.s32.totalorder %v951, 1
        %vm984 = vcmp.eq.s32.totalorder %v952, 1
        %vm985 = vcmp.eq.s32.totalorder %v953, 1
        %vm986 = vcmp.eq.s32.totalorder %v954, 1
        %vm987 = vcmp.eq.s32.totalorder %v955, 1
        %vm988 = vcmp.eq.s32.totalorder %v956, 1
        %vm989 = vcmp.eq.s32.totalorder %v957, 1
        %vm990 = vcmp.eq.s32.totalorder %v958, 1
        %vm991 = vcmp.eq.s32.totalorder %v959, 1
        %vm992 = vcmp.eq.s32.totalorder %v960, 1
        %vm993 = vcmp.eq.s32.totalorder %v961, 1
        %vm994 = vcmp.eq.s32.totalorder %v962, 1
        %vm995 = vcmp.eq.s32.totalorder %v963, 1
        %vm996 = vcmp.eq.s32.totalorder %v964, 1
        %vm997 = vcmp.eq.s32.totalorder %v965, 1
        %vm998 = vcmp.eq.s32.totalorder %v966, 1
        %vm999 = vcmp.eq.s32.totalorder %v967, 1
        %vm1000 = vcmp.eq.s32.totalorder %v968, 1
        %vm1001 = vcmp.eq.s32.totalorder %v969, 1
        %vm1002 = vcmp.eq.s32.totalorder %v970, 1
        %vm1003 = vcmp.eq.s32.totalorder %v971, 1
        %vm1004 = vcmp.eq.s32.totalorder %v972, 1
        %vm1005 = vcmp.eq.s32.totalorder %v973, 1
        %vm1006 = vcmp.eq.s32.totalorder %v974, 1
        %vm1007 = vcmp.eq.s32.totalorder %v975, 1
        %vm1008 = vmpackc.low %vm978, %vm978
        %vm1009 = vmpackc.low %vm979, %vm979
        %vm1010 = vmpackc.low %vm980, %vm980
        %vm1011 = vmpackc.low %vm981, %vm981
        %vm1012 = vmpackc.low %vm982, %vm982
        %vm1013 = vmpackc.low %vm983, %vm983
        %vm1014 = vmpackc.low %vm984, %vm984
        %vm1015 = vmpackc.low %vm985, %vm985
        %vm1016 = vmpackc.low %vm986, %vm986
        %vm1017 = vmpackc.low %vm987, %vm987
        %vm1018 = vmpackc.low %vm988, %vm988
        %vm1019 = vmpackc.low %vm989, %vm989
        %vm1020 = vmpackc.low %vm990, %vm990
        %vm1021 = vmpackc.low %vm991, %vm991
        %vm1022 = vmpackc.low %vm992, %vm992
        %vm1023 = vmpackc.low %vm993, %vm993
        %vm1024 = vmpackc.low %vm994, %vm994
        %vm1025 = vmpackc.low %vm995, %vm995
        %vm1026 = vmpackc.low %vm996, %vm996
        %vm1027 = vmpackc.low %vm997, %vm997
        %vm1028 = vmpackc.low %vm998, %vm998
        %vm1029 = vmpackc.low %vm999, %vm999
        %vm1030 = vmpackc.low %vm1000, %vm1000
        %vm1031 = vmpackc.low %vm1001, %vm1001
        %vm1032 = vmpackc.low %vm1002, %vm1002
        %vm1033 = vmpackc.low %vm1003, %vm1003
        %vm1034 = vmpackc.low %vm1004, %vm1004
        %vm1035 = vmpackc.low %vm1005, %vm1005
        %vm1036 = vmpackc.low %vm1006, %vm1006
        %vm1037 = vmpackc.low %vm1007, %vm1007
        %v1038 = vsel %vm1008, 65537, 0
        %v1039 = vsel %vm1009, 65537, 0
        %v1040 = vsel %vm1010, 65537, 0
        %v1041 = vsel %vm1011, 65537, 0
        %v1042 = vsel %vm1012, 65537, 0
        %v1043 = vsel %vm1013, 65537, 0
        %v1044 = vsel %vm1014, 65537, 0
        %v1045 = vsel %vm1015, 65537, 0
        %v1046 = vsel %vm1016, 65537, 0
        %v1047 = vsel %vm1017, 65537, 0
        %v1048 = vsel %vm1018, 65537, 0
        %v1049 = vsel %vm1019, 65537, 0
        %v1050 = vsel %vm1020, 65537, 0
        %v1051 = vsel %vm1021, 65537, 0
        %v1052 = vsel %vm1022, 65537, 0
        %v1053 = vsel %vm1023, 65537, 0
        %v1054 = vsel %vm1024, 65537, 0
        %v1055 = vsel %vm1025, 65537, 0
        %v1056 = vsel %vm1026, 65537, 0
        %v1057 = vsel %vm1027, 65537, 0
        %v1058 = vsel %vm1028, 65537, 0
        %v1059 = vsel %vm1029, 65537, 0
        %v1060 = vsel %vm1030, 65537, 0
        %v1061 = vsel %vm1031, 65537, 0
        %v1062 = vsel %vm1032, 65537, 0
        %v1063 = vsel %vm1033, 65537, 0
        %v1064 = vsel %vm1034, 65537, 0
        %v1065 = vsel %vm1035, 65537, 0
        %v1066 = vsel %vm1036, 65537, 0
        %v1067 = vsel %vm1037, 65537, 0
        %v1068 = vunpack.c.l.b16 %v1038
        %v1069 = vunpack.c.l.b16 %v1039
        %v1070 = vunpack.c.l.b16 %v1040
        %v1071 = vunpack.c.l.b16 %v1041
        %v1072 = vunpack.c.l.b16 %v1042
        %v1073 = vunpack.c.l.b16 %v1043
        %v1074 = vunpack.c.l.b16 %v1044
        %v1075 = vunpack.c.l.b16 %v1045
        %v1076 = vunpack.c.l.b16 %v1046
        %v1077 = vunpack.c.l.b16 %v1047
        %v1078 = vunpack.c.l.b16 %v1048
        %v1079 = vunpack.c.l.b16 %v1049
        %v1080 = vunpack.c.l.b16 %v1050
        %v1081 = vunpack.c.l.b16 %v1051
        %v1082 = vunpack.c.l.b16 %v1052
        %v1083 = vunpack.c.l.b16 %v1053
        %v1084 = vunpack.c.l.b16 %v1054
        %v1085 = vunpack.c.l.b16 %v1055
        %v1086 = vunpack.c.l.b16 %v1056
        %v1087 = vunpack.c.l.b16 %v1057
        %v1088 = vunpack.c.l.b16 %v1058
        %v1089 = vunpack.c.l.b16 %v1059
        %v1090 = vunpack.c.l.b16 %v1060
        %v1091 = vunpack.c.l.b16 %v1061
        %v1092 = vunpack.c.l.b16 %v1062
        %v1093 = vunpack.c.l.b16 %v1063
        %v1094 = vunpack.c.l.b16 %v1064
        %v1095 = vunpack.c.l.b16 %v1065
        %v1096 = vunpack.c.l.b16 %v1066
        %v1097 = vunpack.c.l.b16 %v1067
        %v1098 = vpack.c.b16 %v1069, %v1068
        %v1099 = vpack.c.b16 %v1071, %v1070
        %v1100 = vpack.c.b16 %v1073, %v1072
        %v1101 = vpack.c.b16 %v1075, %v1074
        %v1102 = vpack.c.b16 %v1077, %v1076
        %v1103 = vpack.c.b16 %v1079, %v1078
        %v1104 = vpack.c.b16 %v1081, %v1080
        %v1105 = vpack.c.b16 %v1083, %v1082
        %v1106 = vpack.c.b16 %v1085, %v1084
        %v1107 = vpack.c.b16 %v1087, %v1086
        %v1108 = vpack.c.b16 %v1089, %v1088
        %v1109 = vpack.c.b16 %v1091, %v1090
        %v1110 = vpack.c.b16 %v1093, %v1092
        %v1111 = vpack.c.b16 %v1095, %v1094
        %v1112 = vpack.c.b16 %v1097, %v1096
        %vm1113 = vsmask.f32 7424
        %v1115 = vshrl.u32 %v1098, 16
        %v1117 = vshll.u32 %v1098, 16
        %v1119 = vrot.slane %v1117, 1
        %v1120 = vor.u32 %v1115, %v1119
        %v1122 = vshll.u32 %v1099, 16
        %v1124 = vrot.slane %v1122, 1
        %v1125 = vsel %vm1113, %v1120, %v1124
        %v1126 = vshrl.u32 %v1099, 16
        %v1128 = vor.u32 %v1126, %v1124
        %v1130 = vshll.u32 %v1100, 16
        %v1132 = vrot.slane %v1130, 1
        %v1133 = vsel %vm1113, %v1128, %v1132
        %v1134 = vshrl.u32 %v1100, 16
        %v1136 = vor.u32 %v1134, %v1132
        %v1138 = vshll.u32 %v1101, 16
        %v1140 = vrot.slane %v1138, 1
        %v1141 = vsel %vm1113, %v1136, %v1140
        %v1142 = vshrl.u32 %v1101, 16
        %v1144 = vor.u32 %v1142, %v1140
        %v1146 = vshll.u32 %v1102, 16
        %v1148 = vrot.slane %v1146, 1
        %v1149 = vsel %vm1113, %v1144, %v1148
        %v1150 = vshrl.u32 %v1102, 16
        %v1152 = vor.u32 %v1150, %v1148
        %v1154 = vshll.u32 %v1103, 16
        %v1156 = vrot.slane %v1154, 1
        %v1157 = vsel %vm1113, %v1152, %v1156
        %v1158 = vshrl.u32 %v1103, 16
        %v1160 = vor.u32 %v1158, %v1156
        %v1162 = vshll.u32 %v1104, 16
        %v1164 = vrot.slane %v1162, 1
        %v1165 = vsel %vm1113, %v1160, %v1164
        %v1166 = vshrl.u32 %v1104, 16
        %v1168 = vor.u32 %v1166, %v1164
        %v1170 = vshll.u32 %v1105, 16
        %v1172 = vrot.slane %v1170, 1
        %v1173 = vsel %vm1113, %v1168, %v1172
        %v1174 = vshrl.u32 %v1105, 16
        %v1176 = vor.u32 %v1174, %v1172
        %v1178 = vshll.u32 %v1106, 16
        %v1180 = vrot.slane %v1178, 1
        %v1181 = vsel %vm1113, %v1176, %v1180
        %v1182 = vshrl.u32 %v1106, 16
        %v1184 = vor.u32 %v1182, %v1180
        %v1186 = vshll.u32 %v1107, 16
        %v1188 = vrot.slane %v1186, 1
        %v1189 = vsel %vm1113, %v1184, %v1188
        %v1190 = vshrl.u32 %v1107, 16
        %v1192 = vor.u32 %v1190, %v1188
        %v1194 = vshll.u32 %v1108, 16
        %v1196 = vrot.slane %v1194, 1
        %v1197 = vsel %vm1113, %v1192, %v1196
        %v1198 = vshrl.u32 %v1108, 16
        %v1200 = vor.u32 %v1198, %v1196
        %v1202 = vshll.u32 %v1109, 16
        %v1204 = vrot.slane %v1202, 1
        %v1205 = vsel %vm1113, %v1200, %v1204
        %v1206 = vshrl.u32 %v1109, 16
        %v1208 = vor.u32 %v1206, %v1204
        %v1210 = vshll.u32 %v1110, 16
        %v1212 = vrot.slane %v1210, 1
        %v1213 = vsel %vm1113, %v1208, %v1212
        %v1214 = vshrl.u32 %v1110, 16
        %v1216 = vor.u32 %v1214, %v1212
        %v1218 = vshll.u32 %v1111, 16
        %v1220 = vrot.slane %v1218, 1
        %v1221 = vsel %vm1113, %v1216, %v1220
        %v1222 = vshrl.u32 %v1111, 16
        %v1224 = vor.u32 %v1222, %v1220
        %v1226 = vshll.u32 %v1112, 16
        %v1228 = vrot.slane %v1226, 1
        %v1229 = vsel %vm1113, %v1224, %v1228
        %v1230 = vshrl.u32 %v1112, 16
        %v1232 = vor.u32 %v1230, %v1228
        %v1233 = vunpack.c.l.b16 %v1125
        %v1234 = vunpack.c.h.b16 %v1125
        %v1235 = vunpack.c.l.b16 0
        %v1236 = vunpack.c.h.b16 0
        %vm1237 = vcmp.ne.s32.totalorder %v1233, %v1235
        %vm1238 = vcmp.ne.s32.totalorder %v1234, %v1236
        %vm1239 = vmpackc.low %vm1238, %vm1237
        %v1240 = vunpack.c.l.b16 %v1133
        %v1241 = vunpack.c.h.b16 %v1133
        %v1242 = vunpack.c.l.b16 0
        %v1243 = vunpack.c.h.b16 0
        %vm1244 = vcmp.ne.s32.totalorder %v1240, %v1242
        %vm1245 = vcmp.ne.s32.totalorder %v1241, %v1243
        %vm1246 = vmpackc.low %vm1245, %vm1244
        %v1247 = vunpack.c.l.b16 %v1141
        %v1248 = vunpack.c.h.b16 %v1141
        %v1249 = vunpack.c.l.b16 0
        %v1250 = vunpack.c.h.b16 0
        %vm1251 = vcmp.ne.s32.totalorder %v1247, %v1249
        %vm1252 = vcmp.ne.s32.totalorder %v1248, %v1250
        %vm1253 = vmpackc.low %vm1252, %vm1251
        %v1254 = vunpack.c.l.b16 %v1149
        %v1255 = vunpack.c.h.b16 %v1149
        %v1256 = vunpack.c.l.b16 0
        %v1257 = vunpack.c.h.b16 0
        %vm1258 = vcmp.ne.s32.totalorder %v1254, %v1256
        %vm1259 = vcmp.ne.s32.totalorder %v1255, %v1257
        %vm1260 = vmpackc.low %vm1259, %vm1258
        %v1261 = vunpack.c.l.b16 %v1157
        %v1262 = vunpack.c.h.b16 %v1157
        %v1263 = vunpack.c.l.b16 0
        %v1264 = vunpack.c.h.b16 0
        %vm1265 = vcmp.ne.s32.totalorder %v1261, %v1263
        %vm1266 = vcmp.ne.s32.totalorder %v1262, %v1264
        %vm1267 = vmpackc.low %vm1266, %vm1265
        %v1268 = vunpack.c.l.b16 %v1165
        %v1269 = vunpack.c.h.b16 %v1165
        %v1270 = vunpack.c.l.b16 0
        %v1271 = vunpack.c.h.b16 0
        %vm1272 = vcmp.ne.s32.totalorder %v1268, %v1270
        %vm1273 = vcmp.ne.s32.totalorder %v1269, %v1271
        %vm1274 = vmpackc.low %vm1273, %vm1272
        %v1275 = vunpack.c.l.b16 %v1173
        %v1276 = vunpack.c.h.b16 %v1173
        %v1277 = vunpack.c.l.b16 0
        %v1278 = vunpack.c.h.b16 0
        %vm1279 = vcmp.ne.s32.totalorder %v1275, %v1277
        %vm1280 = vcmp.ne.s32.totalorder %v1276, %v1278
        %vm1281 = vmpackc.low %vm1280, %vm1279
        %v1282 = vunpack.c.l.b16 %v1181
        %v1283 = vunpack.c.h.b16 %v1181
        %v1284 = vunpack.c.l.b16 0
        %v1285 = vunpack.c.h.b16 0
        %vm1286 = vcmp.ne.s32.totalorder %v1282, %v1284
        %vm1287 = vcmp.ne.s32.totalorder %v1283, %v1285
        %vm1288 = vmpackc.low %vm1287, %vm1286
        %v1289 = vunpack.c.l.b16 %v1189
        %v1290 = vunpack.c.h.b16 %v1189
        %v1291 = vunpack.c.l.b16 0
        %v1292 = vunpack.c.h.b16 0
        %vm1293 = vcmp.ne.s32.totalorder %v1289, %v1291
        %vm1294 = vcmp.ne.s32.totalorder %v1290, %v1292
        %vm1295 = vmpackc.low %vm1294, %vm1293
        %v1296 = vunpack.c.l.b16 %v1197
        %v1297 = vunpack.c.h.b16 %v1197
        %v1298 = vunpack.c.l.b16 0
        %v1299 = vunpack.c.h.b16 0
        %vm1300 = vcmp.ne.s32.totalorder %v1296, %v1298
        %vm1301 = vcmp.ne.s32.totalorder %v1297, %v1299
        %vm1302 = vmpackc.low %vm1301, %vm1300
        %v1303 = vunpack.c.l.b16 %v1205
        %v1304 = vunpack.c.h.b16 %v1205
        %v1305 = vunpack.c.l.b16 0
        %v1306 = vunpack.c.h.b16 0
        %vm1307 = vcmp.ne.s32.totalorder %v1303, %v1305
        %vm1308 = vcmp.ne.s32.totalorder %v1304, %v1306
        %vm1309 = vmpackc.low %vm1308, %vm1307
        %v1310 = vunpack.c.l.b16 %v1213
        %v1311 = vunpack.c.h.b16 %v1213
        %v1312 = vunpack.c.l.b16 0
        %v1313 = vunpack.c.h.b16 0
        %vm1314 = vcmp.ne.s32.totalorder %v1310, %v1312
        %vm1315 = vcmp.ne.s32.totalorder %v1311, %v1313
        %vm1316 = vmpackc.low %vm1315, %vm1314
        %v1317 = vunpack.c.l.b16 %v1221
        %v1318 = vunpack.c.h.b16 %v1221
        %v1319 = vunpack.c.l.b16 0
        %v1320 = vunpack.c.h.b16 0
        %vm1321 = vcmp.ne.s32.totalorder %v1317, %v1319
        %vm1322 = vcmp.ne.s32.totalorder %v1318, %v1320
        %vm1323 = vmpackc.low %vm1322, %vm1321
        %v1324 = vunpack.c.l.b16 %v1229
        %v1325 = vunpack.c.h.b16 %v1229
        %v1326 = vunpack.c.l.b16 0
        %v1327 = vunpack.c.h.b16 0
        %vm1328 = vcmp.ne.s32.totalorder %v1324, %v1326
        %vm1329 = vcmp.ne.s32.totalorder %v1325, %v1327
        %vm1330 = vmpackc.low %vm1329, %vm1328
        %v1331 = vunpack.c.l.b16 %v1232
        %v1332 = vunpack.c.h.b16 %v1232
        %v1333 = vunpack.c.l.b16 0
        %v1334 = vunpack.c.h.b16 0
        %vm1335 = vcmp.ne.s32.totalorder %v1331, %v1333
        %vm1336 = vcmp.ne.s32.totalorder %v1332, %v1334
        %vm1337 = vmpackc.low %vm1336, %vm1335
        %v1338 = vsel %vm1239, %v912, 0
        %v1339 = vsel %vm1246, %v913, 0
        %v1340 = vsel %vm1253, %v914, 0
        %v1341 = vsel %vm1260, %v915, 0
        %v1342 = vsel %vm1267, %v916, 0
        %v1343 = vsel %vm1274, %v917, 0
        %v1344 = vsel %vm1281, %v918, 0
        %v1345 = vsel %vm1288, %v919, 0
        %v1346 = vsel %vm1295, %v920, 0
        %v1347 = vsel %vm1302, %v921, 0
        %v1348 = vsel %vm1309, %v922, 0
        %v1349 = vsel %vm1316, %v923, 0
        %v1350 = vsel %vm1323, %v924, 0
        %v1351 = vsel %vm1330, %v925, 0
        %v1352 = vsel %vm1337, %v926, 0
        %v1353 = vld [vmem:[#allocation5] sm:$0xf]
        %v1354 = vld [vmem:[#allocation5 + $0x4] sm:$0xf]
        %v1355 = vld [vmem:[#allocation5 + $0x8] sm:$0xf]
        %v1356 = vld [vmem:[#allocation5 + $0xc] sm:$0xf]
        %v1357 = vld [vmem:[#allocation5 + $0x10] sm:$0xf]
        %v1358 = vld [vmem:[#allocation5 + $0x14] sm:$0xf]
        %v1359 = vld [vmem:[#allocation5 + $0x18] sm:$0xf]
        %v1360 = vld [vmem:[#allocation5 + $0x1c] sm:$0xf]
        %v1361 = vld [vmem:[#allocation5 + $0x20] sm:$0xf]
        %v1362 = vld [vmem:[#allocation5 + $0x24] sm:$0xf]
        %v1363 = vld [vmem:[#allocation5 + $0x28] sm:$0xf]
        %v1364 = vld [vmem:[#allocation5 + $0x2c] sm:$0xf]
        %v1365 = vld [vmem:[#allocation5 + $0x30] sm:$0xf]
        %v1366 = vld [vmem:[#allocation5 + $0x34] sm:$0xf]
        %v1367 = vld [vmem:[#allocation5 + $0x38] sm:$0xf]
        %v1368 = vld [vmem:[#allocation5 + $0x3c] sm:$0xf]
        %s1369 = scalar_lea.vmem [#allocation5], 64
        %v1370 = vld [vmem:[%s1369] sm:$0xf]
        %v1371 = vld [vmem:[%s1369 + $0x4] sm:$0xf]
        %v1372 = vld [vmem:[%s1369 + $0x8] sm:$0xf]
        %v1373 = vld [vmem:[%s1369 + $0xc] sm:$0xf]
        %v1374 = vld [vmem:[%s1369 + $0x10] sm:$0xf]
        %v1375 = vld [vmem:[%s1369 + $0x14] sm:$0xf]
        %v1376 = vld [vmem:[%s1369 + $0x18] sm:$0xf]
        %v1377 = vld [vmem:[%s1369 + $0x1c] sm:$0xf]
        %v1378 = vld [vmem:[%s1369 + $0x20] sm:$0xf]
        %v1379 = vld [vmem:[%s1369 + $0x24] sm:$0xf]
        %v1380 = vld [vmem:[%s1369 + $0x28] sm:$0xf]
        %v1381 = vld [vmem:[%s1369 + $0x2c] sm:$0xf]
        %v1382 = vld [vmem:[%s1369 + $0x30] sm:$0xf]
        %v1383 = vld [vmem:[%s1369 + $0x34] sm:$0xf]
        %v1384 = vld [vmem:[%s1369 + $0x38] sm:$0xf]
        %v1385 = vld [vmem:[%s1369 + $0x3c] sm:$0xf]
        %v1402 = vunpack.c.l.b16 %v1370
        %v1403 = vunpack.c.l.b16 %v1371
        %v1404 = vunpack.c.l.b16 %v1372
        %v1405 = vunpack.c.l.b16 %v1373
        %v1406 = vunpack.c.l.b16 %v1374
        %v1407 = vunpack.c.l.b16 %v1375
        %v1408 = vunpack.c.l.b16 %v1376
        %v1409 = vunpack.c.l.b16 %v1377
        %v1410 = vunpack.c.l.b16 %v1378
        %v1411 = vunpack.c.l.b16 %v1379
        %v1412 = vunpack.c.l.b16 %v1380
        %v1413 = vunpack.c.l.b16 %v1381
        %v1414 = vunpack.c.l.b16 %v1382
        %v1415 = vunpack.c.l.b16 %v1383
        %v1416 = vunpack.c.l.b16 %v1384
        %v1417 = vunpack.c.l.b16 %v1385
        %v1418 = vpack.c.b16 %v1403, %v1402
        %v1419 = vpack.c.b16 %v1405, %v1404
        %v1420 = vpack.c.b16 %v1407, %v1406
        %v1421 = vpack.c.b16 %v1409, %v1408
        %v1422 = vpack.c.b16 %v1411, %v1410
        %v1423 = vpack.c.b16 %v1413, %v1412
        %v1424 = vpack.c.b16 %v1415, %v1414
        %v1425 = vpack.c.b16 %v1417, %v1416
        %1434 = vmatpush.bf16.msra.mxu0 %v1425
        %1435 = vmatpush.bf16.msra.mxu0 %v1424
        %1436 = vmatpush.bf16.msra.mxu0 %v1423
        %1437 = vmatpush.bf16.msra.mxu0 %v1422
        %1438 = vmatpush.bf16.msra.mxu0 %v1421
        %1439 = vmatpush.bf16.msra.mxu0 %v1420
        %1440 = vmatpush.bf16.msra.mxu0 %v1419
        %1441 = vmatpush.bf16.msra.mxu0 %v1418
        %1442 = vmatmul.bf16.gmra.mxu0 0
        %v1443 = vpop.f32.mrf.mxu0
        %v1444 = vadd.f32 0.0, %v1443
        %v1445 = vpop.f32.mrf.mxu0
        %v1446 = vadd.f32 0.0, %v1445
        %1447 = vmatmul.bf16.gmra.mxu0 %v912
        %v1448 = vpop.f32.mrf.mxu0
        %v1449 = vadd.f32 0.0, %v1448
        %v1450 = vpop.f32.mrf.mxu0
        %v1451 = vadd.f32 0.0, %v1450
        %1452 = vmatmul.bf16.gmra.mxu0 %v913
        %v1453 = vpop.f32.mrf.mxu0
        %v1454 = vadd.f32 0.0, %v1453
        %v1455 = vpop.f32.mrf.mxu0
        %v1456 = vadd.f32 0.0, %v1455
        %1457 = vmatmul.bf16.gmra.mxu0 %v914
        %v1458 = vpop.f32.mrf.mxu0
        %v1459 = vadd.f32 0.0, %v1458
        %v1460 = vpop.f32.mrf.mxu0
        %v1461 = vadd.f32 0.0, %v1460
        %1462 = vmatmul.bf16.gmra.mxu0 %v915
        %v1463 = vpop.f32.mrf.mxu0
        %v1464 = vadd.f32 0.0, %v1463
        %v1465 = vpop.f32.mrf.mxu0
        %v1466 = vadd.f32 0.0, %v1465
        %1467 = vmatmul.bf16.gmra.mxu0 %v916
        %v1468 = vpop.f32.mrf.mxu0
        %v1469 = vadd.f32 0.0, %v1468
        %v1470 = vpop.f32.mrf.mxu0
        %v1471 = vadd.f32 0.0, %v1470
        %1472 = vmatmul.bf16.gmra.mxu0 %v917
        %v1473 = vpop.f32.mrf.mxu0
        %v1474 = vadd.f32 0.0, %v1473
        %v1475 = vpop.f32.mrf.mxu0
        %v1476 = vadd.f32 0.0, %v1475
        %1477 = vmatmul.bf16.gmra.mxu0 %v918
        %v1478 = vpop.f32.mrf.mxu0
        %v1479 = vadd.f32 0.0, %v1478
        %v1480 = vpop.f32.mrf.mxu0
        %v1481 = vadd.f32 0.0, %v1480
        %1482 = vmatmul.bf16.gmra.mxu0 %v919
        %v1483 = vpop.f32.mrf.mxu0
        %v1484 = vadd.f32 0.0, %v1483
        %v1485 = vpop.f32.mrf.mxu0
        %v1486 = vadd.f32 0.0, %v1485
        %1487 = vmatmul.bf16.gmra.mxu0 %v920
        %v1488 = vpop.f32.mrf.mxu0
        %v1489 = vadd.f32 0.0, %v1488
        %v1490 = vpop.f32.mrf.mxu0
        %v1491 = vadd.f32 0.0, %v1490
        %1492 = vmatmul.bf16.gmra.mxu0 %v921
        %v1493 = vpop.f32.mrf.mxu0
        %v1494 = vadd.f32 0.0, %v1493
        %v1495 = vpop.f32.mrf.mxu0
        %v1496 = vadd.f32 0.0, %v1495
        %1497 = vmatmul.bf16.gmra.mxu0 %v922
        %v1498 = vpop.f32.mrf.mxu0
        %v1499 = vadd.f32 0.0, %v1498
        %v1500 = vpop.f32.mrf.mxu0
        %v1501 = vadd.f32 0.0, %v1500
        %1502 = vmatmul.bf16.gmra.mxu0 %v923
        %v1503 = vpop.f32.mrf.mxu0
        %v1504 = vadd.f32 0.0, %v1503
        %v1505 = vpop.f32.mrf.mxu0
        %v1506 = vadd.f32 0.0, %v1505
        %1507 = vmatmul.bf16.gmra.mxu0 %v924
        %v1508 = vpop.f32.mrf.mxu0
        %v1509 = vadd.f32 0.0, %v1508
        %v1510 = vpop.f32.mrf.mxu0
        %v1511 = vadd.f32 0.0, %v1510
        %1512 = vmatmul.bf16.gmra.mxu0 %v925
        %v1513 = vpop.f32.mrf.mxu0
        %v1514 = vadd.f32 0.0, %v1513
        %v1515 = vpop.f32.mrf.mxu0
        %v1516 = vadd.f32 0.0, %v1515
        %1517 = vmatmul.bf16.gmra.mxu0 %v926
        %v1518 = vpop.f32.mrf.mxu0
        %v1519 = vadd.f32 0.0, %v1518
        %v1520 = vpop.f32.mrf.mxu0
        %v1521 = vadd.f32 0.0, %v1520
        %1522 = vdwg.mxu0
        %vm1523 = vsmask.f32 256
        %v1525 = vshrl.u32 0, 16
        %v1527 = vrot.slane %v1525, 7
        %v1528 = vshll.u32 0, 16
        %v1530 = vor.u32 %v1527, %v1528
        %v1531 = vsel %vm1523, %v1527, %v1530
        %v1533 = vshrl.u32 %v1338, 16
        %v1535 = vrot.slane %v1533, 7
        %v1536 = vshll.u32 %v1338, 16
        %v1538 = vor.u32 %v1535, %v1536
        %v1539 = vsel %vm1523, %v1527, %v1538
        %v1541 = vshrl.u32 %v1339, 16
        %v1543 = vrot.slane %v1541, 7
        %v1544 = vshll.u32 %v1339, 16
        %v1546 = vor.u32 %v1543, %v1544
        %v1547 = vsel %vm1523, %v1535, %v1546
        %v1549 = vshrl.u32 %v1340, 16
        %v1551 = vrot.slane %v1549, 7
        %v1552 = vshll.u32 %v1340, 16
        %v1554 = vor.u32 %v1551, %v1552
        %v1555 = vsel %vm1523, %v1543, %v1554
        %v1557 = vshrl.u32 %v1341, 16
        %v1559 = vrot.slane %v1557, 7
        %v1560 = vshll.u32 %v1341, 16
        %v1562 = vor.u32 %v1559, %v1560
        %v1563 = vsel %vm1523, %v1551, %v1562
        %v1565 = vshrl.u32 %v1342, 16
        %v1567 = vrot.slane %v1565, 7
        %v1568 = vshll.u32 %v1342, 16
        %v1570 = vor.u32 %v1567, %v1568
        %v1571 = vsel %vm1523, %v1559, %v1570
        %v1573 = vshrl.u32 %v1343, 16
        %v1575 = vrot.slane %v1573, 7
        %v1576 = vshll.u32 %v1343, 16
        %v1578 = vor.u32 %v1575, %v1576
        %v1579 = vsel %vm1523, %v1567, %v1578
        %v1581 = vshrl.u32 %v1344, 16
        %v1583 = vrot.slane %v1581, 7
        %v1584 = vshll.u32 %v1344, 16
        %v1586 = vor.u32 %v1583, %v1584
        %v1587 = vsel %vm1523, %v1575, %v1586
        %v1589 = vshrl.u32 %v1345, 16
        %v1591 = vrot.slane %v1589, 7
        %v1592 = vshll.u32 %v1345, 16
        %v1594 = vor.u32 %v1591, %v1592
        %v1595 = vsel %vm1523, %v1583, %v1594
        %v1597 = vshrl.u32 %v1346, 16
        %v1599 = vrot.slane %v1597, 7
        %v1600 = vshll.u32 %v1346, 16
        %v1602 = vor.u32 %v1599, %v1600
        %v1603 = vsel %vm1523, %v1591, %v1602
        %v1605 = vshrl.u32 %v1347, 16
        %v1607 = vrot.slane %v1605, 7
        %v1608 = vshll.u32 %v1347, 16
        %v1610 = vor.u32 %v1607, %v1608
        %v1611 = vsel %vm1523, %v1599, %v1610
        %v1613 = vshrl.u32 %v1348, 16
        %v1615 = vrot.slane %v1613, 7
        %v1616 = vshll.u32 %v1348, 16
        %v1618 = vor.u32 %v1615, %v1616
        %v1619 = vsel %vm1523, %v1607, %v1618
        %v1621 = vshrl.u32 %v1349, 16
        %v1623 = vrot.slane %v1621, 7
        %v1624 = vshll.u32 %v1349, 16
        %v1626 = vor.u32 %v1623, %v1624
        %v1627 = vsel %vm1523, %v1615, %v1626
        %v1629 = vshrl.u32 %v1350, 16
        %v1631 = vrot.slane %v1629, 7
        %v1632 = vshll.u32 %v1350, 16
        %v1634 = vor.u32 %v1631, %v1632
        %v1635 = vsel %vm1523, %v1623, %v1634
        %v1637 = vshrl.u32 %v1351, 16
        %v1639 = vrot.slane %v1637, 7
        %v1640 = vshll.u32 %v1351, 16
        %v1642 = vor.u32 %v1639, %v1640
        %v1643 = vsel %vm1523, %v1631, %v1642
        %v1645 = vshrl.u32 %v1352, 16
        %v1647 = vrot.slane %v1645, 7
        %v1648 = vshll.u32 %v1352, 16
        %v1650 = vor.u32 %v1647, %v1648
        %v1651 = vsel %vm1523, %v1639, %v1650
        %v1684 = vunpack.c.l.b16 %v1353
        %v1685 = vunpack.c.l.b16 %v1354
        %v1686 = vunpack.c.l.b16 %v1355
        %v1687 = vunpack.c.l.b16 %v1356
        %v1688 = vunpack.c.l.b16 %v1357
        %v1689 = vunpack.c.l.b16 %v1358
        %v1690 = vunpack.c.l.b16 %v1359
        %v1691 = vunpack.c.l.b16 %v1360
        %v1692 = vunpack.c.l.b16 %v1361
        %v1693 = vunpack.c.l.b16 %v1362
        %v1694 = vunpack.c.l.b16 %v1363
        %v1695 = vunpack.c.l.b16 %v1364
        %v1696 = vunpack.c.l.b16 %v1365
        %v1697 = vunpack.c.l.b16 %v1366
        %v1698 = vunpack.c.l.b16 %v1367
        %v1699 = vunpack.c.l.b16 %v1368
        %v1700 = vpack.c.b16 %v1685, %v1684
        %v1701 = vpack.c.b16 %v1687, %v1686
        %v1702 = vpack.c.b16 %v1689, %v1688
        %v1703 = vpack.c.b16 %v1691, %v1690
        %v1704 = vpack.c.b16 %v1693, %v1692
        %v1705 = vpack.c.b16 %v1695, %v1694
        %v1706 = vpack.c.b16 %v1697, %v1696
        %v1707 = vpack.c.b16 %v1699, %v1698
        %1716 = vmatpush.bf16.msra.mxu0 %v1707
        %1717 = vmatpush.bf16.msra.mxu0 %v1706
        %1718 = vmatpush.bf16.msra.mxu0 %v1705
        %1719 = vmatpush.bf16.msra.mxu0 %v1704
        %1720 = vmatpush.bf16.msra.mxu0 %v1703
        %1721 = vmatpush.bf16.msra.mxu0 %v1702
        %1722 = vmatpush.bf16.msra.mxu0 %v1701
        %1723 = vmatpush.bf16.msra.mxu0 %v1700
        %1724 = vmatmul.bf16.gmra.mxu0 %v1531
        %v1725 = vpop.f32.mrf.mxu0
        %v1726 = vadd.f32 %v1444, %v1725
        %v1727 = vpop.f32.mrf.mxu0
        %v1728 = vadd.f32 %v1446, %v1727
        %1729 = vmatmul.bf16.gmra.mxu0 %v1539
        %v1730 = vpop.f32.mrf.mxu0
        %v1731 = vadd.f32 %v1449, %v1730
        %v1732 = vpop.f32.mrf.mxu0
        %v1733 = vadd.f32 %v1451, %v1732
        %1734 = vmatmul.bf16.gmra.mxu0 %v1547
        %v1735 = vpop.f32.mrf.mxu0
        %v1736 = vadd.f32 %v1454, %v1735
        %v1737 = vpop.f32.mrf.mxu0
        %v1738 = vadd.f32 %v1456, %v1737
        %1739 = vmatmul.bf16.gmra.mxu0 %v1555
        %v1740 = vpop.f32.mrf.mxu0
        %v1741 = vadd.f32 %v1459, %v1740
        %v1742 = vpop.f32.mrf.mxu0
        %v1743 = vadd.f32 %v1461, %v1742
        %1744 = vmatmul.bf16.gmra.mxu0 %v1563
        %v1745 = vpop.f32.mrf.mxu0
        %v1746 = vadd.f32 %v1464, %v1745
        %v1747 = vpop.f32.mrf.mxu0
        %v1748 = vadd.f32 %v1466, %v1747
        %1749 = vmatmul.bf16.gmra.mxu0 %v1571
        %v1750 = vpop.f32.mrf.mxu0
        %v1751 = vadd.f32 %v1469, %v1750
        %v1752 = vpop.f32.mrf.mxu0
        %v1753 = vadd.f32 %v1471, %v1752
        %1754 = vmatmul.bf16.gmra.mxu0 %v1579
        %v1755 = vpop.f32.mrf.mxu0
        %v1756 = vadd.f32 %v1474, %v1755
        %v1757 = vpop.f32.mrf.mxu0
        %v1758 = vadd.f32 %v1476, %v1757
        %1759 = vmatmul.bf16.gmra.mxu0 %v1587
        %v1760 = vpop.f32.mrf.mxu0
        %v1761 = vadd.f32 %v1479, %v1760
        %v1762 = vpop.f32.mrf.mxu0
        %v1763 = vadd.f32 %v1481, %v1762
        %1764 = vmatmul.bf16.gmra.mxu0 %v1595
        %v1765 = vpop.f32.mrf.mxu0
        %v1766 = vadd.f32 %v1484, %v1765
        %v1767 = vpop.f32.mrf.mxu0
        %v1768 = vadd.f32 %v1486, %v1767
        %1769 = vmatmul.bf16.gmra.mxu0 %v1603
        %v1770 = vpop.f32.mrf.mxu0
        %v1771 = vadd.f32 %v1489, %v1770
        %v1772 = vpop.f32.mrf.mxu0
        %v1773 = vadd.f32 %v1491, %v1772
        %1774 = vmatmul.bf16.gmra.mxu0 %v1611
        %v1775 = vpop.f32.mrf.mxu0
        %v1776 = vadd.f32 %v1494, %v1775
        %v1777 = vpop.f32.mrf.mxu0
        %v1778 = vadd.f32 %v1496, %v1777
        %1779 = vmatmul.bf16.gmra.mxu0 %v1619
        %v1780 = vpop.f32.mrf.mxu0
        %v1781 = vadd.f32 %v1499, %v1780
        %v1782 = vpop.f32.mrf.mxu0
        %v1783 = vadd.f32 %v1501, %v1782
        %1784 = vmatmul.bf16.gmra.mxu0 %v1627
        %v1785 = vpop.f32.mrf.mxu0
        %v1786 = vadd.f32 %v1504, %v1785
        %v1787 = vpop.f32.mrf.mxu0
        %v1788 = vadd.f32 %v1506, %v1787
        %1789 = vmatmul.bf16.gmra.mxu0 %v1635
        %v1790 = vpop.f32.mrf.mxu0
        %v1791 = vadd.f32 %v1509, %v1790
        %v1792 = vpop.f32.mrf.mxu0
        %v1793 = vadd.f32 %v1511, %v1792
        %1794 = vmatmul.bf16.gmra.mxu0 %v1643
        %v1795 = vpop.f32.mrf.mxu0
        %v1796 = vadd.f32 %v1514, %v1795
        %v1797 = vpop.f32.mrf.mxu0
        %v1798 = vadd.f32 %v1516, %v1797
        %1799 = vmatmul.bf16.gmra.mxu0 %v1651
        %v1800 = vpop.f32.mrf.mxu0
        %v1801 = vadd.f32 %v1519, %v1800
        %v1802 = vpop.f32.mrf.mxu0
        %v1803 = vadd.f32 %v1521, %v1802
        %1804 = vdwg.mxu0
        %v1805 = vsel %vm784, 1, 0
        %v1806 = vsel %vm785, 1, 0
        %v1807 = vsel %vm786, 1, 0
        %v1808 = vsel %vm787, 1, 0
        %v1809 = vsel %vm788, 1, 0
        %v1810 = vsel %vm789, 1, 0
        %v1811 = vsel %vm790, 1, 0
        %v1812 = vsel %vm791, 1, 0
        %v1813 = vsel %vm792, 1, 0
        %v1814 = vsel %vm793, 1, 0
        %v1815 = vsel %vm794, 1, 0
        %v1816 = vsel %vm795, 1, 0
        %v1817 = vsel %vm796, 1, 0
        %v1818 = vsel %vm797, 1, 0
        %v1819 = vsel %vm798, 1, 0
        %v1820 = vsel %vm799, 1, 0
        %v1821 = vsel %vm800, 1, 0
        %v1822 = vsel %vm801, 1, 0
        %v1823 = vsel %vm802, 1, 0
        %v1824 = vsel %vm803, 1, 0
        %v1825 = vsel %vm804, 1, 0
        %v1826 = vsel %vm805, 1, 0
        %v1827 = vsel %vm806, 1, 0
        %v1828 = vsel %vm807, 1, 0
        %v1829 = vsel %vm808, 1, 0
        %v1830 = vsel %vm809, 1, 0
        %v1831 = vsel %vm810, 1, 0
        %v1832 = vsel %vm811, 1, 0
        %v1833 = vsel %vm812, 1, 0
        %v1834 = vsel %vm813, 1, 0
        %v1835 = vsel %vm814, 1, 0
        %v1836 = vsel %vm815, 1, 0
        %vm1837 = vcmp.eq.s32.totalorder %v1805, 1
        %vm1838 = vcmp.eq.s32.totalorder %v1806, 1
        %vm1839 = vcmp.eq.s32.totalorder %v1807, 1
        %vm1840 = vcmp.eq.s32.totalorder %v1808, 1
        %vm1841 = vcmp.eq.s32.totalorder %v1809, 1
        %vm1842 = vcmp.eq.s32.totalorder %v1810, 1
        %vm1843 = vcmp.eq.s32.totalorder %v1811, 1
        %vm1844 = vcmp.eq.s32.totalorder %v1812, 1
        %vm1845 = vcmp.eq.s32.totalorder %v1813, 1
        %vm1846 = vcmp.eq.s32.totalorder %v1814, 1
        %vm1847 = vcmp.eq.s32.totalorder %v1815, 1
        %vm1848 = vcmp.eq.s32.totalorder %v1816, 1
        %vm1849 = vcmp.eq.s32.totalorder %v1817, 1
        %vm1850 = vcmp.eq.s32.totalorder %v1818, 1
        %vm1851 = vcmp.eq.s32.totalorder %v1819, 1
        %vm1852 = vcmp.eq.s32.totalorder %v1820, 1
        %vm1853 = vcmp.eq.s32.totalorder %v1821, 1
        %vm1854 = vcmp.eq.s32.totalorder %v1822, 1
        %vm1855 = vcmp.eq.s32.totalorder %v1823, 1
        %vm1856 = vcmp.eq.s32.totalorder %v1824, 1
        %vm1857 = vcmp.eq.s32.totalorder %v1825, 1
        %vm1858 = vcmp.eq.s32.totalorder %v1826, 1
        %vm1859 = vcmp.eq.s32.totalorder %v1827, 1
        %vm1860 = vcmp.eq.s32.totalorder %v1828, 1
        %vm1861 = vcmp.eq.s32.totalorder %v1829, 1
        %vm1862 = vcmp.eq.s32.totalorder %v1830, 1
        %vm1863 = vcmp.eq.s32.totalorder %v1831, 1
        %vm1864 = vcmp.eq.s32.totalorder %v1832, 1
        %vm1865 = vcmp.eq.s32.totalorder %v1833, 1
        %vm1866 = vcmp.eq.s32.totalorder %v1834, 1
        %vm1867 = vcmp.eq.s32.totalorder %v1835, 1
        %vm1868 = vcmp.eq.s32.totalorder %v1836, 1
        %vm1869 = vmpackc.low %vm1837, %vm1837
        %vm1870 = vmpackc.low %vm1838, %vm1838
        %vm1871 = vmpackc.low %vm1839, %vm1839
        %vm1872 = vmpackc.low %vm1840, %vm1840
        %vm1873 = vmpackc.low %vm1841, %vm1841
        %vm1874 = vmpackc.low %vm1842, %vm1842
        %vm1875 = vmpackc.low %vm1843, %vm1843
        %vm1876 = vmpackc.low %vm1844, %vm1844
        %vm1877 = vmpackc.low %vm1845, %vm1845
        %vm1878 = vmpackc.low %vm1846, %vm1846
        %vm1879 = vmpackc.low %vm1847, %vm1847
        %vm1880 = vmpackc.low %vm1848, %vm1848
        %vm1881 = vmpackc.low %vm1849, %vm1849
        %vm1882 = vmpackc.low %vm1850, %vm1850
        %vm1883 = vmpackc.low %vm1851, %vm1851
        %vm1884 = vmpackc.low %vm1852, %vm1852
        %vm1885 = vmpackc.low %vm1853, %vm1853
        %vm1886 = vmpackc.low %vm1854, %vm1854
        %vm1887 = vmpackc.low %vm1855, %vm1855
        %vm1888 = vmpackc.low %vm1856, %vm1856
        %vm1889 = vmpackc.low %vm1857, %vm1857
        %vm1890 = vmpackc.low %vm1858, %vm1858
        %vm1891 = vmpackc.low %vm1859, %vm1859
        %vm1892 = vmpackc.low %vm1860, %vm1860
        %vm1893 = vmpackc.low %vm1861, %vm1861
        %vm1894 = vmpackc.low %vm1862, %vm1862
        %vm1895 = vmpackc.low %vm1863, %vm1863
        %vm1896 = vmpackc.low %vm1864, %vm1864
        %vm1897 = vmpackc.low %vm1865, %vm1865
        %vm1898 = vmpackc.low %vm1866, %vm1866
        %vm1899 = vmpackc.low %vm1867, %vm1867
        %vm1900 = vmpackc.low %vm1868, %vm1868
        %v1901 = vsel %vm1869, 65537, 0
        %v1902 = vsel %vm1870, 65537, 0
        %v1903 = vsel %vm1871, 65537, 0
        %v1904 = vsel %vm1872, 65537, 0
        %v1905 = vsel %vm1873, 65537, 0
        %v1906 = vsel %vm1874, 65537, 0
        %v1907 = vsel %vm1875, 65537, 0
        %v1908 = vsel %vm1876, 65537, 0
        %v1909 = vsel %vm1877, 65537, 0
        %v1910 = vsel %vm1878, 65537, 0
        %v1911 = vsel %vm1879, 65537, 0
        %v1912 = vsel %vm1880, 65537, 0
        %v1913 = vsel %vm1881, 65537, 0
        %v1914 = vsel %vm1882, 65537, 0
        %v1915 = vsel %vm1883, 65537, 0
        %v1916 = vsel %vm1884, 65537, 0
        %v1917 = vsel %vm1885, 65537, 0
        %v1918 = vsel %vm1886, 65537, 0
        %v1919 = vsel %vm1887, 65537, 0
        %v1920 = vsel %vm1888, 65537, 0
        %v1921 = vsel %vm1889, 65537, 0
        %v1922 = vsel %vm1890, 65537, 0
        %v1923 = vsel %vm1891, 65537, 0
        %v1924 = vsel %vm1892, 65537, 0
        %v1925 = vsel %vm1893, 65537, 0
        %v1926 = vsel %vm1894, 65537, 0
        %v1927 = vsel %vm1895, 65537, 0
        %v1928 = vsel %vm1896, 65537, 0
        %v1929 = vsel %vm1897, 65537, 0
        %v1930 = vsel %vm1898, 65537, 0
        %v1931 = vsel %vm1899, 65537, 0
        %v1932 = vsel %vm1900, 65537, 0
        %v1933 = vunpack.c.l.b16 %v1901
        %v1934 = vunpack.c.l.b16 %v1902
        %v1935 = vunpack.c.l.b16 %v1903
        %v1936 = vunpack.c.l.b16 %v1904
        %v1937 = vunpack.c.l.b16 %v1905
        %v1938 = vunpack.c.l.b16 %v1906
        %v1939 = vunpack.c.l.b16 %v1907
        %v1940 = vunpack.c.l.b16 %v1908
        %v1941 = vunpack.c.l.b16 %v1909
        %v1942 = vunpack.c.l.b16 %v1910
        %v1943 = vunpack.c.l.b16 %v1911
        %v1944 = vunpack.c.l.b16 %v1912
        %v1945 = vunpack.c.l.b16 %v1913
        %v1946 = vunpack.c.l.b16 %v1914
        %v1947 = vunpack.c.l.b16 %v1915
        %v1948 = vunpack.c.l.b16 %v1916
        %v1949 = vunpack.c.l.b16 %v1917
        %v1950 = vunpack.c.l.b16 %v1918
        %v1951 = vunpack.c.l.b16 %v1919
        %v1952 = vunpack.c.l.b16 %v1920
        %v1953 = vunpack.c.l.b16 %v1921
        %v1954 = vunpack.c.l.b16 %v1922
        %v1955 = vunpack.c.l.b16 %v1923
        %v1956 = vunpack.c.l.b16 %v1924
        %v1957 = vunpack.c.l.b16 %v1925
        %v1958 = vunpack.c.l.b16 %v1926
        %v1959 = vunpack.c.l.b16 %v1927
        %v1960 = vunpack.c.l.b16 %v1928
        %v1961 = vunpack.c.l.b16 %v1929
        %v1962 = vunpack.c.l.b16 %v1930
        %v1963 = vunpack.c.l.b16 %v1931
        %v1964 = vunpack.c.l.b16 %v1932
        %v1965 = vpack.c.b16 %v1934, %v1933
        %v1966 = vpack.c.b16 %v1936, %v1935
        %v1967 = vpack.c.b16 %v1938, %v1937
        %v1968 = vpack.c.b16 %v1940, %v1939
        %v1969 = vpack.c.b16 %v1942, %v1941
        %v1970 = vpack.c.b16 %v1944, %v1943
        %v1971 = vpack.c.b16 %v1946, %v1945
        %v1972 = vpack.c.b16 %v1948, %v1947
        %v1973 = vpack.c.b16 %v1950, %v1949
        %v1974 = vpack.c.b16 %v1952, %v1951
        %v1975 = vpack.c.b16 %v1954, %v1953
        %v1976 = vpack.c.b16 %v1956, %v1955
        %v1977 = vpack.c.b16 %v1958, %v1957
        %v1978 = vpack.c.b16 %v1960, %v1959
        %v1979 = vpack.c.b16 %v1962, %v1961
        %v1980 = vpack.c.b16 %v1964, %v1963
        %v1982 = vshrl.u32 %v1965, 16
        %v1984 = vrot.slane %v1982, 7
        %v1986 = vshrl.u32 %v1966, 16
        %v1988 = vrot.slane %v1986, 7
        %v1989 = vshll.u32 %v1966, 16
        %v1991 = vor.u32 %v1988, %v1989
        %v1992 = vsel %vm1523, %v1984, %v1991
        %v1994 = vshrl.u32 %v1967, 16
        %v1996 = vrot.slane %v1994, 7
        %v1997 = vshll.u32 %v1967, 16
        %v1999 = vor.u32 %v1996, %v1997
        %v2000 = vsel %vm1523, %v1988, %v1999
        %v2002 = vshrl.u32 %v1968, 16
        %v2004 = vrot.slane %v2002, 7
        %v2005 = vshll.u32 %v1968, 16
        %v2007 = vor.u32 %v2004, %v2005
        %v2008 = vsel %vm1523, %v1996, %v2007
        %v2010 = vshrl.u32 %v1969, 16
        %v2012 = vrot.slane %v2010, 7
        %v2013 = vshll.u32 %v1969, 16
        %v2015 = vor.u32 %v2012, %v2013
        %v2016 = vsel %vm1523, %v2004, %v2015
        %v2018 = vshrl.u32 %v1970, 16
        %v2020 = vrot.slane %v2018, 7
        %v2021 = vshll.u32 %v1970, 16
        %v2023 = vor.u32 %v2020, %v2021
        %v2024 = vsel %vm1523, %v2012, %v2023
        %v2026 = vshrl.u32 %v1971, 16
        %v2028 = vrot.slane %v2026, 7
        %v2029 = vshll.u32 %v1971, 16
        %v2031 = vor.u32 %v2028, %v2029
        %v2032 = vsel %vm1523, %v2020, %v2031
        %v2034 = vshrl.u32 %v1972, 16
        %v2036 = vrot.slane %v2034, 7
        %v2037 = vshll.u32 %v1972, 16
        %v2039 = vor.u32 %v2036, %v2037
        %v2040 = vsel %vm1523, %v2028, %v2039
        %v2042 = vshrl.u32 %v1973, 16
        %v2044 = vrot.slane %v2042, 7
        %v2045 = vshll.u32 %v1973, 16
        %v2047 = vor.u32 %v2044, %v2045
        %v2048 = vsel %vm1523, %v2036, %v2047
        %v2050 = vshrl.u32 %v1974, 16
        %v2052 = vrot.slane %v2050, 7
        %v2053 = vshll.u32 %v1974, 16
        %v2055 = vor.u32 %v2052, %v2053
        %v2056 = vsel %vm1523, %v2044, %v2055
        %v2058 = vshrl.u32 %v1975, 16
        %v2060 = vrot.slane %v2058, 7
        %v2061 = vshll.u32 %v1975, 16
        %v2063 = vor.u32 %v2060, %v2061
        %v2064 = vsel %vm1523, %v2052, %v2063
        %v2066 = vshrl.u32 %v1976, 16
        %v2068 = vrot.slane %v2066, 7
        %v2069 = vshll.u32 %v1976, 16
        %v2071 = vor.u32 %v2068, %v2069
        %v2072 = vsel %vm1523, %v2060, %v2071
        %v2074 = vshrl.u32 %v1977, 16
        %v2076 = vrot.slane %v2074, 7
        %v2077 = vshll.u32 %v1977, 16
        %v2079 = vor.u32 %v2076, %v2077
        %v2080 = vsel %vm1523, %v2068, %v2079
        %v2082 = vshrl.u32 %v1978, 16
        %v2084 = vrot.slane %v2082, 7
        %v2085 = vshll.u32 %v1978, 16
        %v2087 = vor.u32 %v2084, %v2085
        %v2088 = vsel %vm1523, %v2076, %v2087
        %v2090 = vshrl.u32 %v1979, 16
        %v2092 = vrot.slane %v2090, 7
        %v2093 = vshll.u32 %v1979, 16
        %v2095 = vor.u32 %v2092, %v2093
        %v2096 = vsel %vm1523, %v2084, %v2095
        %v2098 = vshrl.u32 %v1980, 16
        %v2100 = vrot.slane %v2098, 7
        %v2101 = vshll.u32 %v1980, 16
        %v2103 = vor.u32 %v2100, %v2101
        %v2104 = vsel %vm1523, %v2092, %v2103
        %v2105 = vunpack.c.l.b16 %v1992
        %v2106 = vunpack.c.h.b16 %v1992
        %v2107 = vunpack.c.l.b16 0
        %v2108 = vunpack.c.h.b16 0
        %vm2109 = vcmp.ne.s32.totalorder %v2105, %v2107
        %vm2110 = vcmp.ne.s32.totalorder %v2106, %v2108
        %vm2111 = vmpackc.low %vm2110, %vm2109
        %v2112 = vunpack.c.l.b16 %v2000
        %v2113 = vunpack.c.h.b16 %v2000
        %v2114 = vunpack.c.l.b16 0
        %v2115 = vunpack.c.h.b16 0
        %vm2116 = vcmp.ne.s32.totalorder %v2112, %v2114
        %vm2117 = vcmp.ne.s32.totalorder %v2113, %v2115
        %vm2118 = vmpackc.low %vm2117, %vm2116
        %v2119 = vunpack.c.l.b16 %v2008
        %v2120 = vunpack.c.h.b16 %v2008
        %v2121 = vunpack.c.l.b16 0
        %v2122 = vunpack.c.h.b16 0
        %vm2123 = vcmp.ne.s32.totalorder %v2119, %v2121
        %vm2124 = vcmp.ne.s32.totalorder %v2120, %v2122
        %vm2125 = vmpackc.low %vm2124, %vm2123
        %v2126 = vunpack.c.l.b16 %v2016
        %v2127 = vunpack.c.h.b16 %v2016
        %v2128 = vunpack.c.l.b16 0
        %v2129 = vunpack.c.h.b16 0
        %vm2130 = vcmp.ne.s32.totalorder %v2126, %v2128
        %vm2131 = vcmp.ne.s32.totalorder %v2127, %v2129
        %vm2132 = vmpackc.low %vm2131, %vm2130
        %v2133 = vunpack.c.l.b16 %v2024
        %v2134 = vunpack.c.h.b16 %v2024
        %v2135 = vunpack.c.l.b16 0
        %v2136 = vunpack.c.h.b16 0
        %vm2137 = vcmp.ne.s32.totalorder %v2133, %v2135
        %vm2138 = vcmp.ne.s32.totalorder %v2134, %v2136
        %vm2139 = vmpackc.low %vm2138, %vm2137
        %v2140 = vunpack.c.l.b16 %v2032
        %v2141 = vunpack.c.h.b16 %v2032
        %v2142 = vunpack.c.l.b16 0
        %v2143 = vunpack.c.h.b16 0
        %vm2144 = vcmp.ne.s32.totalorder %v2140, %v2142
        %vm2145 = vcmp.ne.s32.totalorder %v2141, %v2143
        %vm2146 = vmpackc.low %vm2145, %vm2144
        %v2147 = vunpack.c.l.b16 %v2040
        %v2148 = vunpack.c.h.b16 %v2040
        %v2149 = vunpack.c.l.b16 0
        %v2150 = vunpack.c.h.b16 0
        %vm2151 = vcmp.ne.s32.totalorder %v2147, %v2149
        %vm2152 = vcmp.ne.s32.totalorder %v2148, %v2150
        %vm2153 = vmpackc.low %vm2152, %vm2151
        %v2154 = vunpack.c.l.b16 %v2048
        %v2155 = vunpack.c.h.b16 %v2048
        %v2156 = vunpack.c.l.b16 0
        %v2157 = vunpack.c.h.b16 0
        %vm2158 = vcmp.ne.s32.totalorder %v2154, %v2156
        %vm2159 = vcmp.ne.s32.totalorder %v2155, %v2157
        %vm2160 = vmpackc.low %vm2159, %vm2158
        %v2161 = vunpack.c.l.b16 %v2056
        %v2162 = vunpack.c.h.b16 %v2056
        %v2163 = vunpack.c.l.b16 0
        %v2164 = vunpack.c.h.b16 0
        %vm2165 = vcmp.ne.s32.totalorder %v2161, %v2163
        %vm2166 = vcmp.ne.s32.totalorder %v2162, %v2164
        %vm2167 = vmpackc.low %vm2166, %vm2165
        %v2168 = vunpack.c.l.b16 %v2064
        %v2169 = vunpack.c.h.b16 %v2064
        %v2170 = vunpack.c.l.b16 0
        %v2171 = vunpack.c.h.b16 0
        %vm2172 = vcmp.ne.s32.totalorder %v2168, %v2170
        %vm2173 = vcmp.ne.s32.totalorder %v2169, %v2171
        %vm2174 = vmpackc.low %vm2173, %vm2172
        %v2175 = vunpack.c.l.b16 %v2072
        %v2176 = vunpack.c.h.b16 %v2072
        %v2177 = vunpack.c.l.b16 0
        %v2178 = vunpack.c.h.b16 0
        %vm2179 = vcmp.ne.s32.totalorder %v2175, %v2177
        %vm2180 = vcmp.ne.s32.totalorder %v2176, %v2178
        %vm2181 = vmpackc.low %vm2180, %vm2179
        %v2182 = vunpack.c.l.b16 %v2080
        %v2183 = vunpack.c.h.b16 %v2080
        %v2184 = vunpack.c.l.b16 0
        %v2185 = vunpack.c.h.b16 0
        %vm2186 = vcmp.ne.s32.totalorder %v2182, %v2184
        %vm2187 = vcmp.ne.s32.totalorder %v2183, %v2185
        %vm2188 = vmpackc.low %vm2187, %vm2186
        %v2189 = vunpack.c.l.b16 %v2088
        %v2190 = vunpack.c.h.b16 %v2088
        %v2191 = vunpack.c.l.b16 0
        %v2192 = vunpack.c.h.b16 0
        %vm2193 = vcmp.ne.s32.totalorder %v2189, %v2191
        %vm2194 = vcmp.ne.s32.totalorder %v2190, %v2192
        %vm2195 = vmpackc.low %vm2194, %vm2193
        %v2196 = vunpack.c.l.b16 %v2096
        %v2197 = vunpack.c.h.b16 %v2096
        %v2198 = vunpack.c.l.b16 0
        %v2199 = vunpack.c.h.b16 0
        %vm2200 = vcmp.ne.s32.totalorder %v2196, %v2198
        %vm2201 = vcmp.ne.s32.totalorder %v2197, %v2199
        %vm2202 = vmpackc.low %vm2201, %vm2200
        %v2203 = vunpack.c.l.b16 %v2104
        %v2204 = vunpack.c.h.b16 %v2104
        %v2205 = vunpack.c.l.b16 0
        %v2206 = vunpack.c.h.b16 0
        %vm2207 = vcmp.ne.s32.totalorder %v2203, %v2205
        %vm2208 = vcmp.ne.s32.totalorder %v2204, %v2206
        %vm2209 = vmpackc.low %vm2208, %vm2207
        %v2210 = vunpack.c.l.b16 %v2100
        %v2211 = vunpack.c.h.b16 %v2100
        %v2212 = vunpack.c.l.b16 0
        %v2213 = vunpack.c.h.b16 0
        %vm2214 = vcmp.ne.s32.totalorder %v2210, %v2212
        %vm2215 = vcmp.ne.s32.totalorder %v2211, %v2213
        %vm2216 = vmpackc.low %vm2215, %vm2214
        %v2217 = vsel %vm2111, %v912, 0
        %v2218 = vsel %vm2118, %v913, 0
        %v2219 = vsel %vm2125, %v914, 0
        %v2220 = vsel %vm2132, %v915, 0
        %v2221 = vsel %vm2139, %v916, 0
        %v2222 = vsel %vm2146, %v917, 0
        %v2223 = vsel %vm2153, %v918, 0
        %v2224 = vsel %vm2160, %v919, 0
        %v2225 = vsel %vm2167, %v920, 0
        %v2226 = vsel %vm2174, %v921, 0
        %v2227 = vsel %vm2181, %v922, 0
        %v2228 = vsel %vm2188, %v923, 0
        %v2229 = vsel %vm2195, %v924, 0
        %v2230 = vsel %vm2202, %v925, 0
        %v2231 = vsel %vm2209, %v926, 0
        %v2232 = vsel %vm2216, %v927, 0
        %s2233 = scalar_lea.vmem [#allocation5], 128
        %v2234 = vld [vmem:[%s2233] sm:$0xf]
        %v2235 = vld [vmem:[%s2233 + $0x4] sm:$0xf]
        %v2236 = vld [vmem:[%s2233 + $0x8] sm:$0xf]
        %v2237 = vld [vmem:[%s2233 + $0xc] sm:$0xf]
        %v2238 = vld [vmem:[%s2233 + $0x10] sm:$0xf]
        %v2239 = vld [vmem:[%s2233 + $0x14] sm:$0xf]
        %v2240 = vld [vmem:[%s2233 + $0x18] sm:$0xf]
        %v2241 = vld [vmem:[%s2233 + $0x1c] sm:$0xf]
        %v2242 = vld [vmem:[%s2233 + $0x20] sm:$0xf]
        %v2243 = vld [vmem:[%s2233 + $0x24] sm:$0xf]
        %v2244 = vld [vmem:[%s2233 + $0x28] sm:$0xf]
        %v2245 = vld [vmem:[%s2233 + $0x2c] sm:$0xf]
        %v2246 = vld [vmem:[%s2233 + $0x30] sm:$0xf]
        %v2247 = vld [vmem:[%s2233 + $0x34] sm:$0xf]
        %v2248 = vld [vmem:[%s2233 + $0x38] sm:$0xf]
        %v2249 = vld [vmem:[%s2233 + $0x3c] sm:$0xf]
        %v2250 = vrot.slane %v1528, 1
        %v2251 = vor.u32 %v1525, %v2250
        %v2253 = vshll.u32 %v2217, 16
        %v2255 = vrot.slane %v2253, 1
        %v2256 = vsel %vm1113, %v2251, %v2255
        %v2257 = vshrl.u32 %v2217, 16
        %v2259 = vor.u32 %v2257, %v2255
        %v2261 = vshll.u32 %v2218, 16
        %v2263 = vrot.slane %v2261, 1
        %v2264 = vsel %vm1113, %v2259, %v2263
        %v2265 = vshrl.u32 %v2218, 16
        %v2267 = vor.u32 %v2265, %v2263
        %v2269 = vshll.u32 %v2219, 16
        %v2271 = vrot.slane %v2269, 1
        %v2272 = vsel %vm1113, %v2267, %v2271
        %v2273 = vshrl.u32 %v2219, 16
        %v2275 = vor.u32 %v2273, %v2271
        %v2277 = vshll.u32 %v2220, 16
        %v2279 = vrot.slane %v2277, 1
        %v2280 = vsel %vm1113, %v2275, %v2279
        %v2281 = vshrl.u32 %v2220, 16
        %v2283 = vor.u32 %v2281, %v2279
        %v2285 = vshll.u32 %v2221, 16
        %v2287 = vrot.slane %v2285, 1
        %v2288 = vsel %vm1113, %v2283, %v2287
        %v2289 = vshrl.u32 %v2221, 16
        %v2291 = vor.u32 %v2289, %v2287
        %v2293 = vshll.u32 %v2222, 16
        %v2295 = vrot.slane %v2293, 1
        %v2296 = vsel %vm1113, %v2291, %v2295
        %v2297 = vshrl.u32 %v2222, 16
        %v2299 = vor.u32 %v2297, %v2295
        %v2301 = vshll.u32 %v2223, 16
        %v2303 = vrot.slane %v2301, 1
        %v2304 = vsel %vm1113, %v2299, %v2303
        %v2305 = vshrl.u32 %v2223, 16
        %v2307 = vor.u32 %v2305, %v2303
        %v2309 = vshll.u32 %v2224, 16
        %v2311 = vrot.slane %v2309, 1
        %v2312 = vsel %vm1113, %v2307, %v2311
        %v2313 = vshrl.u32 %v2224, 16
        %v2315 = vor.u32 %v2313, %v2311
        %v2317 = vshll.u32 %v2225, 16
        %v2319 = vrot.slane %v2317, 1
        %v2320 = vsel %vm1113, %v2315, %v2319
        %v2321 = vshrl.u32 %v2225, 16
        %v2323 = vor.u32 %v2321, %v2319
        %v2325 = vshll.u32 %v2226, 16
        %v2327 = vrot.slane %v2325, 1
        %v2328 = vsel %vm1113, %v2323, %v2327
        %v2329 = vshrl.u32 %v2226, 16
        %v2331 = vor.u32 %v2329, %v2327
        %v2333 = vshll.u32 %v2227, 16
        %v2335 = vrot.slane %v2333, 1
        %v2336 = vsel %vm1113, %v2331, %v2335
        %v2337 = vshrl.u32 %v2227, 16
        %v2339 = vor.u32 %v2337, %v2335
        %v2341 = vshll.u32 %v2228, 16
        %v2343 = vrot.slane %v2341, 1
        %v2344 = vsel %vm1113, %v2339, %v2343
        %v2345 = vshrl.u32 %v2228, 16
        %v2347 = vor.u32 %v2345, %v2343
        %v2349 = vshll.u32 %v2229, 16
        %v2351 = vrot.slane %v2349, 1
        %v2352 = vsel %vm1113, %v2347, %v2351
        %v2353 = vshrl.u32 %v2229, 16
        %v2355 = vor.u32 %v2353, %v2351
        %v2357 = vshll.u32 %v2230, 16
        %v2359 = vrot.slane %v2357, 1
        %v2360 = vsel %vm1113, %v2355, %v2359
        %v2361 = vshrl.u32 %v2230, 16
        %v2363 = vor.u32 %v2361, %v2359
        %v2365 = vshll.u32 %v2231, 16
        %v2367 = vrot.slane %v2365, 1
        %v2368 = vsel %vm1113, %v2363, %v2367
        %v2369 = vshrl.u32 %v2231, 16
        %v2371 = vor.u32 %v2369, %v2367
        %v2373 = vshll.u32 %v2232, 16
        %v2375 = vrot.slane %v2373, 1
        %v2376 = vsel %vm1113, %v2371, %v2375
        %v2409 = vunpack.c.l.b16 %v2234
        %v2410 = vunpack.c.l.b16 %v2235
        %v2411 = vunpack.c.l.b16 %v2236
        %v2412 = vunpack.c.l.b16 %v2237
        %v2413 = vunpack.c.l.b16 %v2238
        %v2414 = vunpack.c.l.b16 %v2239
        %v2415 = vunpack.c.l.b16 %v2240
        %v2416 = vunpack.c.l.b16 %v2241
        %v2417 = vunpack.c.l.b16 %v2242
        %v2418 = vunpack.c.l.b16 %v2243
        %v2419 = vunpack.c.l.b16 %v2244
        %v2420 = vunpack.c.l.b16 %v2245
        %v2421 = vunpack.c.l.b16 %v2246
        %v2422 = vunpack.c.l.b16 %v2247
        %v2423 = vunpack.c.l.b16 %v2248
        %v2424 = vunpack.c.l.b16 %v2249
        %v2425 = vpack.c.b16 %v2410, %v2409
        %v2426 = vpack.c.b16 %v2412, %v2411
        %v2427 = vpack.c.b16 %v2414, %v2413
        %v2428 = vpack.c.b16 %v2416, %v2415
        %v2429 = vpack.c.b16 %v2418, %v2417
        %v2430 = vpack.c.b16 %v2420, %v2419
        %v2431 = vpack.c.b16 %v2422, %v2421
        %v2432 = vpack.c.b16 %v2424, %v2423
        %2441 = vmatpush.bf16.msra.mxu0 %v2432
        %2442 = vmatpush.bf16.msra.mxu0 %v2431
        %2443 = vmatpush.bf16.msra.mxu0 %v2430
        %2444 = vmatpush.bf16.msra.mxu0 %v2429
        %2445 = vmatpush.bf16.msra.mxu0 %v2428
        %2446 = vmatpush.bf16.msra.mxu0 %v2427
        %2447 = vmatpush.bf16.msra.mxu0 %v2426
        %2448 = vmatpush.bf16.msra.mxu0 %v2425
        %2449 = vmatmul.bf16.gmra.mxu0 %v2256
        %v2450 = vpop.f32.mrf.mxu0
        %v2451 = vadd.f32 0.0, %v2450
        %v2452 = vpop.f32.mrf.mxu0
        %v2453 = vadd.f32 0.0, %v2452
        %2454 = vmatmul.bf16.gmra.mxu0 %v2264
        %v2455 = vpop.f32.mrf.mxu0
        %v2456 = vadd.f32 0.0, %v2455
        %v2457 = vpop.f32.mrf.mxu0
        %v2458 = vadd.f32 0.0, %v2457
        %2459 = vmatmul.bf16.gmra.mxu0 %v2272
        %v2460 = vpop.f32.mrf.mxu0
        %v2461 = vadd.f32 0.0, %v2460
        %v2462 = vpop.f32.mrf.mxu0
        %v2463 = vadd.f32 0.0, %v2462
        %2464 = vmatmul.bf16.gmra.mxu0 %v2280
        %v2465 = vpop.f32.mrf.mxu0
        %v2466 = vadd.f32 0.0, %v2465
        %v2467 = vpop.f32.mrf.mxu0
        %v2468 = vadd.f32 0.0, %v2467
        %2469 = vmatmul.bf16.gmra.mxu0 %v2288
        %v2470 = vpop.f32.mrf.mxu0
        %v2471 = vadd.f32 0.0, %v2470
        %v2472 = vpop.f32.mrf.mxu0
        %v2473 = vadd.f32 0.0, %v2472
        %2474 = vmatmul.bf16.gmra.mxu0 %v2296
        %v2475 = vpop.f32.mrf.mxu0
        %v2476 = vadd.f32 0.0, %v2475
        %v2477 = vpop.f32.mrf.mxu0
        %v2478 = vadd.f32 0.0, %v2477
        %2479 = vmatmul.bf16.gmra.mxu0 %v2304
        %v2480 = vpop.f32.mrf.mxu0
        %v2481 = vadd.f32 0.0, %v2480
        %v2482 = vpop.f32.mrf.mxu0
        %v2483 = vadd.f32 0.0, %v2482
        %2484 = vmatmul.bf16.gmra.mxu0 %v2312
        %v2485 = vpop.f32.mrf.mxu0
        %v2486 = vadd.f32 0.0, %v2485
        %v2487 = vpop.f32.mrf.mxu0
        %v2488 = vadd.f32 0.0, %v2487
        %2489 = vmatmul.bf16.gmra.mxu0 %v2320
        %v2490 = vpop.f32.mrf.mxu0
        %v2491 = vadd.f32 0.0, %v2490
        %v2492 = vpop.f32.mrf.mxu0
        %v2493 = vadd.f32 0.0, %v2492
        %2494 = vmatmul.bf16.gmra.mxu0 %v2328
        %v2495 = vpop.f32.mrf.mxu0
        %v2496 = vadd.f32 0.0, %v2495
        %v2497 = vpop.f32.mrf.mxu0
        %v2498 = vadd.f32 0.0, %v2497
        %2499 = vmatmul.bf16.gmra.mxu0 %v2336
        %v2500 = vpop.f32.mrf.mxu0
        %v2501 = vadd.f32 0.0, %v2500
        %v2502 = vpop.f32.mrf.mxu0
        %v2503 = vadd.f32 0.0, %v2502
        %2504 = vmatmul.bf16.gmra.mxu0 %v2344
        %v2505 = vpop.f32.mrf.mxu0
        %v2506 = vadd.f32 0.0, %v2505
        %v2507 = vpop.f32.mrf.mxu0
        %v2508 = vadd.f32 0.0, %v2507
        %2509 = vmatmul.bf16.gmra.mxu0 %v2352
        %v2510 = vpop.f32.mrf.mxu0
        %v2511 = vadd.f32 0.0, %v2510
        %v2512 = vpop.f32.mrf.mxu0
        %v2513 = vadd.f32 0.0, %v2512
        %2514 = vmatmul.bf16.gmra.mxu0 %v2360
        %v2515 = vpop.f32.mrf.mxu0
        %v2516 = vadd.f32 0.0, %v2515
        %v2517 = vpop.f32.mrf.mxu0
        %v2518 = vadd.f32 0.0, %v2517
        %2519 = vmatmul.bf16.gmra.mxu0 %v2368
        %v2520 = vpop.f32.mrf.mxu0
        %v2521 = vadd.f32 0.0, %v2520
        %v2522 = vpop.f32.mrf.mxu0
        %v2523 = vadd.f32 0.0, %v2522
        %2524 = vmatmul.bf16.gmra.mxu0 %v2376
        %v2525 = vpop.f32.mrf.mxu0
        %v2526 = vadd.f32 0.0, %v2525
        %v2527 = vpop.f32.mrf.mxu0
        %v2528 = vadd.f32 0.0, %v2527
        %2529 = vdwg.mxu0
        %v2530 = vadd.f32 %v1726, %v2451
        %v2531 = vadd.f32 %v1728, %v2453
        %v2532 = vadd.f32 %v1731, %v2456
        %v2533 = vadd.f32 %v1733, %v2458
        %v2534 = vadd.f32 %v1736, %v2461
        %v2535 = vadd.f32 %v1738, %v2463
        %v2536 = vadd.f32 %v1741, %v2466
        %v2537 = vadd.f32 %v1743, %v2468
        %v2538 = vadd.f32 %v1746, %v2471
        %v2539 = vadd.f32 %v1748, %v2473
        %v2540 = vadd.f32 %v1751, %v2476
        %v2541 = vadd.f32 %v1753, %v2478
        %v2542 = vadd.f32 %v1756, %v2481
        %v2543 = vadd.f32 %v1758, %v2483
        %v2544 = vadd.f32 %v1761, %v2486
        %v2545 = vadd.f32 %v1763, %v2488
        %v2546 = vadd.f32 %v1766, %v2491
        %v2547 = vadd.f32 %v1768, %v2493
        %v2548 = vadd.f32 %v1771, %v2496
        %v2549 = vadd.f32 %v1773, %v2498
        %v2550 = vadd.f32 %v1776, %v2501
        %v2551 = vadd.f32 %v1778, %v2503
        %v2552 = vadd.f32 %v1781, %v2506
        %v2553 = vadd.f32 %v1783, %v2508
        %v2554 = vadd.f32 %v1786, %v2511
        %v2555 = vadd.f32 %v1788, %v2513
        %v2556 = vadd.f32 %v1791, %v2516
        %v2557 = vadd.f32 %v1793, %v2518
        %v2558 = vadd.f32 %v1796, %v2521
        %v2559 = vadd.f32 %v1798, %v2523
        %v2560 = vadd.f32 %v1801, %v2526
        %v2561 = vadd.f32 %v1803, %v2528
        %vm2562 = vmpackc.low %vm976, %vm976
        %vm2563 = vmpackc.low %vm977, %vm977
        %v2564 = vsel %vm2562, 65537, 0
        %v2565 = vsel %vm2563, 65537, 0
        %v2566 = vunpack.c.l.b16 %v2564
        %v2567 = vunpack.c.l.b16 %v2565
        %v2568 = vpack.c.b16 %v2567, %v2566
        %v2570 = vshrl.u32 %v2568, 16
        %v2572 = vshll.u32 %v2568, 16
        %v2574 = vrot.slane %v2572, 1
        %v2575 = vor.u32 %v2570, %v2574
        %v2576 = vsel %vm1113, %v2575, %v1119
        %v2577 = vunpack.c.l.b16 %v2576
        %v2578 = vunpack.c.h.b16 %v2576
        %v2579 = vunpack.c.l.b16 0
        %v2580 = vunpack.c.h.b16 0
        %vm2581 = vcmp.ne.s32.totalorder %v2577, %v2579
        %vm2582 = vcmp.ne.s32.totalorder %v2578, %v2580
        %vm2583 = vmpackc.low %vm2582, %vm2581
        %v2584 = vsel %vm2583, %v912, 0
        %v2585 = vsel %vm1239, %v913, 0
        %v2586 = vsel %vm1246, %v914, 0
        %v2587 = vsel %vm1253, %v915, 0
        %v2588 = vsel %vm1260, %v916, 0
        %v2589 = vsel %vm1267, %v917, 0
        %v2590 = vsel %vm1274, %v918, 0
        %v2591 = vsel %vm1281, %v919, 0
        %v2592 = vsel %vm1288, %v920, 0
        %v2593 = vsel %vm1295, %v921, 0
        %v2594 = vsel %vm1302, %v922, 0
        %v2595 = vsel %vm1309, %v923, 0
        %v2596 = vsel %vm1316, %v924, 0
        %v2597 = vsel %vm1323, %v925, 0
        %v2598 = vsel %vm1330, %v926, 0
        %v2599 = vsel %vm1337, %v927, 0
        %s2600 = scalar_lea.vmem [#allocation5], 192
        %v2601 = vld [vmem:[%s2600] sm:$0xf]
        %v2602 = vld [vmem:[%s2600 + $0x4] sm:$0xf]
        %v2603 = vld [vmem:[%s2600 + $0x8] sm:$0xf]
        %v2604 = vld [vmem:[%s2600 + $0xc] sm:$0xf]
        %v2605 = vld [vmem:[%s2600 + $0x10] sm:$0xf]
        %v2606 = vld [vmem:[%s2600 + $0x14] sm:$0xf]
        %v2607 = vld [vmem:[%s2600 + $0x18] sm:$0xf]
        %v2608 = vld [vmem:[%s2600 + $0x1c] sm:$0xf]
        %v2609 = vld [vmem:[%s2600 + $0x20] sm:$0xf]
        %v2610 = vld [vmem:[%s2600 + $0x24] sm:$0xf]
        %v2611 = vld [vmem:[%s2600 + $0x28] sm:$0xf]
        %v2612 = vld [vmem:[%s2600 + $0x2c] sm:$0xf]
        %v2613 = vld [vmem:[%s2600 + $0x30] sm:$0xf]
        %v2614 = vld [vmem:[%s2600 + $0x34] sm:$0xf]
        %v2615 = vld [vmem:[%s2600 + $0x38] sm:$0xf]
        %v2616 = vld [vmem:[%s2600 + $0x3c] sm:$0xf]
        %v2618 = vshrl.u32 %v2584, 16
        %v2620 = vrot.slane %v2618, 7
        %v2621 = vshll.u32 %v2584, 16
        %v2623 = vor.u32 %v2620, %v2621
        %v2624 = vsel %vm1523, %v1527, %v2623
        %v2626 = vshrl.u32 %v2585, 16
        %v2628 = vrot.slane %v2626, 7
        %v2629 = vshll.u32 %v2585, 16
        %v2631 = vor.u32 %v2628, %v2629
        %v2632 = vsel %vm1523, %v2620, %v2631
        %v2634 = vshrl.u32 %v2586, 16
        %v2636 = vrot.slane %v2634, 7
        %v2637 = vshll.u32 %v2586, 16
        %v2639 = vor.u32 %v2636, %v2637
        %v2640 = vsel %vm1523, %v2628, %v2639
        %v2642 = vshrl.u32 %v2587, 16
        %v2644 = vrot.slane %v2642, 7
        %v2645 = vshll.u32 %v2587, 16
        %v2647 = vor.u32 %v2644, %v2645
        %v2648 = vsel %vm1523, %v2636, %v2647
        %v2650 = vshrl.u32 %v2588, 16
        %v2652 = vrot.slane %v2650, 7
        %v2653 = vshll.u32 %v2588, 16
        %v2655 = vor.u32 %v2652, %v2653
        %v2656 = vsel %vm1523, %v2644, %v2655
        %v2658 = vshrl.u32 %v2589, 16
        %v2660 = vrot.slane %v2658, 7
        %v2661 = vshll.u32 %v2589, 16
        %v2663 = vor.u32 %v2660, %v2661
        %v2664 = vsel %vm1523, %v2652, %v2663
        %v2666 = vshrl.u32 %v2590, 16
        %v2668 = vrot.slane %v2666, 7
        %v2669 = vshll.u32 %v2590, 16
        %v2671 = vor.u32 %v2668, %v2669
        %v2672 = vsel %vm1523, %v2660, %v2671
        %v2674 = vshrl.u32 %v2591, 16
        %v2676 = vrot.slane %v2674, 7
        %v2677 = vshll.u32 %v2591, 16
        %v2679 = vor.u32 %v2676, %v2677
        %v2680 = vsel %vm1523, %v2668, %v2679
        %v2682 = vshrl.u32 %v2592, 16
        %v2684 = vrot.slane %v2682, 7
        %v2685 = vshll.u32 %v2592, 16
        %v2687 = vor.u32 %v2684, %v2685
        %v2688 = vsel %vm1523, %v2676, %v2687
        %v2690 = vshrl.u32 %v2593, 16
        %v2692 = vrot.slane %v2690, 7
        %v2693 = vshll.u32 %v2593, 16
        %v2695 = vor.u32 %v2692, %v2693
        %v2696 = vsel %vm1523, %v2684, %v2695
        %v2698 = vshrl.u32 %v2594, 16
        %v2700 = vrot.slane %v2698, 7
        %v2701 = vshll.u32 %v2594, 16
        %v2703 = vor.u32 %v2700, %v2701
        %v2704 = vsel %vm1523, %v2692, %v2703
        %v2706 = vshrl.u32 %v2595, 16
        %v2708 = vrot.slane %v2706, 7
        %v2709 = vshll.u32 %v2595, 16
        %v2711 = vor.u32 %v2708, %v2709
        %v2712 = vsel %vm1523, %v2700, %v2711
        %v2714 = vshrl.u32 %v2596, 16
        %v2716 = vrot.slane %v2714, 7
        %v2717 = vshll.u32 %v2596, 16
        %v2719 = vor.u32 %v2716, %v2717
        %v2720 = vsel %vm1523, %v2708, %v2719
        %v2722 = vshrl.u32 %v2597, 16
        %v2724 = vrot.slane %v2722, 7
        %v2725 = vshll.u32 %v2597, 16
        %v2727 = vor.u32 %v2724, %v2725
        %v2728 = vsel %vm1523, %v2716, %v2727
        %v2730 = vshrl.u32 %v2598, 16
        %v2732 = vrot.slane %v2730, 7
        %v2733 = vshll.u32 %v2598, 16
        %v2735 = vor.u32 %v2732, %v2733
        %v2736 = vsel %vm1523, %v2724, %v2735
        %v2738 = vshrl.u32 %v2599, 16
        %v2740 = vrot.slane %v2738, 7
        %v2741 = vshll.u32 %v2599, 16
        %v2743 = vor.u32 %v2740, %v2741
        %v2744 = vsel %vm1523, %v2732, %v2743
        %v2777 = vunpack.c.l.b16 %v2601
        %v2778 = vunpack.c.l.b16 %v2602
        %v2779 = vunpack.c.l.b16 %v2603
        %v2780 = vunpack.c.l.b16 %v2604
        %v2781 = vunpack.c.l.b16 %v2605
        %v2782 = vunpack.c.l.b16 %v2606
        %v2783 = vunpack.c.l.b16 %v2607
        %v2784 = vunpack.c.l.b16 %v2608
        %v2785 = vunpack.c.l.b16 %v2609
        %v2786 = vunpack.c.l.b16 %v2610
        %v2787 = vunpack.c.l.b16 %v2611
        %v2788 = vunpack.c.l.b16 %v2612
        %v2789 = vunpack.c.l.b16 %v2613
        %v2790 = vunpack.c.l.b16 %v2614
        %v2791 = vunpack.c.l.b16 %v2615
        %v2792 = vunpack.c.l.b16 %v2616
        %v2793 = vpack.c.b16 %v2778, %v2777
        %v2794 = vpack.c.b16 %v2780, %v2779
        %v2795 = vpack.c.b16 %v2782, %v2781
        %v2796 = vpack.c.b16 %v2784, %v2783
        %v2797 = vpack.c.b16 %v2786, %v2785
        %v2798 = vpack.c.b16 %v2788, %v2787
        %v2799 = vpack.c.b16 %v2790, %v2789
        %v2800 = vpack.c.b16 %v2792, %v2791
        %2809 = vmatpush.bf16.msra.mxu0 %v2800
        %2810 = vmatpush.bf16.msra.mxu0 %v2799
        %2811 = vmatpush.bf16.msra.mxu0 %v2798
        %2812 = vmatpush.bf16.msra.mxu0 %v2797
        %2813 = vmatpush.bf16.msra.mxu0 %v2796
        %2814 = vmatpush.bf16.msra.mxu0 %v2795
        %2815 = vmatpush.bf16.msra.mxu0 %v2794
        %2816 = vmatpush.bf16.msra.mxu0 %v2793
        %2817 = vmatmul.bf16.gmra.mxu0 %v2624
        %v2818 = vpop.f32.mrf.mxu0
        %v2819 = vadd.f32 0.0, %v2818
        %v2820 = vpop.f32.mrf.mxu0
        %v2821 = vadd.f32 0.0, %v2820
        %2822 = vmatmul.bf16.gmra.mxu0 %v2632
        %v2823 = vpop.f32.mrf.mxu0
        %v2824 = vadd.f32 0.0, %v2823
        %v2825 = vpop.f32.mrf.mxu0
        %v2826 = vadd.f32 0.0, %v2825
        %2827 = vmatmul.bf16.gmra.mxu0 %v2640
        %v2828 = vpop.f32.mrf.mxu0
        %v2829 = vadd.f32 0.0, %v2828
        %v2830 = vpop.f32.mrf.mxu0
        %v2831 = vadd.f32 0.0, %v2830
        %2832 = vmatmul.bf16.gmra.mxu0 %v2648
        %v2833 = vpop.f32.mrf.mxu0
        %v2834 = vadd.f32 0.0, %v2833
        %v2835 = vpop.f32.mrf.mxu0
        %v2836 = vadd.f32 0.0, %v2835
        %2837 = vmatmul.bf16.gmra.mxu0 %v2656
        %v2838 = vpop.f32.mrf.mxu0
        %v2839 = vadd.f32 0.0, %v2838
        %v2840 = vpop.f32.mrf.mxu0
        %v2841 = vadd.f32 0.0, %v2840
        %2842 = vmatmul.bf16.gmra.mxu0 %v2664
        %v2843 = vpop.f32.mrf.mxu0
        %v2844 = vadd.f32 0.0, %v2843
        %v2845 = vpop.f32.mrf.mxu0
        %v2846 = vadd.f32 0.0, %v2845
        %2847 = vmatmul.bf16.gmra.mxu0 %v2672
        %v2848 = vpop.f32.mrf.mxu0
        %v2849 = vadd.f32 0.0, %v2848
        %v2850 = vpop.f32.mrf.mxu0
        %v2851 = vadd.f32 0.0, %v2850
        %2852 = vmatmul.bf16.gmra.mxu0 %v2680
        %v2853 = vpop.f32.mrf.mxu0
        %v2854 = vadd.f32 0.0, %v2853
        %v2855 = vpop.f32.mrf.mxu0
        %v2856 = vadd.f32 0.0, %v2855
        %2857 = vmatmul.bf16.gmra.mxu0 %v2688
        %v2858 = vpop.f32.mrf.mxu0
        %v2859 = vadd.f32 0.0, %v2858
        %v2860 = vpop.f32.mrf.mxu0
        %v2861 = vadd.f32 0.0, %v2860
        %2862 = vmatmul.bf16.gmra.mxu0 %v2696
        %v2863 = vpop.f32.mrf.mxu0
        %v2864 = vadd.f32 0.0, %v2863
        %v2865 = vpop.f32.mrf.mxu0
        %v2866 = vadd.f32 0.0, %v2865
        %2867 = vmatmul.bf16.gmra.mxu0 %v2704
        %v2868 = vpop.f32.mrf.mxu0
        %v2869 = vadd.f32 0.0, %v2868
        %v2870 = vpop.f32.mrf.mxu0
        %v2871 = vadd.f32 0.0, %v2870
        %2872 = vmatmul.bf16.gmra.mxu0 %v2712
        %v2873 = vpop.f32.mrf.mxu0
        %v2874 = vadd.f32 0.0, %v2873
        %v2875 = vpop.f32.mrf.mxu0
        %v2876 = vadd.f32 0.0, %v2875
        %2877 = vmatmul.bf16.gmra.mxu0 %v2720
        %v2878 = vpop.f32.mrf.mxu0
        %v2879 = vadd.f32 0.0, %v2878
        %v2880 = vpop.f32.mrf.mxu0
        %v2881 = vadd.f32 0.0, %v2880
        %2882 = vmatmul.bf16.gmra.mxu0 %v2728
        %v2883 = vpop.f32.mrf.mxu0
        %v2884 = vadd.f32 0.0, %v2883
        %v2885 = vpop.f32.mrf.mxu0
        %v2886 = vadd.f32 0.0, %v2885
        %2887 = vmatmul.bf16.gmra.mxu0 %v2736
        %v2888 = vpop.f32.mrf.mxu0
        %v2889 = vadd.f32 0.0, %v2888
        %v2890 = vpop.f32.mrf.mxu0
        %v2891 = vadd.f32 0.0, %v2890
        %2892 = vmatmul.bf16.gmra.mxu0 %v2744
        %v2893 = vpop.f32.mrf.mxu0
        %v2894 = vadd.f32 0.0, %v2893
        %v2895 = vpop.f32.mrf.mxu0
        %v2896 = vadd.f32 0.0, %v2895
        %2897 = vdwg.mxu0
        %v2898 = vadd.f32 %v2530, %v2819
        %v2899 = vadd.f32 %v2531, %v2821
        %v2900 = vadd.f32 %v2532, %v2824
        %v2901 = vadd.f32 %v2533, %v2826
        %v2902 = vadd.f32 %v2534, %v2829
        %v2903 = vadd.f32 %v2535, %v2831
        %v2904 = vadd.f32 %v2536, %v2834
        %v2905 = vadd.f32 %v2537, %v2836
        %v2906 = vadd.f32 %v2538, %v2839
        %v2907 = vadd.f32 %v2539, %v2841
        %v2908 = vadd.f32 %v2540, %v2844
        %v2909 = vadd.f32 %v2541, %v2846
        %v2910 = vadd.f32 %v2542, %v2849
        %v2911 = vadd.f32 %v2543, %v2851
        %v2912 = vadd.f32 %v2544, %v2854
        %v2913 = vadd.f32 %v2545, %v2856
        %v2914 = vadd.f32 %v2546, %v2859
        %v2915 = vadd.f32 %v2547, %v2861
        %v2916 = vadd.f32 %v2548, %v2864
        %v2917 = vadd.f32 %v2549, %v2866
        %v2918 = vadd.f32 %v2550, %v2869
        %v2919 = vadd.f32 %v2551, %v2871
        %v2920 = vadd.f32 %v2552, %v2874
        %v2921 = vadd.f32 %v2553, %v2876
        %v2922 = vadd.f32 %v2554, %v2879
        %v2923 = vadd.f32 %v2555, %v2881
        %v2924 = vadd.f32 %v2556, %v2884
        %v2925 = vadd.f32 %v2557, %v2886
        %v2926 = vadd.f32 %v2558, %v2889
        %v2927 = vadd.f32 %v2559, %v2891
        %v2928 = vadd.f32 %v2560, %v2894
        %v2929 = vadd.f32 %v2561, %v2896
        %s2930 = scalar_lea.vmem [#allocation5], 256
        %v2931 = vld [vmem:[%s2930] sm:$0xf]
        %v2932 = vld [vmem:[%s2930 + $0x4] sm:$0xf]
        %v2933 = vld [vmem:[%s2930 + $0x8] sm:$0xf]
        %v2934 = vld [vmem:[%s2930 + $0xc] sm:$0xf]
        %v2935 = vld [vmem:[%s2930 + $0x10] sm:$0xf]
        %v2936 = vld [vmem:[%s2930 + $0x14] sm:$0xf]
        %v2937 = vld [vmem:[%s2930 + $0x18] sm:$0xf]
        %v2938 = vld [vmem:[%s2930 + $0x1c] sm:$0xf]
        %v2939 = vld [vmem:[%s2930 + $0x20] sm:$0xf]
        %v2940 = vld [vmem:[%s2930 + $0x24] sm:$0xf]
        %v2941 = vld [vmem:[%s2930 + $0x28] sm:$0xf]
        %v2942 = vld [vmem:[%s2930 + $0x2c] sm:$0xf]
        %v2943 = vld [vmem:[%s2930 + $0x30] sm:$0xf]
        %v2944 = vld [vmem:[%s2930 + $0x34] sm:$0xf]
        %v2945 = vld [vmem:[%s2930 + $0x38] sm:$0xf]
        %v2946 = vld [vmem:[%s2930 + $0x3c] sm:$0xf]
        %v2963 = vunpack.c.l.b16 %v2931
        %v2964 = vunpack.c.l.b16 %v2932
        %v2965 = vunpack.c.l.b16 %v2933
        %v2966 = vunpack.c.l.b16 %v2934
        %v2967 = vunpack.c.l.b16 %v2935
        %v2968 = vunpack.c.l.b16 %v2936
        %v2969 = vunpack.c.l.b16 %v2937
        %v2970 = vunpack.c.l.b16 %v2938
        %v2971 = vunpack.c.l.b16 %v2939
        %v2972 = vunpack.c.l.b16 %v2940
        %v2973 = vunpack.c.l.b16 %v2941
        %v2974 = vunpack.c.l.b16 %v2942
        %v2975 = vunpack.c.l.b16 %v2943
        %v2976 = vunpack.c.l.b16 %v2944
        %v2977 = vunpack.c.l.b16 %v2945
        %v2978 = vunpack.c.l.b16 %v2946
        %v2979 = vpack.c.b16 %v2964, %v2963
        %v2980 = vpack.c.b16 %v2966, %v2965
        %v2981 = vpack.c.b16 %v2968, %v2967
        %v2982 = vpack.c.b16 %v2970, %v2969
        %v2983 = vpack.c.b16 %v2972, %v2971
        %v2984 = vpack.c.b16 %v2974, %v2973
        %v2985 = vpack.c.b16 %v2976, %v2975
        %v2986 = vpack.c.b16 %v2978, %v2977
        %2995 = vmatpush.bf16.msra.mxu0 %v2986
        %2996 = vmatpush.bf16.msra.mxu0 %v2985
        %2997 = vmatpush.bf16.msra.mxu0 %v2984
        %2998 = vmatpush.bf16.msra.mxu0 %v2983
        %2999 = vmatpush.bf16.msra.mxu0 %v2982
        %3000 = vmatpush.bf16.msra.mxu0 %v2981
        %3001 = vmatpush.bf16.msra.mxu0 %v2980
        %3002 = vmatpush.bf16.msra.mxu0 %v2979
        %3003 = vmatmul.bf16.gmra.mxu0 %v912
        %v3004 = vpop.f32.mrf.mxu0
        %v3005 = vadd.f32 0.0, %v3004
        %v3006 = vpop.f32.mrf.mxu0
        %v3007 = vadd.f32 0.0, %v3006
        %3008 = vmatmul.bf16.gmra.mxu0 %v913
        %v3009 = vpop.f32.mrf.mxu0
        %v3010 = vadd.f32 0.0, %v3009
        %v3011 = vpop.f32.mrf.mxu0
        %v3012 = vadd.f32 0.0, %v3011
        %3013 = vmatmul.bf16.gmra.mxu0 %v914
        %v3014 = vpop.f32.mrf.mxu0
        %v3015 = vadd.f32 0.0, %v3014
        %v3016 = vpop.f32.mrf.mxu0
        %v3017 = vadd.f32 0.0, %v3016
        %3018 = vmatmul.bf16.gmra.mxu0 %v915
        %v3019 = vpop.f32.mrf.mxu0
        %v3020 = vadd.f32 0.0, %v3019
        %v3021 = vpop.f32.mrf.mxu0
        %v3022 = vadd.f32 0.0, %v3021
        %3023 = vmatmul.bf16.gmra.mxu0 %v916
        %v3024 = vpop.f32.mrf.mxu0
        %v3025 = vadd.f32 0.0, %v3024
        %v3026 = vpop.f32.mrf.mxu0
        %v3027 = vadd.f32 0.0, %v3026
        %3028 = vmatmul.bf16.gmra.mxu0 %v917
        %v3029 = vpop.f32.mrf.mxu0
        %v3030 = vadd.f32 0.0, %v3029
        %v3031 = vpop.f32.mrf.mxu0
        %v3032 = vadd.f32 0.0, %v3031
        %3033 = vmatmul.bf16.gmra.mxu0 %v918
        %v3034 = vpop.f32.mrf.mxu0
        %v3035 = vadd.f32 0.0, %v3034
        %v3036 = vpop.f32.mrf.mxu0
        %v3037 = vadd.f32 0.0, %v3036
        %3038 = vmatmul.bf16.gmra.mxu0 %v919
        %v3039 = vpop.f32.mrf.mxu0
        %v3040 = vadd.f32 0.0, %v3039
        %v3041 = vpop.f32.mrf.mxu0
        %v3042 = vadd.f32 0.0, %v3041
        %3043 = vmatmul.bf16.gmra.mxu0 %v920
        %v3044 = vpop.f32.mrf.mxu0
        %v3045 = vadd.f32 0.0, %v3044
        %v3046 = vpop.f32.mrf.mxu0
        %v3047 = vadd.f32 0.0, %v3046
        %3048 = vmatmul.bf16.gmra.mxu0 %v921
        %v3049 = vpop.f32.mrf.mxu0
        %v3050 = vadd.f32 0.0, %v3049
        %v3051 = vpop.f32.mrf.mxu0
        %v3052 = vadd.f32 0.0, %v3051
        %3053 = vmatmul.bf16.gmra.mxu0 %v922
        %v3054 = vpop.f32.mrf.mxu0
        %v3055 = vadd.f32 0.0, %v3054
        %v3056 = vpop.f32.mrf.mxu0
        %v3057 = vadd.f32 0.0, %v3056
        %3058 = vmatmul.bf16.gmra.mxu0 %v923
        %v3059 = vpop.f32.mrf.mxu0
        %v3060 = vadd.f32 0.0, %v3059
        %v3061 = vpop.f32.mrf.mxu0
        %v3062 = vadd.f32 0.0, %v3061
        %3063 = vmatmul.bf16.gmra.mxu0 %v924
        %v3064 = vpop.f32.mrf.mxu0
        %v3065 = vadd.f32 0.0, %v3064
        %v3066 = vpop.f32.mrf.mxu0
        %v3067 = vadd.f32 0.0, %v3066
        %3068 = vmatmul.bf16.gmra.mxu0 %v925
        %v3069 = vpop.f32.mrf.mxu0
        %v3070 = vadd.f32 0.0, %v3069
        %v3071 = vpop.f32.mrf.mxu0
        %v3072 = vadd.f32 0.0, %v3071
        %3073 = vmatmul.bf16.gmra.mxu0 %v926
        %v3074 = vpop.f32.mrf.mxu0
        %v3075 = vadd.f32 0.0, %v3074
        %v3076 = vpop.f32.mrf.mxu0
        %v3077 = vadd.f32 0.0, %v3076
        %3078 = vmatmul.bf16.gmra.mxu0 %v927
        %v3079 = vpop.f32.mrf.mxu0
        %v3080 = vadd.f32 0.0, %v3079
        %v3081 = vpop.f32.mrf.mxu0
        %v3082 = vadd.f32 0.0, %v3081
        %3083 = vdwg.mxu0
        %v3084 = vadd.f32 %v2898, %v3005
        %v3085 = vadd.f32 %v2899, %v3007
        %v3086 = vadd.f32 %v2900, %v3010
        %v3087 = vadd.f32 %v2901, %v3012
        %v3088 = vadd.f32 %v2902, %v3015
        %v3089 = vadd.f32 %v2903, %v3017
        %v3090 = vadd.f32 %v2904, %v3020
        %v3091 = vadd.f32 %v2905, %v3022
        %v3092 = vadd.f32 %v2906, %v3025
        %v3093 = vadd.f32 %v2907, %v3027
        %v3094 = vadd.f32 %v2908, %v3030
        %v3095 = vadd.f32 %v2909, %v3032
        %v3096 = vadd.f32 %v2910, %v3035
        %v3097 = vadd.f32 %v2911, %v3037
        %v3098 = vadd.f32 %v2912, %v3040
        %v3099 = vadd.f32 %v2913, %v3042
        %v3100 = vadd.f32 %v2914, %v3045
        %v3101 = vadd.f32 %v2915, %v3047
        %v3102 = vadd.f32 %v2916, %v3050
        %v3103 = vadd.f32 %v2917, %v3052
        %v3104 = vadd.f32 %v2918, %v3055
        %v3105 = vadd.f32 %v2919, %v3057
        %v3106 = vadd.f32 %v2920, %v3060
        %v3107 = vadd.f32 %v2921, %v3062
        %v3108 = vadd.f32 %v2922, %v3065
        %v3109 = vadd.f32 %v2923, %v3067
        %v3110 = vadd.f32 %v2924, %v3070
        %v3111 = vadd.f32 %v2925, %v3072
        %v3112 = vadd.f32 %v2926, %v3075
        %v3113 = vadd.f32 %v2927, %v3077
        %v3114 = vadd.f32 %v2928, %v3080
        %v3115 = vadd.f32 %v2929, %v3082
        %v3116 = vshll.u32 %v1965, 16
        %v3118 = vor.u32 %v1984, %v3116
        %v3119 = vunpack.c.l.b16 %v3118
        %v3120 = vunpack.c.h.b16 %v3118
        %v3121 = vunpack.c.l.b16 0
        %v3122 = vunpack.c.h.b16 0
        %vm3123 = vcmp.ne.s32.totalorder %v3119, %v3121
        %vm3124 = vcmp.ne.s32.totalorder %v3120, %v3122
        %vm3125 = vmpackc.low %vm3124, %vm3123
        %v3126 = vsel %vm3125, %v912, 0
        %v3127 = vsel %vm2111, %v913, 0
        %v3128 = vsel %vm2118, %v914, 0
        %v3129 = vsel %vm2125, %v915, 0
        %v3130 = vsel %vm2132, %v916, 0
        %v3131 = vsel %vm2139, %v917, 0
        %v3132 = vsel %vm2146, %v918, 0
        %v3133 = vsel %vm2153, %v919, 0
        %v3134 = vsel %vm2160, %v920, 0
        %v3135 = vsel %vm2167, %v921, 0
        %v3136 = vsel %vm2174, %v922, 0
        %v3137 = vsel %vm2181, %v923, 0
        %v3138 = vsel %vm2188, %v924, 0
        %v3139 = vsel %vm2195, %v925, 0
        %v3140 = vsel %vm2202, %v926, 0
        %v3141 = vsel %vm2209, %v927, 0
        %s3142 = scalar_lea.vmem [#allocation5], 320
        %v3143 = vld [vmem:[%s3142] sm:$0xf]
        %v3144 = vld [vmem:[%s3142 + $0x4] sm:$0xf]
        %v3145 = vld [vmem:[%s3142 + $0x8] sm:$0xf]
        %v3146 = vld [vmem:[%s3142 + $0xc] sm:$0xf]
        %v3147 = vld [vmem:[%s3142 + $0x10] sm:$0xf]
        %v3148 = vld [vmem:[%s3142 + $0x14] sm:$0xf]
        %v3149 = vld [vmem:[%s3142 + $0x18] sm:$0xf]
        %v3150 = vld [vmem:[%s3142 + $0x1c] sm:$0xf]
        %v3151 = vld [vmem:[%s3142 + $0x20] sm:$0xf]
        %v3152 = vld [vmem:[%s3142 + $0x24] sm:$0xf]
        %v3153 = vld [vmem:[%s3142 + $0x28] sm:$0xf]
        %v3154 = vld [vmem:[%s3142 + $0x2c] sm:$0xf]
        %v3155 = vld [vmem:[%s3142 + $0x30] sm:$0xf]
        %v3156 = vld [vmem:[%s3142 + $0x34] sm:$0xf]
        %v3157 = vld [vmem:[%s3142 + $0x38] sm:$0xf]
        %v3158 = vld [vmem:[%s3142 + $0x3c] sm:$0xf]
        %v3160 = vshrl.u32 %v3126, 16
        %v3162 = vshll.u32 %v3126, 16
        %v3164 = vrot.slane %v3162, 1
        %v3165 = vor.u32 %v3160, %v3164
        %v3167 = vshll.u32 %v3127, 16
        %v3169 = vrot.slane %v3167, 1
        %v3170 = vsel %vm1113, %v3165, %v3169
        %v3171 = vshrl.u32 %v3127, 16
        %v3173 = vor.u32 %v3171, %v3169
        %v3175 = vshll.u32 %v3128, 16
        %v3177 = vrot.slane %v3175, 1
        %v3178 = vsel %vm1113, %v3173, %v3177
        %v3179 = vshrl.u32 %v3128, 16
        %v3181 = vor.u32 %v3179, %v3177
        %v3183 = vshll.u32 %v3129, 16
        %v3185 = vrot.slane %v3183, 1
        %v3186 = vsel %vm1113, %v3181, %v3185
        %v3187 = vshrl.u32 %v3129, 16
        %v3189 = vor.u32 %v3187, %v3185
        %v3191 = vshll.u32 %v3130, 16
        %v3193 = vrot.slane %v3191, 1
        %v3194 = vsel %vm1113, %v3189, %v3193
        %v3195 = vshrl.u32 %v3130, 16
        %v3197 = vor.u32 %v3195, %v3193
        %v3199 = vshll.u32 %v3131, 16
        %v3201 = vrot.slane %v3199, 1
        %v3202 = vsel %vm1113, %v3197, %v3201
        %v3203 = vshrl.u32 %v3131, 16
        %v3205 = vor.u32 %v3203, %v3201
        %v3207 = vshll.u32 %v3132, 16
        %v3209 = vrot.slane %v3207, 1
        %v3210 = vsel %vm1113, %v3205, %v3209
        %v3211 = vshrl.u32 %v3132, 16
        %v3213 = vor.u32 %v3211, %v3209
        %v3215 = vshll.u32 %v3133, 16
        %v3217 = vrot.slane %v3215, 1
        %v3218 = vsel %vm1113, %v3213, %v3217
        %v3219 = vshrl.u32 %v3133, 16
        %v3221 = vor.u32 %v3219, %v3217
        %v3223 = vshll.u32 %v3134, 16
        %v3225 = vrot.slane %v3223, 1
        %v3226 = vsel %vm1113, %v3221, %v3225
        %v3227 = vshrl.u32 %v3134, 16
        %v3229 = vor.u32 %v3227, %v3225
        %v3231 = vshll.u32 %v3135, 16
        %v3233 = vrot.slane %v3231, 1
        %v3234 = vsel %vm1113, %v3229, %v3233
        %v3235 = vshrl.u32 %v3135, 16
        %v3237 = vor.u32 %v3235, %v3233
        %v3239 = vshll.u32 %v3136, 16
        %v3241 = vrot.slane %v3239, 1
        %v3242 = vsel %vm1113, %v3237, %v3241
        %v3243 = vshrl.u32 %v3136, 16
        %v3245 = vor.u32 %v3243, %v3241
        %v3247 = vshll.u32 %v3137, 16
        %v3249 = vrot.slane %v3247, 1
        %v3250 = vsel %vm1113, %v3245, %v3249
        %v3251 = vshrl.u32 %v3137, 16
        %v3253 = vor.u32 %v3251, %v3249
        %v3255 = vshll.u32 %v3138, 16
        %v3257 = vrot.slane %v3255, 1
        %v3258 = vsel %vm1113, %v3253, %v3257
        %v3259 = vshrl.u32 %v3138, 16
        %v3261 = vor.u32 %v3259, %v3257
        %v3263 = vshll.u32 %v3139, 16
        %v3265 = vrot.slane %v3263, 1
        %v3266 = vsel %vm1113, %v3261, %v3265
        %v3267 = vshrl.u32 %v3139, 16
        %v3269 = vor.u32 %v3267, %v3265
        %v3271 = vshll.u32 %v3140, 16
        %v3273 = vrot.slane %v3271, 1
        %v3274 = vsel %vm1113, %v3269, %v3273
        %v3275 = vshrl.u32 %v3140, 16
        %v3277 = vor.u32 %v3275, %v3273
        %v3279 = vshll.u32 %v3141, 16
        %v3281 = vrot.slane %v3279, 1
        %v3282 = vsel %vm1113, %v3277, %v3281
        %v3283 = vshrl.u32 %v3141, 16
        %v3285 = vor.u32 %v3283, %v3281
        %v3286 = vsel %vm1113, %v3285, %v2250
        %v3319 = vunpack.c.l.b16 %v3143
        %v3320 = vunpack.c.l.b16 %v3144
        %v3321 = vunpack.c.l.b16 %v3145
        %v3322 = vunpack.c.l.b16 %v3146
        %v3323 = vunpack.c.l.b16 %v3147
        %v3324 = vunpack.c.l.b16 %v3148
        %v3325 = vunpack.c.l.b16 %v3149
        %v3326 = vunpack.c.l.b16 %v3150
        %v3327 = vunpack.c.l.b16 %v3151
        %v3328 = vunpack.c.l.b16 %v3152
        %v3329 = vunpack.c.l.b16 %v3153
        %v3330 = vunpack.c.l.b16 %v3154
        %v3331 = vunpack.c.l.b16 %v3155
        %v3332 = vunpack.c.l.b16 %v3156
        %v3333 = vunpack.c.l.b16 %v3157
        %v3334 = vunpack.c.l.b16 %v3158
        %v3335 = vpack.c.b16 %v3320, %v3319
        %v3336 = vpack.c.b16 %v3322, %v3321
        %v3337 = vpack.c.b16 %v3324, %v3323
        %v3338 = vpack.c.b16 %v3326, %v3325
        %v3339 = vpack.c.b16 %v3328, %v3327
        %v3340 = vpack.c.b16 %v3330, %v3329
        %v3341 = vpack.c.b16 %v3332, %v3331
        %v3342 = vpack.c.b16 %v3334, %v3333
        %3351 = vmatpush.bf16.msra.mxu0 %v3342
        %3352 = vmatpush.bf16.msra.mxu0 %v3341
        %3353 = vmatpush.bf16.msra.mxu0 %v3340
        %3354 = vmatpush.bf16.msra.mxu0 %v3339
        %3355 = vmatpush.bf16.msra.mxu0 %v3338
        %3356 = vmatpush.bf16.msra.mxu0 %v3337
        %3357 = vmatpush.bf16.msra.mxu0 %v3336
        %3358 = vmatpush.bf16.msra.mxu0 %v3335
        %3359 = vmatmul.bf16.gmra.mxu0 %v3170
        %v3360 = vpop.f32.mrf.mxu0
        %v3361 = vadd.f32 0.0, %v3360
        %v3362 = vpop.f32.mrf.mxu0
        %v3363 = vadd.f32 0.0, %v3362
        %3364 = vmatmul.bf16.gmra.mxu0 %v3178
        %v3365 = vpop.f32.mrf.mxu0
        %v3366 = vadd.f32 0.0, %v3365
        %v3367 = vpop.f32.mrf.mxu0
        %v3368 = vadd.f32 0.0, %v3367
        %3369 = vmatmul.bf16.gmra.mxu0 %v3186
        %v3370 = vpop.f32.mrf.mxu0
        %v3371 = vadd.f32 0.0, %v3370
        %v3372 = vpop.f32.mrf.mxu0
        %v3373 = vadd.f32 0.0, %v3372
        %3374 = vmatmul.bf16.gmra.mxu0 %v3194
        %v3375 = vpop.f32.mrf.mxu0
        %v3376 = vadd.f32 0.0, %v3375
        %v3377 = vpop.f32.mrf.mxu0
        %v3378 = vadd.f32 0.0, %v3377
        %3379 = vmatmul.bf16.gmra.mxu0 %v3202
        %v3380 = vpop.f32.mrf.mxu0
        %v3381 = vadd.f32 0.0, %v3380
        %v3382 = vpop.f32.mrf.mxu0
        %v3383 = vadd.f32 0.0, %v3382
        %3384 = vmatmul.bf16.gmra.mxu0 %v3210
        %v3385 = vpop.f32.mrf.mxu0
        %v3386 = vadd.f32 0.0, %v3385
        %v3387 = vpop.f32.mrf.mxu0
        %v3388 = vadd.f32 0.0, %v3387
        %3389 = vmatmul.bf16.gmra.mxu0 %v3218
        %v3390 = vpop.f32.mrf.mxu0
        %v3391 = vadd.f32 0.0, %v3390
        %v3392 = vpop.f32.mrf.mxu0
        %v3393 = vadd.f32 0.0, %v3392
        %3394 = vmatmul.bf16.gmra.mxu0 %v3226
        %v3395 = vpop.f32.mrf.mxu0
        %v3396 = vadd.f32 0.0, %v3395
        %v3397 = vpop.f32.mrf.mxu0
        %v3398 = vadd.f32 0.0, %v3397
        %3399 = vmatmul.bf16.gmra.mxu0 %v3234
        %v3400 = vpop.f32.mrf.mxu0
        %v3401 = vadd.f32 0.0, %v3400
        %v3402 = vpop.f32.mrf.mxu0
        %v3403 = vadd.f32 0.0, %v3402
        %3404 = vmatmul.bf16.gmra.mxu0 %v3242
        %v3405 = vpop.f32.mrf.mxu0
        %v3406 = vadd.f32 0.0, %v3405
        %v3407 = vpop.f32.mrf.mxu0
        %v3408 = vadd.f32 0.0, %v3407
        %3409 = vmatmul.bf16.gmra.mxu0 %v3250
        %v3410 = vpop.f32.mrf.mxu0
        %v3411 = vadd.f32 0.0, %v3410
        %v3412 = vpop.f32.mrf.mxu0
        %v3413 = vadd.f32 0.0, %v3412
        %3414 = vmatmul.bf16.gmra.mxu0 %v3258
        %v3415 = vpop.f32.mrf.mxu0
        %v3416 = vadd.f32 0.0, %v3415
        %v3417 = vpop.f32.mrf.mxu0
        %v3418 = vadd.f32 0.0, %v3417
        %3419 = vmatmul.bf16.gmra.mxu0 %v3266
        %v3420 = vpop.f32.mrf.mxu0
        %v3421 = vadd.f32 0.0, %v3420
        %v3422 = vpop.f32.mrf.mxu0
        %v3423 = vadd.f32 0.0, %v3422
        %3424 = vmatmul.bf16.gmra.mxu0 %v3274
        %v3425 = vpop.f32.mrf.mxu0
        %v3426 = vadd.f32 0.0, %v3425
        %v3427 = vpop.f32.mrf.mxu0
        %v3428 = vadd.f32 0.0, %v3427
        %3429 = vmatmul.bf16.gmra.mxu0 %v3282
        %v3430 = vpop.f32.mrf.mxu0
        %v3431 = vadd.f32 0.0, %v3430
        %v3432 = vpop.f32.mrf.mxu0
        %v3433 = vadd.f32 0.0, %v3432
        %3434 = vmatmul.bf16.gmra.mxu0 %v3286
        %v3435 = vpop.f32.mrf.mxu0
        %v3436 = vadd.f32 0.0, %v3435
        %v3437 = vpop.f32.mrf.mxu0
        %v3438 = vadd.f32 0.0, %v3437
        %3439 = vdwg.mxu0
        %v3440 = vadd.f32 %v3084, %v3361
        %v3441 = vadd.f32 %v3085, %v3363
        %v3442 = vadd.f32 %v3086, %v3366
        %v3443 = vadd.f32 %v3087, %v3368
        %v3444 = vadd.f32 %v3088, %v3371
        %v3445 = vadd.f32 %v3089, %v3373
        %v3446 = vadd.f32 %v3090, %v3376
        %v3447 = vadd.f32 %v3091, %v3378
        %v3448 = vadd.f32 %v3092, %v3381
        %v3449 = vadd.f32 %v3093, %v3383
        %v3450 = vadd.f32 %v3094, %v3386
        %v3451 = vadd.f32 %v3095, %v3388
        %v3452 = vadd.f32 %v3096, %v3391
        %v3453 = vadd.f32 %v3097, %v3393
        %v3454 = vadd.f32 %v3098, %v3396
        %v3455 = vadd.f32 %v3099, %v3398
        %v3456 = vadd.f32 %v3100, %v3401
        %v3457 = vadd.f32 %v3101, %v3403
        %v3458 = vadd.f32 %v3102, %v3406
        %v3459 = vadd.f32 %v3103, %v3408
        %v3460 = vadd.f32 %v3104, %v3411
        %v3461 = vadd.f32 %v3105, %v3413
        %v3462 = vadd.f32 %v3106, %v3416
        %v3463 = vadd.f32 %v3107, %v3418
        %v3464 = vadd.f32 %v3108, %v3421
        %v3465 = vadd.f32 %v3109, %v3423
        %v3466 = vadd.f32 %v3110, %v3426
        %v3467 = vadd.f32 %v3111, %v3428
        %v3468 = vadd.f32 %v3112, %v3431
        %v3469 = vadd.f32 %v3113, %v3433
        %v3470 = vadd.f32 %v3114, %v3436
        %v3471 = vadd.f32 %v3115, %v3438
        %v3472 = vunpack.c.l.b16 %v2574
        %v3473 = vunpack.c.h.b16 %v2574
        %v3474 = vunpack.c.l.b16 0
        %v3475 = vunpack.c.h.b16 0
        %vm3476 = vcmp.ne.s32.totalorder %v3472, %v3474
        %vm3477 = vcmp.ne.s32.totalorder %v3473, %v3475
        %vm3478 = vmpackc.low %vm3477, %vm3476
        %v3479 = vsel %vm3478, %v912, 0
        %v3480 = vsel %vm2583, %v913, 0
        %v3481 = vsel %vm1239, %v914, 0
        %v3482 = vsel %vm1246, %v915, 0
        %v3483 = vsel %vm1253, %v916, 0
        %v3484 = vsel %vm1260, %v917, 0
        %v3485 = vsel %vm1267, %v918, 0
        %v3486 = vsel %vm1274, %v919, 0
        %v3487 = vsel %vm1281, %v920, 0
        %v3488 = vsel %vm1288, %v921, 0
        %v3489 = vsel %vm1295, %v922, 0
        %v3490 = vsel %vm1302, %v923, 0
        %v3491 = vsel %vm1309, %v924, 0
        %v3492 = vsel %vm1316, %v925, 0
        %v3493 = vsel %vm1323, %v926, 0
        %v3494 = vsel %vm1330, %v927, 0
        %s3495 = scalar_lea.vmem [#allocation5], 384
        %v3496 = vld [vmem:[%s3495] sm:$0xf]
        %v3497 = vld [vmem:[%s3495 + $0x4] sm:$0xf]
        %v3498 = vld [vmem:[%s3495 + $0x8] sm:$0xf]
        %v3499 = vld [vmem:[%s3495 + $0xc] sm:$0xf]
        %v3500 = vld [vmem:[%s3495 + $0x10] sm:$0xf]
        %v3501 = vld [vmem:[%s3495 + $0x14] sm:$0xf]
        %v3502 = vld [vmem:[%s3495 + $0x18] sm:$0xf]
        %v3503 = vld [vmem:[%s3495 + $0x1c] sm:$0xf]
        %v3504 = vld [vmem:[%s3495 + $0x20] sm:$0xf]
        %v3505 = vld [vmem:[%s3495 + $0x24] sm:$0xf]
        %v3506 = vld [vmem:[%s3495 + $0x28] sm:$0xf]
        %v3507 = vld [vmem:[%s3495 + $0x2c] sm:$0xf]
        %v3508 = vld [vmem:[%s3495 + $0x30] sm:$0xf]
        %v3509 = vld [vmem:[%s3495 + $0x34] sm:$0xf]
        %v3510 = vld [vmem:[%s3495 + $0x38] sm:$0xf]
        %v3511 = vld [vmem:[%s3495 + $0x3c] sm:$0xf]
        %v3513 = vshrl.u32 %v3479, 16
        %v3515 = vrot.slane %v3513, 7
        %v3517 = vshrl.u32 %v3480, 16
        %v3519 = vrot.slane %v3517, 7
        %v3520 = vshll.u32 %v3480, 16
        %v3522 = vor.u32 %v3519, %v3520
        %v3523 = vsel %vm1523, %v3515, %v3522
        %v3525 = vshrl.u32 %v3481, 16
        %v3527 = vrot.slane %v3525, 7
        %v3528 = vshll.u32 %v3481, 16
        %v3530 = vor.u32 %v3527, %v3528
        %v3531 = vsel %vm1523, %v3519, %v3530
        %v3533 = vshrl.u32 %v3482, 16
        %v3535 = vrot.slane %v3533, 7
        %v3536 = vshll.u32 %v3482, 16
        %v3538 = vor.u32 %v3535, %v3536
        %v3539 = vsel %vm1523, %v3527, %v3538
        %v3541 = vshrl.u32 %v3483, 16
        %v3543 = vrot.slane %v3541, 7
        %v3544 = vshll.u32 %v3483, 16
        %v3546 = vor.u32 %v3543, %v3544
        %v3547 = vsel %vm1523, %v3535, %v3546
        %v3549 = vshrl.u32 %v3484, 16
        %v3551 = vrot.slane %v3549, 7
        %v3552 = vshll.u32 %v3484, 16
        %v3554 = vor.u32 %v3551, %v3552
        %v3555 = vsel %vm1523, %v3543, %v3554
        %v3557 = vshrl.u32 %v3485, 16
        %v3559 = vrot.slane %v3557, 7
        %v3560 = vshll.u32 %v3485, 16
        %v3562 = vor.u32 %v3559, %v3560
        %v3563 = vsel %vm1523, %v3551, %v3562
        %v3565 = vshrl.u32 %v3486, 16
        %v3567 = vrot.slane %v3565, 7
        %v3568 = vshll.u32 %v3486, 16
        %v3570 = vor.u32 %v3567, %v3568
        %v3571 = vsel %vm1523, %v3559, %v3570
        %v3573 = vshrl.u32 %v3487, 16
        %v3575 = vrot.slane %v3573, 7
        %v3576 = vshll.u32 %v3487, 16
        %v3578 = vor.u32 %v3575, %v3576
        %v3579 = vsel %vm1523, %v3567, %v3578
        %v3581 = vshrl.u32 %v3488, 16
        %v3583 = vrot.slane %v3581, 7
        %v3584 = vshll.u32 %v3488, 16
        %v3586 = vor.u32 %v3583, %v3584
        %v3587 = vsel %vm1523, %v3575, %v3586
        %v3589 = vshrl.u32 %v3489, 16
        %v3591 = vrot.slane %v3589, 7
        %v3592 = vshll.u32 %v3489, 16
        %v3594 = vor.u32 %v3591, %v3592
        %v3595 = vsel %vm1523, %v3583, %v3594
        %v3597 = vshrl.u32 %v3490, 16
        %v3599 = vrot.slane %v3597, 7
        %v3600 = vshll.u32 %v3490, 16
        %v3602 = vor.u32 %v3599, %v3600
        %v3603 = vsel %vm1523, %v3591, %v3602
        %v3605 = vshrl.u32 %v3491, 16
        %v3607 = vrot.slane %v3605, 7
        %v3608 = vshll.u32 %v3491, 16
        %v3610 = vor.u32 %v3607, %v3608
        %v3611 = vsel %vm1523, %v3599, %v3610
        %v3613 = vshrl.u32 %v3492, 16
        %v3615 = vrot.slane %v3613, 7
        %v3616 = vshll.u32 %v3492, 16
        %v3618 = vor.u32 %v3615, %v3616
        %v3619 = vsel %vm1523, %v3607, %v3618
        %v3621 = vshrl.u32 %v3493, 16
        %v3623 = vrot.slane %v3621, 7
        %v3624 = vshll.u32 %v3493, 16
        %v3626 = vor.u32 %v3623, %v3624
        %v3627 = vsel %vm1523, %v3615, %v3626
        %v3629 = vshrl.u32 %v3494, 16
        %v3631 = vrot.slane %v3629, 7
        %v3632 = vshll.u32 %v3494, 16
        %v3634 = vor.u32 %v3631, %v3632
        %v3635 = vsel %vm1523, %v3623, %v3634
        %v3636 = vsel %vm1523, %v3631, %v1530
        %v3669 = vunpack.c.l.b16 %v3496
        %v3670 = vunpack.c.l.b16 %v3497
        %v3671 = vunpack.c.l.b16 %v3498
        %v3672 = vunpack.c.l.b16 %v3499
        %v3673 = vunpack.c.l.b16 %v3500
        %v3674 = vunpack.c.l.b16 %v3501
        %v3675 = vunpack.c.l.b16 %v3502
        %v3676 = vunpack.c.l.b16 %v3503
        %v3677 = vunpack.c.l.b16 %v3504
        %v3678 = vunpack.c.l.b16 %v3505
        %v3679 = vunpack.c.l.b16 %v3506
        %v3680 = vunpack.c.l.b16 %v3507
        %v3681 = vunpack.c.l.b16 %v3508
        %v3682 = vunpack.c.l.b16 %v3509
        %v3683 = vunpack.c.l.b16 %v3510
        %v3684 = vunpack.c.l.b16 %v3511
        %v3685 = vpack.c.b16 %v3670, %v3669
        %v3686 = vpack.c.b16 %v3672, %v3671
        %v3687 = vpack.c.b16 %v3674, %v3673
        %v3688 = vpack.c.b16 %v3676, %v3675
        %v3689 = vpack.c.b16 %v3678, %v3677
        %v3690 = vpack.c.b16 %v3680, %v3679
        %v3691 = vpack.c.b16 %v3682, %v3681
        %v3692 = vpack.c.b16 %v3684, %v3683
        %3701 = vmatpush.bf16.msra.mxu0 %v3692
        %3702 = vmatpush.bf16.msra.mxu0 %v3691
        %3703 = vmatpush.bf16.msra.mxu0 %v3690
        %3704 = vmatpush.bf16.msra.mxu0 %v3689
        %3705 = vmatpush.bf16.msra.mxu0 %v3688
        %3706 = vmatpush.bf16.msra.mxu0 %v3687
        %3707 = vmatpush.bf16.msra.mxu0 %v3686
        %3708 = vmatpush.bf16.msra.mxu0 %v3685
        %3709 = vmatmul.bf16.gmra.mxu0 %v3523
        %v3710 = vpop.f32.mrf.mxu0
        %v3711 = vadd.f32 0.0, %v3710
        %v3712 = vpop.f32.mrf.mxu0
        %v3713 = vadd.f32 0.0, %v3712
        %3714 = vmatmul.bf16.gmra.mxu0 %v3531
        %v3715 = vpop.f32.mrf.mxu0
        %v3716 = vadd.f32 0.0, %v3715
        %v3717 = vpop.f32.mrf.mxu0
        %v3718 = vadd.f32 0.0, %v3717
        %3719 = vmatmul.bf16.gmra.mxu0 %v3539
        %v3720 = vpop.f32.mrf.mxu0
        %v3721 = vadd.f32 0.0, %v3720
        %v3722 = vpop.f32.mrf.mxu0
        %v3723 = vadd.f32 0.0, %v3722
        %3724 = vmatmul.bf16.gmra.mxu0 %v3547
        %v3725 = vpop.f32.mrf.mxu0
        %v3726 = vadd.f32 0.0, %v3725
        %v3727 = vpop.f32.mrf.mxu0
        %v3728 = vadd.f32 0.0, %v3727
        %3729 = vmatmul.bf16.gmra.mxu0 %v3555
        %v3730 = vpop.f32.mrf.mxu0
        %v3731 = vadd.f32 0.0, %v3730
        %v3732 = vpop.f32.mrf.mxu0
        %v3733 = vadd.f32 0.0, %v3732
        %3734 = vmatmul.bf16.gmra.mxu0 %v3563
        %v3735 = vpop.f32.mrf.mxu0
        %v3736 = vadd.f32 0.0, %v3735
        %v3737 = vpop.f32.mrf.mxu0
        %v3738 = vadd.f32 0.0, %v3737
        %3739 = vmatmul.bf16.gmra.mxu0 %v3571
        %v3740 = vpop.f32.mrf.mxu0
        %v3741 = vadd.f32 0.0, %v3740
        %v3742 = vpop.f32.mrf.mxu0
        %v3743 = vadd.f32 0.0, %v3742
        %3744 = vmatmul.bf16.gmra.mxu0 %v3579
        %v3745 = vpop.f32.mrf.mxu0
        %v3746 = vadd.f32 0.0, %v3745
        %v3747 = vpop.f32.mrf.mxu0
        %v3748 = vadd.f32 0.0, %v3747
        %3749 = vmatmul.bf16.gmra.mxu0 %v3587
        %v3750 = vpop.f32.mrf.mxu0
        %v3751 = vadd.f32 0.0, %v3750
        %v3752 = vpop.f32.mrf.mxu0
        %v3753 = vadd.f32 0.0, %v3752
        %3754 = vmatmul.bf16.gmra.mxu0 %v3595
        %v3755 = vpop.f32.mrf.mxu0
        %v3756 = vadd.f32 0.0, %v3755
        %v3757 = vpop.f32.mrf.mxu0
        %v3758 = vadd.f32 0.0, %v3757
        %3759 = vmatmul.bf16.gmra.mxu0 %v3603
        %v3760 = vpop.f32.mrf.mxu0
        %v3761 = vadd.f32 0.0, %v3760
        %v3762 = vpop.f32.mrf.mxu0
        %v3763 = vadd.f32 0.0, %v3762
        %3764 = vmatmul.bf16.gmra.mxu0 %v3611
        %v3765 = vpop.f32.mrf.mxu0
        %v3766 = vadd.f32 0.0, %v3765
        %v3767 = vpop.f32.mrf.mxu0
        %v3768 = vadd.f32 0.0, %v3767
        %3769 = vmatmul.bf16.gmra.mxu0 %v3619
        %v3770 = vpop.f32.mrf.mxu0
        %v3771 = vadd.f32 0.0, %v3770
        %v3772 = vpop.f32.mrf.mxu0
        %v3773 = vadd.f32 0.0, %v3772
        %3774 = vmatmul.bf16.gmra.mxu0 %v3627
        %v3775 = vpop.f32.mrf.mxu0
        %v3776 = vadd.f32 0.0, %v3775
        %v3777 = vpop.f32.mrf.mxu0
        %v3778 = vadd.f32 0.0, %v3777
        %3779 = vmatmul.bf16.gmra.mxu0 %v3635
        %v3780 = vpop.f32.mrf.mxu0
        %v3781 = vadd.f32 0.0, %v3780
        %v3782 = vpop.f32.mrf.mxu0
        %v3783 = vadd.f32 0.0, %v3782
        %3784 = vmatmul.bf16.gmra.mxu0 %v3636
        %v3785 = vpop.f32.mrf.mxu0
        %v3786 = vadd.f32 0.0, %v3785
        %v3787 = vpop.f32.mrf.mxu0
        %v3788 = vadd.f32 0.0, %v3787
        %3789 = vdwg.mxu0
        %v3790 = vadd.f32 %v3440, %v3711
        %v3791 = vadd.f32 %v3441, %v3713
        %v3792 = vadd.f32 %v3442, %v3716
        %v3793 = vadd.f32 %v3443, %v3718
        %v3794 = vadd.f32 %v3444, %v3721
        %v3795 = vadd.f32 %v3445, %v3723
        %v3796 = vadd.f32 %v3446, %v3726
        %v3797 = vadd.f32 %v3447, %v3728
        %v3798 = vadd.f32 %v3448, %v3731
        %v3799 = vadd.f32 %v3449, %v3733
        %v3800 = vadd.f32 %v3450, %v3736
        %v3801 = vadd.f32 %v3451, %v3738
        %v3802 = vadd.f32 %v3452, %v3741
        %v3803 = vadd.f32 %v3453, %v3743
        %v3804 = vadd.f32 %v3454, %v3746
        %v3805 = vadd.f32 %v3455, %v3748
        %v3806 = vadd.f32 %v3456, %v3751
        %v3807 = vadd.f32 %v3457, %v3753
        %v3808 = vadd.f32 %v3458, %v3756
        %v3809 = vadd.f32 %v3459, %v3758
        %v3810 = vadd.f32 %v3460, %v3761
        %v3811 = vadd.f32 %v3461, %v3763
        %v3812 = vadd.f32 %v3462, %v3766
        %v3813 = vadd.f32 %v3463, %v3768
        %v3814 = vadd.f32 %v3464, %v3771
        %v3815 = vadd.f32 %v3465, %v3773
        %v3816 = vadd.f32 %v3466, %v3776
        %v3817 = vadd.f32 %v3467, %v3778
        %v3818 = vadd.f32 %v3468, %v3781
        %v3819 = vadd.f32 %v3469, %v3783
        %v3820 = vadd.f32 %v3470, %v3786
        %v3821 = vadd.f32 %v3471, %v3788
        %s3822 = scalar_lea.vmem [#allocation5], 448
        %v3823 = vld [vmem:[%s3822] sm:$0xf]
        %v3824 = vld [vmem:[%s3822 + $0x4] sm:$0xf]
        %v3825 = vld [vmem:[%s3822 + $0x8] sm:$0xf]
        %v3826 = vld [vmem:[%s3822 + $0xc] sm:$0xf]
        %v3827 = vld [vmem:[%s3822 + $0x10] sm:$0xf]
        %v3828 = vld [vmem:[%s3822 + $0x14] sm:$0xf]
        %v3829 = vld [vmem:[%s3822 + $0x18] sm:$0xf]
        %v3830 = vld [vmem:[%s3822 + $0x1c] sm:$0xf]
        %v3831 = vld [vmem:[%s3822 + $0x20] sm:$0xf]
        %v3832 = vld [vmem:[%s3822 + $0x24] sm:$0xf]
        %v3833 = vld [vmem:[%s3822 + $0x28] sm:$0xf]
        %v3834 = vld [vmem:[%s3822 + $0x2c] sm:$0xf]
        %v3835 = vld [vmem:[%s3822 + $0x30] sm:$0xf]
        %v3836 = vld [vmem:[%s3822 + $0x34] sm:$0xf]
        %v3837 = vld [vmem:[%s3822 + $0x38] sm:$0xf]
        %v3838 = vld [vmem:[%s3822 + $0x3c] sm:$0xf]
        %v3855 = vunpack.c.l.b16 %v3823
        %v3856 = vunpack.c.l.b16 %v3824
        %v3857 = vunpack.c.l.b16 %v3825
        %v3858 = vunpack.c.l.b16 %v3826
        %v3859 = vunpack.c.l.b16 %v3827
        %v3860 = vunpack.c.l.b16 %v3828
        %v3861 = vunpack.c.l.b16 %v3829
        %v3862 = vunpack.c.l.b16 %v3830
        %v3863 = vunpack.c.l.b16 %v3831
        %v3864 = vunpack.c.l.b16 %v3832
        %v3865 = vunpack.c.l.b16 %v3833
        %v3866 = vunpack.c.l.b16 %v3834
        %v3867 = vunpack.c.l.b16 %v3835
        %v3868 = vunpack.c.l.b16 %v3836
        %v3869 = vunpack.c.l.b16 %v3837
        %v3870 = vunpack.c.l.b16 %v3838
        %v3871 = vpack.c.b16 %v3856, %v3855
        %v3872 = vpack.c.b16 %v3858, %v3857
        %v3873 = vpack.c.b16 %v3860, %v3859
        %v3874 = vpack.c.b16 %v3862, %v3861
        %v3875 = vpack.c.b16 %v3864, %v3863
        %v3876 = vpack.c.b16 %v3866, %v3865
        %v3877 = vpack.c.b16 %v3868, %v3867
        %v3878 = vpack.c.b16 %v3870, %v3869
        %3887 = vmatpush.bf16.msra.mxu0 %v3878
        %3888 = vmatpush.bf16.msra.mxu0 %v3877
        %3889 = vmatpush.bf16.msra.mxu0 %v3876
        %3890 = vmatpush.bf16.msra.mxu0 %v3875
        %3891 = vmatpush.bf16.msra.mxu0 %v3874
        %3892 = vmatpush.bf16.msra.mxu0 %v3873
        %3893 = vmatpush.bf16.msra.mxu0 %v3872
        %3894 = vmatpush.bf16.msra.mxu0 %v3871
        %3895 = vmatmul.bf16.gmra.mxu0 %v913
        %v3896 = vpop.f32.mrf.mxu0
        %v3897 = vadd.f32 0.0, %v3896
        %v3898 = vpop.f32.mrf.mxu0
        %v3899 = vadd.f32 0.0, %v3898
        %3900 = vmatmul.bf16.gmra.mxu0 %v914
        %v3901 = vpop.f32.mrf.mxu0
        %v3902 = vadd.f32 0.0, %v3901
        %v3903 = vpop.f32.mrf.mxu0
        %v3904 = vadd.f32 0.0, %v3903
        %3905 = vmatmul.bf16.gmra.mxu0 %v915
        %v3906 = vpop.f32.mrf.mxu0
        %v3907 = vadd.f32 0.0, %v3906
        %v3908 = vpop.f32.mrf.mxu0
        %v3909 = vadd.f32 0.0, %v3908
        %3910 = vmatmul.bf16.gmra.mxu0 %v916
        %v3911 = vpop.f32.mrf.mxu0
        %v3912 = vadd.f32 0.0, %v3911
        %v3913 = vpop.f32.mrf.mxu0
        %v3914 = vadd.f32 0.0, %v3913
        %3915 = vmatmul.bf16.gmra.mxu0 %v917
        %v3916 = vpop.f32.mrf.mxu0
        %v3917 = vadd.f32 0.0, %v3916
        %v3918 = vpop.f32.mrf.mxu0
        %v3919 = vadd.f32 0.0, %v3918
        %3920 = vmatmul.bf16.gmra.mxu0 %v918
        %v3921 = vpop.f32.mrf.mxu0
        %v3922 = vadd.f32 0.0, %v3921
        %v3923 = vpop.f32.mrf.mxu0
        %v3924 = vadd.f32 0.0, %v3923
        %3925 = vmatmul.bf16.gmra.mxu0 %v919
        %v3926 = vpop.f32.mrf.mxu0
        %v3927 = vadd.f32 0.0, %v3926
        %v3928 = vpop.f32.mrf.mxu0
        %v3929 = vadd.f32 0.0, %v3928
        %3930 = vmatmul.bf16.gmra.mxu0 %v920
        %v3931 = vpop.f32.mrf.mxu0
        %v3932 = vadd.f32 0.0, %v3931
        %v3933 = vpop.f32.mrf.mxu0
        %v3934 = vadd.f32 0.0, %v3933
        %3935 = vmatmul.bf16.gmra.mxu0 %v921
        %v3936 = vpop.f32.mrf.mxu0
        %v3937 = vadd.f32 0.0, %v3936
        %v3938 = vpop.f32.mrf.mxu0
        %v3939 = vadd.f32 0.0, %v3938
        %3940 = vmatmul.bf16.gmra.mxu0 %v922
        %v3941 = vpop.f32.mrf.mxu0
        %v3942 = vadd.f32 0.0, %v3941
        %v3943 = vpop.f32.mrf.mxu0
        %v3944 = vadd.f32 0.0, %v3943
        %3945 = vmatmul.bf16.gmra.mxu0 %v923
        %v3946 = vpop.f32.mrf.mxu0
        %v3947 = vadd.f32 0.0, %v3946
        %v3948 = vpop.f32.mrf.mxu0
        %v3949 = vadd.f32 0.0, %v3948
        %3950 = vmatmul.bf16.gmra.mxu0 %v924
        %v3951 = vpop.f32.mrf.mxu0
        %v3952 = vadd.f32 0.0, %v3951
        %v3953 = vpop.f32.mrf.mxu0
        %v3954 = vadd.f32 0.0, %v3953
        %3955 = vmatmul.bf16.gmra.mxu0 %v925
        %v3956 = vpop.f32.mrf.mxu0
        %v3957 = vadd.f32 0.0, %v3956
        %v3958 = vpop.f32.mrf.mxu0
        %v3959 = vadd.f32 0.0, %v3958
        %3960 = vmatmul.bf16.gmra.mxu0 %v926
        %v3961 = vpop.f32.mrf.mxu0
        %v3962 = vadd.f32 0.0, %v3961
        %v3963 = vpop.f32.mrf.mxu0
        %v3964 = vadd.f32 0.0, %v3963
        %3965 = vmatmul.bf16.gmra.mxu0 %v927
        %v3966 = vpop.f32.mrf.mxu0
        %v3967 = vadd.f32 0.0, %v3966
        %v3968 = vpop.f32.mrf.mxu0
        %v3969 = vadd.f32 0.0, %v3968
        %3970 = vmatmul.bf16.gmra.mxu0 0
        %v3971 = vpop.f32.mrf.mxu0
        %v3972 = vadd.f32 0.0, %v3971
        %v3973 = vpop.f32.mrf.mxu0
        %v3974 = vadd.f32 0.0, %v3973
        %3975 = vdwg.mxu0
        %v3976 = vadd.f32 %v3790, %v3897
        %v3977 = vadd.f32 %v3791, %v3899
        %v3978 = vadd.f32 %v3792, %v3902
        %v3979 = vadd.f32 %v3793, %v3904
        %v3980 = vadd.f32 %v3794, %v3907
        %v3981 = vadd.f32 %v3795, %v3909
        %v3982 = vadd.f32 %v3796, %v3912
        %v3983 = vadd.f32 %v3797, %v3914
        %v3984 = vadd.f32 %v3798, %v3917
        %v3985 = vadd.f32 %v3799, %v3919
        %v3986 = vadd.f32 %v3800, %v3922
        %v3987 = vadd.f32 %v3801, %v3924
        %v3988 = vadd.f32 %v3802, %v3927
        %v3989 = vadd.f32 %v3803, %v3929
        %v3990 = vadd.f32 %v3804, %v3932
        %v3991 = vadd.f32 %v3805, %v3934
        %v3992 = vadd.f32 %v3806, %v3937
        %v3993 = vadd.f32 %v3807, %v3939
        %v3994 = vadd.f32 %v3808, %v3942
        %v3995 = vadd.f32 %v3809, %v3944
        %v3996 = vadd.f32 %v3810, %v3947
        %v3997 = vadd.f32 %v3811, %v3949
        %v3998 = vadd.f32 %v3812, %v3952
        %v3999 = vadd.f32 %v3813, %v3954
        %v4000 = vadd.f32 %v3814, %v3957
        %v4001 = vadd.f32 %v3815, %v3959
        %v4002 = vadd.f32 %v3816, %v3962
        %v4003 = vadd.f32 %v3817, %v3964
        %v4004 = vadd.f32 %v3818, %v3967
        %v4005 = vadd.f32 %v3819, %v3969
        %v4006 = vadd.f32 %v3820, %v3972
        %v4007 = vadd.f32 %v3821, %v3974
        %v4008 = vsel %vm3125, %v913, 0
        %v4009 = vsel %vm2111, %v914, 0
        %v4010 = vsel %vm2118, %v915, 0
        %v4011 = vsel %vm2125, %v916, 0
        %v4012 = vsel %vm2132, %v917, 0
        %v4013 = vsel %vm2139, %v918, 0
        %v4014 = vsel %vm2146, %v919, 0
        %v4015 = vsel %vm2153, %v920, 0
        %v4016 = vsel %vm2160, %v921, 0
        %v4017 = vsel %vm2167, %v922, 0
        %v4018 = vsel %vm2174, %v923, 0
        %v4019 = vsel %vm2181, %v924, 0
        %v4020 = vsel %vm2188, %v925, 0
        %v4021 = vsel %vm2195, %v926, 0
        %v4022 = vsel %vm2202, %v927, 0
        %s4023 = scalar_lea.vmem [#allocation5], 512
        %v4024 = vld [vmem:[%s4023] sm:$0xf]
        %v4025 = vld [vmem:[%s4023 + $0x4] sm:$0xf]
        %v4026 = vld [vmem:[%s4023 + $0x8] sm:$0xf]
        %v4027 = vld [vmem:[%s4023 + $0xc] sm:$0xf]
        %v4028 = vld [vmem:[%s4023 + $0x10] sm:$0xf]
        %v4029 = vld [vmem:[%s4023 + $0x14] sm:$0xf]
        %v4030 = vld [vmem:[%s4023 + $0x18] sm:$0xf]
        %v4031 = vld [vmem:[%s4023 + $0x1c] sm:$0xf]
        %v4032 = vld [vmem:[%s4023 + $0x20] sm:$0xf]
        %v4033 = vld [vmem:[%s4023 + $0x24] sm:$0xf]
        %v4034 = vld [vmem:[%s4023 + $0x28] sm:$0xf]
        %v4035 = vld [vmem:[%s4023 + $0x2c] sm:$0xf]
        %v4036 = vld [vmem:[%s4023 + $0x30] sm:$0xf]
        %v4037 = vld [vmem:[%s4023 + $0x34] sm:$0xf]
        %v4038 = vld [vmem:[%s4023 + $0x38] sm:$0xf]
        %v4039 = vld [vmem:[%s4023 + $0x3c] sm:$0xf]
        %v4041 = vshrl.u32 %v4008, 16
        %v4043 = vshll.u32 %v4008, 16
        %v4045 = vrot.slane %v4043, 1
        %v4046 = vor.u32 %v4041, %v4045
        %v4048 = vshll.u32 %v4009, 16
        %v4050 = vrot.slane %v4048, 1
        %v4051 = vsel %vm1113, %v4046, %v4050
        %v4052 = vshrl.u32 %v4009, 16
        %v4054 = vor.u32 %v4052, %v4050
        %v4056 = vshll.u32 %v4010, 16
        %v4058 = vrot.slane %v4056, 1
        %v4059 = vsel %vm1113, %v4054, %v4058
        %v4060 = vshrl.u32 %v4010, 16
        %v4062 = vor.u32 %v4060, %v4058
        %v4064 = vshll.u32 %v4011, 16
        %v4066 = vrot.slane %v4064, 1
        %v4067 = vsel %vm1113, %v4062, %v4066
        %v4068 = vshrl.u32 %v4011, 16
        %v4070 = vor.u32 %v4068, %v4066
        %v4072 = vshll.u32 %v4012, 16
        %v4074 = vrot.slane %v4072, 1
        %v4075 = vsel %vm1113, %v4070, %v4074
        %v4076 = vshrl.u32 %v4012, 16
        %v4078 = vor.u32 %v4076, %v4074
        %v4080 = vshll.u32 %v4013, 16
        %v4082 = vrot.slane %v4080, 1
        %v4083 = vsel %vm1113, %v4078, %v4082
        %v4084 = vshrl.u32 %v4013, 16
        %v4086 = vor.u32 %v4084, %v4082
        %v4088 = vshll.u32 %v4014, 16
        %v4090 = vrot.slane %v4088, 1
        %v4091 = vsel %vm1113, %v4086, %v4090
        %v4092 = vshrl.u32 %v4014, 16
        %v4094 = vor.u32 %v4092, %v4090
        %v4096 = vshll.u32 %v4015, 16
        %v4098 = vrot.slane %v4096, 1
        %v4099 = vsel %vm1113, %v4094, %v4098
        %v4100 = vshrl.u32 %v4015, 16
        %v4102 = vor.u32 %v4100, %v4098
        %v4104 = vshll.u32 %v4016, 16
        %v4106 = vrot.slane %v4104, 1
        %v4107 = vsel %vm1113, %v4102, %v4106
        %v4108 = vshrl.u32 %v4016, 16
        %v4110 = vor.u32 %v4108, %v4106
        %v4112 = vshll.u32 %v4017, 16
        %v4114 = vrot.slane %v4112, 1
        %v4115 = vsel %vm1113, %v4110, %v4114
        %v4116 = vshrl.u32 %v4017, 16
        %v4118 = vor.u32 %v4116, %v4114
        %v4120 = vshll.u32 %v4018, 16
        %v4122 = vrot.slane %v4120, 1
        %v4123 = vsel %vm1113, %v4118, %v4122
        %v4124 = vshrl.u32 %v4018, 16
        %v4126 = vor.u32 %v4124, %v4122
        %v4128 = vshll.u32 %v4019, 16
        %v4130 = vrot.slane %v4128, 1
        %v4131 = vsel %vm1113, %v4126, %v4130
        %v4132 = vshrl.u32 %v4019, 16
        %v4134 = vor.u32 %v4132, %v4130
        %v4136 = vshll.u32 %v4020, 16
        %v4138 = vrot.slane %v4136, 1
        %v4139 = vsel %vm1113, %v4134, %v4138
        %v4140 = vshrl.u32 %v4020, 16
        %v4142 = vor.u32 %v4140, %v4138
        %v4144 = vshll.u32 %v4021, 16
        %v4146 = vrot.slane %v4144, 1
        %v4147 = vsel %vm1113, %v4142, %v4146
        %v4148 = vshrl.u32 %v4021, 16
        %v4150 = vor.u32 %v4148, %v4146
        %v4152 = vshll.u32 %v4022, 16
        %v4154 = vrot.slane %v4152, 1
        %v4155 = vsel %vm1113, %v4150, %v4154
        %v4156 = vshrl.u32 %v4022, 16
        %v4158 = vor.u32 %v4156, %v4154
        %v4159 = vsel %vm1113, %v4158, %v2250
        %v4160 = vsel %vm1113, %v2251, %v2250
        %v4193 = vunpack.c.l.b16 %v4024
        %v4194 = vunpack.c.l.b16 %v4025
        %v4195 = vunpack.c.l.b16 %v4026
        %v4196 = vunpack.c.l.b16 %v4027
        %v4197 = vunpack.c.l.b16 %v4028
        %v4198 = vunpack.c.l.b16 %v4029
        %v4199 = vunpack.c.l.b16 %v4030
        %v4200 = vunpack.c.l.b16 %v4031
        %v4201 = vunpack.c.l.b16 %v4032
        %v4202 = vunpack.c.l.b16 %v4033
        %v4203 = vunpack.c.l.b16 %v4034
        %v4204 = vunpack.c.l.b16 %v4035
        %v4205 = vunpack.c.l.b16 %v4036
        %v4206 = vunpack.c.l.b16 %v4037
        %v4207 = vunpack.c.l.b16 %v4038
        %v4208 = vunpack.c.l.b16 %v4039
        %v4209 = vpack.c.b16 %v4194, %v4193
        %v4210 = vpack.c.b16 %v4196, %v4195
        %v4211 = vpack.c.b16 %v4198, %v4197
        %v4212 = vpack.c.b16 %v4200, %v4199
        %v4213 = vpack.c.b16 %v4202, %v4201
        %v4214 = vpack.c.b16 %v4204, %v4203
        %v4215 = vpack.c.b16 %v4206, %v4205
        %v4216 = vpack.c.b16 %v4208, %v4207
        %4225 = vmatpush.bf16.msra.mxu0 %v4216
        %4226 = vmatpush.bf16.msra.mxu0 %v4215
        %4227 = vmatpush.bf16.msra.mxu0 %v4214
        %4228 = vmatpush.bf16.msra.mxu0 %v4213
        %4229 = vmatpush.bf16.msra.mxu0 %v4212
        %4230 = vmatpush.bf16.msra.mxu0 %v4211
        %4231 = vmatpush.bf16.msra.mxu0 %v4210
        %4232 = vmatpush.bf16.msra.mxu0 %v4209
        %4233 = vmatmul.bf16.gmra.mxu0 %v4051
        %v4234 = vpop.f32.mrf.mxu0
        %v4235 = vadd.f32 0.0, %v4234
        %v4236 = vpop.f32.mrf.mxu0
        %v4237 = vadd.f32 0.0, %v4236
        %4238 = vmatmul.bf16.gmra.mxu0 %v4059
        %v4239 = vpop.f32.mrf.mxu0
        %v4240 = vadd.f32 0.0, %v4239
        %v4241 = vpop.f32.mrf.mxu0
        %v4242 = vadd.f32 0.0, %v4241
        %4243 = vmatmul.bf16.gmra.mxu0 %v4067
        %v4244 = vpop.f32.mrf.mxu0
        %v4245 = vadd.f32 0.0, %v4244
        %v4246 = vpop.f32.mrf.mxu0
        %v4247 = vadd.f32 0.0, %v4246
        %4248 = vmatmul.bf16.gmra.mxu0 %v4075
        %v4249 = vpop.f32.mrf.mxu0
        %v4250 = vadd.f32 0.0, %v4249
        %v4251 = vpop.f32.mrf.mxu0
        %v4252 = vadd.f32 0.0, %v4251
        %4253 = vmatmul.bf16.gmra.mxu0 %v4083
        %v4254 = vpop.f32.mrf.mxu0
        %v4255 = vadd.f32 0.0, %v4254
        %v4256 = vpop.f32.mrf.mxu0
        %v4257 = vadd.f32 0.0, %v4256
        %4258 = vmatmul.bf16.gmra.mxu0 %v4091
        %v4259 = vpop.f32.mrf.mxu0
        %v4260 = vadd.f32 0.0, %v4259
        %v4261 = vpop.f32.mrf.mxu0
        %v4262 = vadd.f32 0.0, %v4261
        %4263 = vmatmul.bf16.gmra.mxu0 %v4099
        %v4264 = vpop.f32.mrf.mxu0
        %v4265 = vadd.f32 0.0, %v4264
        %v4266 = vpop.f32.mrf.mxu0
        %v4267 = vadd.f32 0.0, %v4266
        %4268 = vmatmul.bf16.gmra.mxu0 %v4107
        %v4269 = vpop.f32.mrf.mxu0
        %v4270 = vadd.f32 0.0, %v4269
        %v4271 = vpop.f32.mrf.mxu0
        %v4272 = vadd.f32 0.0, %v4271
        %4273 = vmatmul.bf16.gmra.mxu0 %v4115
        %v4274 = vpop.f32.mrf.mxu0
        %v4275 = vadd.f32 0.0, %v4274
        %v4276 = vpop.f32.mrf.mxu0
        %v4277 = vadd.f32 0.0, %v4276
        %4278 = vmatmul.bf16.gmra.mxu0 %v4123
        %v4279 = vpop.f32.mrf.mxu0
        %v4280 = vadd.f32 0.0, %v4279
        %v4281 = vpop.f32.mrf.mxu0
        %v4282 = vadd.f32 0.0, %v4281
        %4283 = vmatmul.bf16.gmra.mxu0 %v4131
        %v4284 = vpop.f32.mrf.mxu0
        %v4285 = vadd.f32 0.0, %v4284
        %v4286 = vpop.f32.mrf.mxu0
        %v4287 = vadd.f32 0.0, %v4286
        %4288 = vmatmul.bf16.gmra.mxu0 %v4139
        %v4289 = vpop.f32.mrf.mxu0
        %v4290 = vadd.f32 0.0, %v4289
        %v4291 = vpop.f32.mrf.mxu0
        %v4292 = vadd.f32 0.0, %v4291
        %4293 = vmatmul.bf16.gmra.mxu0 %v4147
        %v4294 = vpop.f32.mrf.mxu0
        %v4295 = vadd.f32 0.0, %v4294
        %v4296 = vpop.f32.mrf.mxu0
        %v4297 = vadd.f32 0.0, %v4296
        %4298 = vmatmul.bf16.gmra.mxu0 %v4155
        %v4299 = vpop.f32.mrf.mxu0
        %v4300 = vadd.f32 0.0, %v4299
        %v4301 = vpop.f32.mrf.mxu0
        %v4302 = vadd.f32 0.0, %v4301
        %4303 = vmatmul.bf16.gmra.mxu0 %v4159
        %v4304 = vpop.f32.mrf.mxu0
        %v4305 = vadd.f32 0.0, %v4304
        %v4306 = vpop.f32.mrf.mxu0
        %v4307 = vadd.f32 0.0, %v4306
        %4308 = vmatmul.bf16.gmra.mxu0 %v4160
        %v4309 = vpop.f32.mrf.mxu0
        %v4310 = vadd.f32 0.0, %v4309
        %v4311 = vpop.f32.mrf.mxu0
        %v4312 = vadd.f32 0.0, %v4311
        %4313 = vdwg.mxu0
        %v4314 = vadd.f32 %v3976, %v4235
        %v4315 = vadd.f32 %v3977, %v4237
        %v4316 = vadd.f32 %v3978, %v4240
        %v4317 = vadd.f32 %v3979, %v4242
        %v4318 = vadd.f32 %v3980, %v4245
        %v4319 = vadd.f32 %v3981, %v4247
        %v4320 = vadd.f32 %v3982, %v4250
        %v4321 = vadd.f32 %v3983, %v4252
        %v4322 = vadd.f32 %v3984, %v4255
        %v4323 = vadd.f32 %v3985, %v4257
        %v4324 = vadd.f32 %v3986, %v4260
        %v4325 = vadd.f32 %v3987, %v4262
        %v4326 = vadd.f32 %v3988, %v4265
        %v4327 = vadd.f32 %v3989, %v4267
        %v4328 = vadd.f32 %v3990, %v4270
        %v4329 = vadd.f32 %v3991, %v4272
        %v4330 = vadd.f32 %v3992, %v4275
        %v4331 = vadd.f32 %v3993, %v4277
        %v4332 = vadd.f32 %v3994, %v4280
        %v4333 = vadd.f32 %v3995, %v4282
        %v4334 = vadd.f32 %v3996, %v4285
        %v4335 = vadd.f32 %v3997, %v4287
        %v4336 = vadd.f32 %v3998, %v4290
        %v4337 = vadd.f32 %v3999, %v4292
        %v4338 = vadd.f32 %v4000, %v4295
        %v4339 = vadd.f32 %v4001, %v4297
        %v4340 = vadd.f32 %v4002, %v4300
        %v4341 = vadd.f32 %v4003, %v4302
        %v4342 = vadd.f32 %v4004, %v4305
        %v4343 = vadd.f32 %v4005, %v4307
        %v4344 = vadd.f32 %v4006, %v4310
        %v4345 = vadd.f32 %v4007, %v4312
        %v4346 = vld [vmem:[%s2] sm:$0x1]
        %v4348 = vperm.slane %v4346, 0
        %v4350 = vmul.f32 %v4314, %v4348
        %v4351 = vmul.f32 %v4315, %v4348
        %v4352 = vmul.f32 %v4316, %v4348
        %v4353 = vmul.f32 %v4317, %v4348
        %v4354 = vmul.f32 %v4318, %v4348
        %v4355 = vmul.f32 %v4319, %v4348
        %v4356 = vmul.f32 %v4320, %v4348
        %v4357 = vmul.f32 %v4321, %v4348
        %v4358 = vmul.f32 %v4322, %v4348
        %v4359 = vmul.f32 %v4323, %v4348
        %v4360 = vmul.f32 %v4324, %v4348
        %v4361 = vmul.f32 %v4325, %v4348
        %v4362 = vmul.f32 %v4326, %v4348
        %v4363 = vmul.f32 %v4327, %v4348
        %v4364 = vmul.f32 %v4328, %v4348
        %v4365 = vmul.f32 %v4329, %v4348
        %v4366 = vmul.f32 %v4330, %v4348
        %v4367 = vmul.f32 %v4331, %v4348
        %v4368 = vmul.f32 %v4332, %v4348
        %v4369 = vmul.f32 %v4333, %v4348
        %v4370 = vmul.f32 %v4334, %v4348
        %v4371 = vmul.f32 %v4335, %v4348
        %v4372 = vmul.f32 %v4336, %v4348
        %v4373 = vmul.f32 %v4337, %v4348
        %v4374 = vmul.f32 %v4338, %v4348
        %v4375 = vmul.f32 %v4339, %v4348
        %v4376 = vmul.f32 %v4340, %v4348
        %v4377 = vmul.f32 %v4341, %v4348
        %v4378 = vmul.f32 %v4342, %v4348
        %v4379 = vmul.f32 %v4343, %v4348
        %v4380 = vmul.f32 %v4344, %v4348
        %v4381 = vmul.f32 %v4345, %v4348
        %v4382 = vld [vmem:[%s3] sm:$0x1]
        %v4384 = vperm.slane %v4382, 0
        %v4386 = vadd.f32 %v4350, %v4384
        %v4387 = vadd.f32 %v4351, %v4384
        %v4388 = vadd.f32 %v4352, %v4384
        %v4389 = vadd.f32 %v4353, %v4384
        %v4390 = vadd.f32 %v4354, %v4384
        %v4391 = vadd.f32 %v4355, %v4384
        %v4392 = vadd.f32 %v4356, %v4384
        %v4393 = vadd.f32 %v4357, %v4384
        %v4394 = vadd.f32 %v4358, %v4384
        %v4395 = vadd.f32 %v4359, %v4384
        %v4396 = vadd.f32 %v4360, %v4384
        %v4397 = vadd.f32 %v4361, %v4384
        %v4398 = vadd.f32 %v4362, %v4384
        %v4399 = vadd.f32 %v4363, %v4384
        %v4400 = vadd.f32 %v4364, %v4384
        %v4401 = vadd.f32 %v4365, %v4384
        %v4402 = vadd.f32 %v4366, %v4384
        %v4403 = vadd.f32 %v4367, %v4384
        %v4404 = vadd.f32 %v4368, %v4384
        %v4405 = vadd.f32 %v4369, %v4384
        %v4406 = vadd.f32 %v4370, %v4384
        %v4407 = vadd.f32 %v4371, %v4384
        %v4408 = vadd.f32 %v4372, %v4384
        %v4409 = vadd.f32 %v4373, %v4384
        %v4410 = vadd.f32 %v4374, %v4384
        %v4411 = vadd.f32 %v4375, %v4384
        %v4412 = vadd.f32 %v4376, %v4384
        %v4413 = vadd.f32 %v4377, %v4384
        %v4414 = vadd.f32 %v4378, %v4384
        %v4415 = vadd.f32 %v4379, %v4384
        %v4416 = vadd.f32 %v4380, %v4384
        %v4417 = vadd.f32 %v4381, %v4384
        %v4418 = vmax.f32 %v4386, 0.0
        %v4419 = vmax.f32 %v4387, 0.0
        %v4420 = vmax.f32 %v4388, 0.0
        %v4421 = vmax.f32 %v4389, 0.0
        %v4422 = vmax.f32 %v4390, 0.0
        %v4423 = vmax.f32 %v4391, 0.0
        %v4424 = vmax.f32 %v4392, 0.0
        %v4425 = vmax.f32 %v4393, 0.0
        %v4426 = vmax.f32 %v4394, 0.0
        %v4427 = vmax.f32 %v4395, 0.0
        %v4428 = vmax.f32 %v4396, 0.0
        %v4429 = vmax.f32 %v4397, 0.0
        %v4430 = vmax.f32 %v4398, 0.0
        %v4431 = vmax.f32 %v4399, 0.0
        %v4432 = vmax.f32 %v4400, 0.0
        %v4433 = vmax.f32 %v4401, 0.0
        %v4434 = vmax.f32 %v4402, 0.0
        %v4435 = vmax.f32 %v4403, 0.0
        %v4436 = vmax.f32 %v4404, 0.0
        %v4437 = vmax.f32 %v4405, 0.0
        %v4438 = vmax.f32 %v4406, 0.0
        %v4439 = vmax.f32 %v4407, 0.0
        %v4440 = vmax.f32 %v4408, 0.0
        %v4441 = vmax.f32 %v4409, 0.0
        %v4442 = vmax.f32 %v4410, 0.0
        %v4443 = vmax.f32 %v4411, 0.0
        %v4444 = vmax.f32 %v4412, 0.0
        %v4445 = vmax.f32 %v4413, 0.0
        %v4446 = vmax.f32 %v4414, 0.0
        %v4447 = vmax.f32 %v4415, 0.0
        %v4448 = vmax.f32 %v4416, 0.0
        %v4449 = vmax.f32 %v4417, 0.0
        %v4450 = vpack.c.bf16 %v4418, %v4418
        %v4451 = vpack.c.bf16 %v4419, %v4419
        %v4452 = vpack.c.bf16 %v4420, %v4420
        %v4453 = vpack.c.bf16 %v4421, %v4421
        %v4454 = vpack.c.bf16 %v4422, %v4422
        %v4455 = vpack.c.bf16 %v4423, %v4423
        %v4456 = vpack.c.bf16 %v4424, %v4424
        %v4457 = vpack.c.bf16 %v4425, %v4425
        %v4458 = vpack.c.bf16 %v4426, %v4426
        %v4459 = vpack.c.bf16 %v4427, %v4427
        %v4460 = vpack.c.bf16 %v4428, %v4428
        %v4461 = vpack.c.bf16 %v4429, %v4429
        %v4462 = vpack.c.bf16 %v4430, %v4430
        %v4463 = vpack.c.bf16 %v4431, %v4431
        %v4464 = vpack.c.bf16 %v4432, %v4432
        %v4465 = vpack.c.bf16 %v4433, %v4433
        %v4466 = vpack.c.bf16 %v4434, %v4434
        %v4467 = vpack.c.bf16 %v4435, %v4435
        %v4468 = vpack.c.bf16 %v4436, %v4436
        %v4469 = vpack.c.bf16 %v4437, %v4437
        %v4470 = vpack.c.bf16 %v4438, %v4438
        %v4471 = vpack.c.bf16 %v4439, %v4439
        %v4472 = vpack.c.bf16 %v4440, %v4440
        %v4473 = vpack.c.bf16 %v4441, %v4441
        %v4474 = vpack.c.bf16 %v4442, %v4442
        %v4475 = vpack.c.bf16 %v4443, %v4443
        %v4476 = vpack.c.bf16 %v4444, %v4444
        %v4477 = vpack.c.bf16 %v4445, %v4445
        %v4478 = vpack.c.bf16 %v4446, %v4446
        %v4479 = vpack.c.bf16 %v4447, %v4447
        %v4480 = vpack.c.bf16 %v4448, %v4448
        %v4481 = vpack.c.bf16 %v4449, %v4449
        %v4514 = vunpack.c.l.b16 %v4450
        %v4515 = vunpack.c.l.b16 %v4451
        %v4516 = vunpack.c.l.b16 %v4452
        %v4517 = vunpack.c.l.b16 %v4453
        %v4518 = vunpack.c.l.b16 %v4454
        %v4519 = vunpack.c.l.b16 %v4455
        %v4520 = vunpack.c.l.b16 %v4456
        %v4521 = vunpack.c.l.b16 %v4457
        %v4522 = vunpack.c.l.b16 %v4458
        %v4523 = vunpack.c.l.b16 %v4459
        %v4524 = vunpack.c.l.b16 %v4460
        %v4525 = vunpack.c.l.b16 %v4461
        %v4526 = vunpack.c.l.b16 %v4462
        %v4527 = vunpack.c.l.b16 %v4463
        %v4528 = vunpack.c.l.b16 %v4464
        %v4529 = vunpack.c.l.b16 %v4465
        %v4530 = vunpack.c.l.b16 %v4466
        %v4531 = vunpack.c.l.b16 %v4467
        %v4532 = vunpack.c.l.b16 %v4468
        %v4533 = vunpack.c.l.b16 %v4469
        %v4534 = vunpack.c.l.b16 %v4470
        %v4535 = vunpack.c.l.b16 %v4471
        %v4536 = vunpack.c.l.b16 %v4472
        %v4537 = vunpack.c.l.b16 %v4473
        %v4538 = vunpack.c.l.b16 %v4474
        %v4539 = vunpack.c.l.b16 %v4475
        %v4540 = vunpack.c.l.b16 %v4476
        %v4541 = vunpack.c.l.b16 %v4477
        %v4542 = vunpack.c.l.b16 %v4478
        %v4543 = vunpack.c.l.b16 %v4479
        %v4544 = vunpack.c.l.b16 %v4480
        %v4545 = vunpack.c.l.b16 %v4481
        %v4546 = vpack.c.b16 %v4515, %v4514
        %v4547 = vpack.c.b16 %v4517, %v4516
        %v4548 = vpack.c.b16 %v4519, %v4518
        %v4549 = vpack.c.b16 %v4521, %v4520
        %v4550 = vpack.c.b16 %v4523, %v4522
        %v4551 = vpack.c.b16 %v4525, %v4524
        %v4552 = vpack.c.b16 %v4527, %v4526
        %v4553 = vpack.c.b16 %v4529, %v4528
        %v4554 = vpack.c.b16 %v4531, %v4530
        %v4555 = vpack.c.b16 %v4533, %v4532
        %v4556 = vpack.c.b16 %v4535, %v4534
        %v4557 = vpack.c.b16 %v4537, %v4536
        %v4558 = vpack.c.b16 %v4539, %v4538
        %v4559 = vpack.c.b16 %v4541, %v4540
        %v4560 = vpack.c.b16 %v4543, %v4542
        %v4561 = vpack.c.b16 %v4545, %v4544
        %v4578 = vsel %vm1239, %v4546, 0
        %v4579 = vsel %vm1246, %v4547, 0
        %v4580 = vsel %vm1253, %v4548, 0
        %v4581 = vsel %vm1260, %v4549, 0
        %v4582 = vsel %vm1267, %v4550, 0
        %v4583 = vsel %vm1274, %v4551, 0
        %v4584 = vsel %vm1281, %v4552, 0
        %v4585 = vsel %vm1288, %v4553, 0
        %v4586 = vsel %vm1295, %v4554, 0
        %v4587 = vsel %vm1302, %v4555, 0
        %v4588 = vsel %vm1309, %v4556, 0
        %v4589 = vsel %vm1316, %v4557, 0
        %v4590 = vsel %vm1323, %v4558, 0
        %v4591 = vsel %vm1330, %v4559, 0
        %v4592 = vsel %vm1337, %v4560, 0
        %v4593 = vld [vmem:[#allocation7] sm:$0xf]
        %v4594 = vld [vmem:[#allocation7 + $0x4] sm:$0xf]
        %v4595 = vld [vmem:[#allocation7 + $0x8] sm:$0xf]
        %v4596 = vld [vmem:[#allocation7 + $0xc] sm:$0xf]
        %v4597 = vld [vmem:[#allocation7 + $0x10] sm:$0xf]
        %v4598 = vld [vmem:[#allocation7 + $0x14] sm:$0xf]
        %v4599 = vld [vmem:[#allocation7 + $0x18] sm:$0xf]
        %v4600 = vld [vmem:[#allocation7 + $0x1c] sm:$0xf]
        %v4601 = vld [vmem:[#allocation7 + $0x20] sm:$0xf]
        %v4602 = vld [vmem:[#allocation7 + $0x24] sm:$0xf]
        %v4603 = vld [vmem:[#allocation7 + $0x28] sm:$0xf]
        %v4604 = vld [vmem:[#allocation7 + $0x2c] sm:$0xf]
        %v4605 = vld [vmem:[#allocation7 + $0x30] sm:$0xf]
        %v4606 = vld [vmem:[#allocation7 + $0x34] sm:$0xf]
        %v4607 = vld [vmem:[#allocation7 + $0x38] sm:$0xf]
        %v4608 = vld [vmem:[#allocation7 + $0x3c] sm:$0xf]
        %s4609 = scalar_lea.vmem [#allocation7], 64
        %v4610 = vld [vmem:[%s4609] sm:$0xf]
        %v4611 = vld [vmem:[%s4609 + $0x4] sm:$0xf]
        %v4612 = vld [vmem:[%s4609 + $0x8] sm:$0xf]
        %v4613 = vld [vmem:[%s4609 + $0xc] sm:$0xf]
        %v4614 = vld [vmem:[%s4609 + $0x10] sm:$0xf]
        %v4615 = vld [vmem:[%s4609 + $0x14] sm:$0xf]
        %v4616 = vld [vmem:[%s4609 + $0x18] sm:$0xf]
        %v4617 = vld [vmem:[%s4609 + $0x1c] sm:$0xf]
        %v4618 = vld [vmem:[%s4609 + $0x20] sm:$0xf]
        %v4619 = vld [vmem:[%s4609 + $0x24] sm:$0xf]
        %v4620 = vld [vmem:[%s4609 + $0x28] sm:$0xf]
        %v4621 = vld [vmem:[%s4609 + $0x2c] sm:$0xf]
        %v4622 = vld [vmem:[%s4609 + $0x30] sm:$0xf]
        %v4623 = vld [vmem:[%s4609 + $0x34] sm:$0xf]
        %v4624 = vld [vmem:[%s4609 + $0x38] sm:$0xf]
        %v4625 = vld [vmem:[%s4609 + $0x3c] sm:$0xf]
        %v4642 = vunpack.c.l.b16 %v4610
        %v4643 = vunpack.c.l.b16 %v4611
        %v4644 = vunpack.c.l.b16 %v4612
        %v4645 = vunpack.c.l.b16 %v4613
        %v4646 = vunpack.c.l.b16 %v4614
        %v4647 = vunpack.c.l.b16 %v4615
        %v4648 = vunpack.c.l.b16 %v4616
        %v4649 = vunpack.c.l.b16 %v4617
        %v4650 = vunpack.c.l.b16 %v4618
        %v4651 = vunpack.c.l.b16 %v4619
        %v4652 = vunpack.c.l.b16 %v4620
        %v4653 = vunpack.c.l.b16 %v4621
        %v4654 = vunpack.c.l.b16 %v4622
        %v4655 = vunpack.c.l.b16 %v4623
        %v4656 = vunpack.c.l.b16 %v4624
        %v4657 = vunpack.c.l.b16 %v4625
        %v4658 = vpack.c.b16 %v4643, %v4642
        %v4659 = vpack.c.b16 %v4645, %v4644
        %v4660 = vpack.c.b16 %v4647, %v4646
        %v4661 = vpack.c.b16 %v4649, %v4648
        %v4662 = vpack.c.b16 %v4651, %v4650
        %v4663 = vpack.c.b16 %v4653, %v4652
        %v4664 = vpack.c.b16 %v4655, %v4654
        %v4665 = vpack.c.b16 %v4657, %v4656
        %4674 = vmatpush.bf16.msra.mxu0 %v4665
        %4675 = vmatpush.bf16.msra.mxu0 %v4664
        %4676 = vmatpush.bf16.msra.mxu0 %v4663
        %4677 = vmatpush.bf16.msra.mxu0 %v4662
        %4678 = vmatpush.bf16.msra.mxu0 %v4661
        %4679 = vmatpush.bf16.msra.mxu0 %v4660
        %4680 = vmatpush.bf16.msra.mxu0 %v4659
        %4681 = vmatpush.bf16.msra.mxu0 %v4658
        %4682 = vmatmul.bf16.gmra.mxu0 0
        %v4683 = vpop.f32.mrf.mxu0
        %v4684 = vadd.f32 0.0, %v4683
        %v4685 = vpop.f32.mrf.mxu0
        %v4686 = vadd.f32 0.0, %v4685
        %4687 = vmatmul.bf16.gmra.mxu0 %v4546
        %v4688 = vpop.f32.mrf.mxu0
        %v4689 = vadd.f32 0.0, %v4688
        %v4690 = vpop.f32.mrf.mxu0
        %v4691 = vadd.f32 0.0, %v4690
        %4692 = vmatmul.bf16.gmra.mxu0 %v4547
        %v4693 = vpop.f32.mrf.mxu0
        %v4694 = vadd.f32 0.0, %v4693
        %v4695 = vpop.f32.mrf.mxu0
        %v4696 = vadd.f32 0.0, %v4695
        %4697 = vmatmul.bf16.gmra.mxu0 %v4548
        %v4698 = vpop.f32.mrf.mxu0
        %v4699 = vadd.f32 0.0, %v4698
        %v4700 = vpop.f32.mrf.mxu0
        %v4701 = vadd.f32 0.0, %v4700
        %4702 = vmatmul.bf16.gmra.mxu0 %v4549
        %v4703 = vpop.f32.mrf.mxu0
        %v4704 = vadd.f32 0.0, %v4703
        %v4705 = vpop.f32.mrf.mxu0
        %v4706 = vadd.f32 0.0, %v4705
        %4707 = vmatmul.bf16.gmra.mxu0 %v4550
        %v4708 = vpop.f32.mrf.mxu0
        %v4709 = vadd.f32 0.0, %v4708
        %v4710 = vpop.f32.mrf.mxu0
        %v4711 = vadd.f32 0.0, %v4710
        %4712 = vmatmul.bf16.gmra.mxu0 %v4551
        %v4713 = vpop.f32.mrf.mxu0
        %v4714 = vadd.f32 0.0, %v4713
        %v4715 = vpop.f32.mrf.mxu0
        %v4716 = vadd.f32 0.0, %v4715
        %4717 = vmatmul.bf16.gmra.mxu0 %v4552
        %v4718 = vpop.f32.mrf.mxu0
        %v4719 = vadd.f32 0.0, %v4718
        %v4720 = vpop.f32.mrf.mxu0
        %v4721 = vadd.f32 0.0, %v4720
        %4722 = vmatmul.bf16.gmra.mxu0 %v4553
        %v4723 = vpop.f32.mrf.mxu0
        %v4724 = vadd.f32 0.0, %v4723
        %v4725 = vpop.f32.mrf.mxu0
        %v4726 = vadd.f32 0.0, %v4725
        %4727 = vmatmul.bf16.gmra.mxu0 %v4554
        %v4728 = vpop.f32.mrf.mxu0
        %v4729 = vadd.f32 0.0, %v4728
        %v4730 = vpop.f32.mrf.mxu0
        %v4731 = vadd.f32 0.0, %v4730
        %4732 = vmatmul.bf16.gmra.mxu0 %v4555
        %v4733 = vpop.f32.mrf.mxu0
        %v4734 = vadd.f32 0.0, %v4733
        %v4735 = vpop.f32.mrf.mxu0
        %v4736 = vadd.f32 0.0, %v4735
        %4737 = vmatmul.bf16.gmra.mxu0 %v4556
        %v4738 = vpop.f32.mrf.mxu0
        %v4739 = vadd.f32 0.0, %v4738
        %v4740 = vpop.f32.mrf.mxu0
        %v4741 = vadd.f32 0.0, %v4740
        %4742 = vmatmul.bf16.gmra.mxu0 %v4557
        %v4743 = vpop.f32.mrf.mxu0
        %v4744 = vadd.f32 0.0, %v4743
        %v4745 = vpop.f32.mrf.mxu0
        %v4746 = vadd.f32 0.0, %v4745
        %4747 = vmatmul.bf16.gmra.mxu0 %v4558
        %v4748 = vpop.f32.mrf.mxu0
        %v4749 = vadd.f32 0.0, %v4748
        %v4750 = vpop.f32.mrf.mxu0
        %v4751 = vadd.f32 0.0, %v4750
        %4752 = vmatmul.bf16.gmra.mxu0 %v4559
        %v4753 = vpop.f32.mrf.mxu0
        %v4754 = vadd.f32 0.0, %v4753
        %v4755 = vpop.f32.mrf.mxu0
        %v4756 = vadd.f32 0.0, %v4755
        %4757 = vmatmul.bf16.gmra.mxu0 %v4560
        %v4758 = vpop.f32.mrf.mxu0
        %v4759 = vadd.f32 0.0, %v4758
        %v4760 = vpop.f32.mrf.mxu0
        %v4761 = vadd.f32 0.0, %v4760
        %4762 = vdwg.mxu0
        %v4764 = vshrl.u32 %v4578, 16
        %v4766 = vrot.slane %v4764, 7
        %v4767 = vshll.u32 %v4578, 16
        %v4769 = vor.u32 %v4766, %v4767
        %v4770 = vsel %vm1523, %v1527, %v4769
        %v4772 = vshrl.u32 %v4579, 16
        %v4774 = vrot.slane %v4772, 7
        %v4775 = vshll.u32 %v4579, 16
        %v4777 = vor.u32 %v4774, %v4775
        %v4778 = vsel %vm1523, %v4766, %v4777
        %v4780 = vshrl.u32 %v4580, 16
        %v4782 = vrot.slane %v4780, 7
        %v4783 = vshll.u32 %v4580, 16
        %v4785 = vor.u32 %v4782, %v4783
        %v4786 = vsel %vm1523, %v4774, %v4785
        %v4788 = vshrl.u32 %v4581, 16
        %v4790 = vrot.slane %v4788, 7
        %v4791 = vshll.u32 %v4581, 16
        %v4793 = vor.u32 %v4790, %v4791
        %v4794 = vsel %vm1523, %v4782, %v4793
        %v4796 = vshrl.u32 %v4582, 16
        %v4798 = vrot.slane %v4796, 7
        %v4799 = vshll.u32 %v4582, 16
        %v4801 = vor.u32 %v4798, %v4799
        %v4802 = vsel %vm1523, %v4790, %v4801
        %v4804 = vshrl.u32 %v4583, 16
        %v4806 = vrot.slane %v4804, 7
        %v4807 = vshll.u32 %v4583, 16
        %v4809 = vor.u32 %v4806, %v4807
        %v4810 = vsel %vm1523, %v4798, %v4809
        %v4812 = vshrl.u32 %v4584, 16
        %v4814 = vrot.slane %v4812, 7
        %v4815 = vshll.u32 %v4584, 16
        %v4817 = vor.u32 %v4814, %v4815
        %v4818 = vsel %vm1523, %v4806, %v4817
        %v4820 = vshrl.u32 %v4585, 16
        %v4822 = vrot.slane %v4820, 7
        %v4823 = vshll.u32 %v4585, 16
        %v4825 = vor.u32 %v4822, %v4823
        %v4826 = vsel %vm1523, %v4814, %v4825
        %v4828 = vshrl.u32 %v4586, 16
        %v4830 = vrot.slane %v4828, 7
        %v4831 = vshll.u32 %v4586, 16
        %v4833 = vor.u32 %v4830, %v4831
        %v4834 = vsel %vm1523, %v4822, %v4833
        %v4836 = vshrl.u32 %v4587, 16
        %v4838 = vrot.slane %v4836, 7
        %v4839 = vshll.u32 %v4587, 16
        %v4841 = vor.u32 %v4838, %v4839
        %v4842 = vsel %vm1523, %v4830, %v4841
        %v4844 = vshrl.u32 %v4588, 16
        %v4846 = vrot.slane %v4844, 7
        %v4847 = vshll.u32 %v4588, 16
        %v4849 = vor.u32 %v4846, %v4847
        %v4850 = vsel %vm1523, %v4838, %v4849
        %v4852 = vshrl.u32 %v4589, 16
        %v4854 = vrot.slane %v4852, 7
        %v4855 = vshll.u32 %v4589, 16
        %v4857 = vor.u32 %v4854, %v4855
        %v4858 = vsel %vm1523, %v4846, %v4857
        %v4860 = vshrl.u32 %v4590, 16
        %v4862 = vrot.slane %v4860, 7
        %v4863 = vshll.u32 %v4590, 16
        %v4865 = vor.u32 %v4862, %v4863
        %v4866 = vsel %vm1523, %v4854, %v4865
        %v4868 = vshrl.u32 %v4591, 16
        %v4870 = vrot.slane %v4868, 7
        %v4871 = vshll.u32 %v4591, 16
        %v4873 = vor.u32 %v4870, %v4871
        %v4874 = vsel %vm1523, %v4862, %v4873
        %v4876 = vshrl.u32 %v4592, 16
        %v4878 = vrot.slane %v4876, 7
        %v4879 = vshll.u32 %v4592, 16
        %v4881 = vor.u32 %v4878, %v4879
        %v4882 = vsel %vm1523, %v4870, %v4881
        %v4914 = vunpack.c.l.b16 %v4593
        %v4915 = vunpack.c.l.b16 %v4594
        %v4916 = vunpack.c.l.b16 %v4595
        %v4917 = vunpack.c.l.b16 %v4596
        %v4918 = vunpack.c.l.b16 %v4597
        %v4919 = vunpack.c.l.b16 %v4598
        %v4920 = vunpack.c.l.b16 %v4599
        %v4921 = vunpack.c.l.b16 %v4600
        %v4922 = vunpack.c.l.b16 %v4601
        %v4923 = vunpack.c.l.b16 %v4602
        %v4924 = vunpack.c.l.b16 %v4603
        %v4925 = vunpack.c.l.b16 %v4604
        %v4926 = vunpack.c.l.b16 %v4605
        %v4927 = vunpack.c.l.b16 %v4606
        %v4928 = vunpack.c.l.b16 %v4607
        %v4929 = vunpack.c.l.b16 %v4608
        %v4930 = vpack.c.b16 %v4915, %v4914
        %v4931 = vpack.c.b16 %v4917, %v4916
        %v4932 = vpack.c.b16 %v4919, %v4918
        %v4933 = vpack.c.b16 %v4921, %v4920
        %v4934 = vpack.c.b16 %v4923, %v4922
        %v4935 = vpack.c.b16 %v4925, %v4924
        %v4936 = vpack.c.b16 %v4927, %v4926
        %v4937 = vpack.c.b16 %v4929, %v4928
        %4946 = vmatpush.bf16.msra.mxu0 %v4937
        %4947 = vmatpush.bf16.msra.mxu0 %v4936
        %4948 = vmatpush.bf16.msra.mxu0 %v4935
        %4949 = vmatpush.bf16.msra.mxu0 %v4934
        %4950 = vmatpush.bf16.msra.mxu0 %v4933
        %4951 = vmatpush.bf16.msra.mxu0 %v4932
        %4952 = vmatpush.bf16.msra.mxu0 %v4931
        %4953 = vmatpush.bf16.msra.mxu0 %v4930
        %4954 = vmatmul.bf16.gmra.mxu0 %v1531
        %v4955 = vpop.f32.mrf.mxu0
        %v4956 = vadd.f32 %v4684, %v4955
        %v4957 = vpop.f32.mrf.mxu0
        %v4958 = vadd.f32 %v4686, %v4957
        %4959 = vmatmul.bf16.gmra.mxu0 %v4770
        %v4960 = vpop.f32.mrf.mxu0
        %v4961 = vadd.f32 %v4689, %v4960
        %v4962 = vpop.f32.mrf.mxu0
        %v4963 = vadd.f32 %v4691, %v4962
        %4964 = vmatmul.bf16.gmra.mxu0 %v4778
        %v4965 = vpop.f32.mrf.mxu0
        %v4966 = vadd.f32 %v4694, %v4965
        %v4967 = vpop.f32.mrf.mxu0
        %v4968 = vadd.f32 %v4696, %v4967
        %4969 = vmatmul.bf16.gmra.mxu0 %v4786
        %v4970 = vpop.f32.mrf.mxu0
        %v4971 = vadd.f32 %v4699, %v4970
        %v4972 = vpop.f32.mrf.mxu0
        %v4973 = vadd.f32 %v4701, %v4972
        %4974 = vmatmul.bf16.gmra.mxu0 %v4794
        %v4975 = vpop.f32.mrf.mxu0
        %v4976 = vadd.f32 %v4704, %v4975
        %v4977 = vpop.f32.mrf.mxu0
        %v4978 = vadd.f32 %v4706, %v4977
        %4979 = vmatmul.bf16.gmra.mxu0 %v4802
        %v4980 = vpop.f32.mrf.mxu0
        %v4981 = vadd.f32 %v4709, %v4980
        %v4982 = vpop.f32.mrf.mxu0
        %v4983 = vadd.f32 %v4711, %v4982
        %4984 = vmatmul.bf16.gmra.mxu0 %v4810
        %v4985 = vpop.f32.mrf.mxu0
        %v4986 = vadd.f32 %v4714, %v4985
        %v4987 = vpop.f32.mrf.mxu0
        %v4988 = vadd.f32 %v4716, %v4987
        %4989 = vmatmul.bf16.gmra.mxu0 %v4818
        %v4990 = vpop.f32.mrf.mxu0
        %v4991 = vadd.f32 %v4719, %v4990
        %v4992 = vpop.f32.mrf.mxu0
        %v4993 = vadd.f32 %v4721, %v4992
        %4994 = vmatmul.bf16.gmra.mxu0 %v4826
        %v4995 = vpop.f32.mrf.mxu0
        %v4996 = vadd.f32 %v4724, %v4995
        %v4997 = vpop.f32.mrf.mxu0
        %v4998 = vadd.f32 %v4726, %v4997
        %4999 = vmatmul.bf16.gmra.mxu0 %v4834
        %v5000 = vpop.f32.mrf.mxu0
        %v5001 = vadd.f32 %v4729, %v5000
        %v5002 = vpop.f32.mrf.mxu0
        %v5003 = vadd.f32 %v4731, %v5002
        %5004 = vmatmul.bf16.gmra.mxu0 %v4842
        %v5005 = vpop.f32.mrf.mxu0
        %v5006 = vadd.f32 %v4734, %v5005
        %v5007 = vpop.f32.mrf.mxu0
        %v5008 = vadd.f32 %v4736, %v5007
        %5009 = vmatmul.bf16.gmra.mxu0 %v4850
        %v5010 = vpop.f32.mrf.mxu0
        %v5011 = vadd.f32 %v4739, %v5010
        %v5012 = vpop.f32.mrf.mxu0
        %v5013 = vadd.f32 %v4741, %v5012
        %5014 = vmatmul.bf16.gmra.mxu0 %v4858
        %v5015 = vpop.f32.mrf.mxu0
        %v5016 = vadd.f32 %v4744, %v5015
        %v5017 = vpop.f32.mrf.mxu0
        %v5018 = vadd.f32 %v4746, %v5017
        %5019 = vmatmul.bf16.gmra.mxu0 %v4866
        %v5020 = vpop.f32.mrf.mxu0
        %v5021 = vadd.f32 %v4749, %v5020
        %v5022 = vpop.f32.mrf.mxu0
        %v5023 = vadd.f32 %v4751, %v5022
        %5024 = vmatmul.bf16.gmra.mxu0 %v4874
        %v5025 = vpop.f32.mrf.mxu0
        %v5026 = vadd.f32 %v4754, %v5025
        %v5027 = vpop.f32.mrf.mxu0
        %v5028 = vadd.f32 %v4756, %v5027
        %5029 = vmatmul.bf16.gmra.mxu0 %v4882
        %v5030 = vpop.f32.mrf.mxu0
        %v5031 = vadd.f32 %v4759, %v5030
        %v5032 = vpop.f32.mrf.mxu0
        %v5033 = vadd.f32 %v4761, %v5032
        %5034 = vdwg.mxu0
        %v5035 = vsel %vm2111, %v4546, 0
        %v5036 = vsel %vm2118, %v4547, 0
        %v5037 = vsel %vm2125, %v4548, 0
        %v5038 = vsel %vm2132, %v4549, 0
        %v5039 = vsel %vm2139, %v4550, 0
        %v5040 = vsel %vm2146, %v4551, 0
        %v5041 = vsel %vm2153, %v4552, 0
        %v5042 = vsel %vm2160, %v4553, 0
        %v5043 = vsel %vm2167, %v4554, 0
        %v5044 = vsel %vm2174, %v4555, 0
        %v5045 = vsel %vm2181, %v4556, 0
        %v5046 = vsel %vm2188, %v4557, 0
        %v5047 = vsel %vm2195, %v4558, 0
        %v5048 = vsel %vm2202, %v4559, 0
        %v5049 = vsel %vm2209, %v4560, 0
        %v5050 = vsel %vm2216, %v4561, 0
        %s5051 = scalar_lea.vmem [#allocation7], 128
        %v5052 = vld [vmem:[%s5051] sm:$0xf]
        %v5053 = vld [vmem:[%s5051 + $0x4] sm:$0xf]
        %v5054 = vld [vmem:[%s5051 + $0x8] sm:$0xf]
        %v5055 = vld [vmem:[%s5051 + $0xc] sm:$0xf]
        %v5056 = vld [vmem:[%s5051 + $0x10] sm:$0xf]
        %v5057 = vld [vmem:[%s5051 + $0x14] sm:$0xf]
        %v5058 = vld [vmem:[%s5051 + $0x18] sm:$0xf]
        %v5059 = vld [vmem:[%s5051 + $0x1c] sm:$0xf]
        %v5060 = vld [vmem:[%s5051 + $0x20] sm:$0xf]
        %v5061 = vld [vmem:[%s5051 + $0x24] sm:$0xf]
        %v5062 = vld [vmem:[%s5051 + $0x28] sm:$0xf]
        %v5063 = vld [vmem:[%s5051 + $0x2c] sm:$0xf]
        %v5064 = vld [vmem:[%s5051 + $0x30] sm:$0xf]
        %v5065 = vld [vmem:[%s5051 + $0x34] sm:$0xf]
        %v5066 = vld [vmem:[%s5051 + $0x38] sm:$0xf]
        %v5067 = vld [vmem:[%s5051 + $0x3c] sm:$0xf]
        %v5069 = vshll.u32 %v5035, 16
        %v5071 = vrot.slane %v5069, 1
        %v5072 = vsel %vm1113, %v2251, %v5071
        %v5073 = vshrl.u32 %v5035, 16
        %v5075 = vor.u32 %v5073, %v5071
        %v5077 = vshll.u32 %v5036, 16
        %v5079 = vrot.slane %v5077, 1
        %v5080 = vsel %vm1113, %v5075, %v5079
        %v5081 = vshrl.u32 %v5036, 16
        %v5083 = vor.u32 %v5081, %v5079
        %v5085 = vshll.u32 %v5037, 16
        %v5087 = vrot.slane %v5085, 1
        %v5088 = vsel %vm1113, %v5083, %v5087
        %v5089 = vshrl.u32 %v5037, 16
        %v5091 = vor.u32 %v5089, %v5087
        %v5093 = vshll.u32 %v5038, 16
        %v5095 = vrot.slane %v5093, 1
        %v5096 = vsel %vm1113, %v5091, %v5095
        %v5097 = vshrl.u32 %v5038, 16
        %v5099 = vor.u32 %v5097, %v5095
        %v5101 = vshll.u32 %v5039, 16
        %v5103 = vrot.slane %v5101, 1
        %v5104 = vsel %vm1113, %v5099, %v5103
        %v5105 = vshrl.u32 %v5039, 16
        %v5107 = vor.u32 %v5105, %v5103
        %v5109 = vshll.u32 %v5040, 16
        %v5111 = vrot.slane %v5109, 1
        %v5112 = vsel %vm1113, %v5107, %v5111
        %v5113 = vshrl.u32 %v5040, 16
        %v5115 = vor.u32 %v5113, %v5111
        %v5117 = vshll.u32 %v5041, 16
        %v5119 = vrot.slane %v5117, 1
        %v5120 = vsel %vm1113, %v5115, %v5119
        %v5121 = vshrl.u32 %v5041, 16
        %v5123 = vor.u32 %v5121, %v5119
        %v5125 = vshll.u32 %v5042, 16
        %v5127 = vrot.slane %v5125, 1
        %v5128 = vsel %vm1113, %v5123, %v5127
        %v5129 = vshrl.u32 %v5042, 16
        %v5131 = vor.u32 %v5129, %v5127
        %v5133 = vshll.u32 %v5043, 16
        %v5135 = vrot.slane %v5133, 1
        %v5136 = vsel %vm1113, %v5131, %v5135
        %v5137 = vshrl.u32 %v5043, 16
        %v5139 = vor.u32 %v5137, %v5135
        %v5141 = vshll.u32 %v5044, 16
        %v5143 = vrot.slane %v5141, 1
        %v5144 = vsel %vm1113, %v5139, %v5143
        %v5145 = vshrl.u32 %v5044, 16
        %v5147 = vor.u32 %v5145, %v5143
        %v5149 = vshll.u32 %v5045, 16
        %v5151 = vrot.slane %v5149, 1
        %v5152 = vsel %vm1113, %v5147, %v5151
        %v5153 = vshrl.u32 %v5045, 16
        %v5155 = vor.u32 %v5153, %v5151
        %v5157 = vshll.u32 %v5046, 16
        %v5159 = vrot.slane %v5157, 1
        %v5160 = vsel %vm1113, %v5155, %v5159
        %v5161 = vshrl.u32 %v5046, 16
        %v5163 = vor.u32 %v5161, %v5159
        %v5165 = vshll.u32 %v5047, 16
        %v5167 = vrot.slane %v5165, 1
        %v5168 = vsel %vm1113, %v5163, %v5167
        %v5169 = vshrl.u32 %v5047, 16
        %v5171 = vor.u32 %v5169, %v5167
        %v5173 = vshll.u32 %v5048, 16
        %v5175 = vrot.slane %v5173, 1
        %v5176 = vsel %vm1113, %v5171, %v5175
        %v5177 = vshrl.u32 %v5048, 16
        %v5179 = vor.u32 %v5177, %v5175
        %v5181 = vshll.u32 %v5049, 16
        %v5183 = vrot.slane %v5181, 1
        %v5184 = vsel %vm1113, %v5179, %v5183
        %v5185 = vshrl.u32 %v5049, 16
        %v5187 = vor.u32 %v5185, %v5183
        %v5189 = vshll.u32 %v5050, 16
        %v5191 = vrot.slane %v5189, 1
        %v5192 = vsel %vm1113, %v5187, %v5191
        %v5225 = vunpack.c.l.b16 %v5052
        %v5226 = vunpack.c.l.b16 %v5053
        %v5227 = vunpack.c.l.b16 %v5054
        %v5228 = vunpack.c.l.b16 %v5055
        %v5229 = vunpack.c.l.b16 %v5056
        %v5230 = vunpack.c.l.b16 %v5057
        %v5231 = vunpack.c.l.b16 %v5058
        %v5232 = vunpack.c.l.b16 %v5059
        %v5233 = vunpack.c.l.b16 %v5060
        %v5234 = vunpack.c.l.b16 %v5061
        %v5235 = vunpack.c.l.b16 %v5062
        %v5236 = vunpack.c.l.b16 %v5063
        %v5237 = vunpack.c.l.b16 %v5064
        %v5238 = vunpack.c.l.b16 %v5065
        %v5239 = vunpack.c.l.b16 %v5066
        %v5240 = vunpack.c.l.b16 %v5067
        %v5241 = vpack.c.b16 %v5226, %v5225
        %v5242 = vpack.c.b16 %v5228, %v5227
        %v5243 = vpack.c.b16 %v5230, %v5229
        %v5244 = vpack.c.b16 %v5232, %v5231
        %v5245 = vpack.c.b16 %v5234, %v5233
        %v5246 = vpack.c.b16 %v5236, %v5235
        %v5247 = vpack.c.b16 %v5238, %v5237
        %v5248 = vpack.c.b16 %v5240, %v5239
        %5257 = vmatpush.bf16.msra.mxu0 %v5248
        %5258 = vmatpush.bf16.msra.mxu0 %v5247
        %5259 = vmatpush.bf16.msra.mxu0 %v5246
        %5260 = vmatpush.bf16.msra.mxu0 %v5245
        %5261 = vmatpush.bf16.msra.mxu0 %v5244
        %5262 = vmatpush.bf16.msra.mxu0 %v5243
        %5263 = vmatpush.bf16.msra.mxu0 %v5242
        %5264 = vmatpush.bf16.msra.mxu0 %v5241
        %5265 = vmatmul.bf16.gmra.mxu0 %v5072
        %v5266 = vpop.f32.mrf.mxu0
        %v5267 = vadd.f32 0.0, %v5266
        %v5268 = vpop.f32.mrf.mxu0
        %v5269 = vadd.f32 0.0, %v5268
        %5270 = vmatmul.bf16.gmra.mxu0 %v5080
        %v5271 = vpop.f32.mrf.mxu0
        %v5272 = vadd.f32 0.0, %v5271
        %v5273 = vpop.f32.mrf.mxu0
        %v5274 = vadd.f32 0.0, %v5273
        %5275 = vmatmul.bf16.gmra.mxu0 %v5088
        %v5276 = vpop.f32.mrf.mxu0
        %v5277 = vadd.f32 0.0, %v5276
        %v5278 = vpop.f32.mrf.mxu0
        %v5279 = vadd.f32 0.0, %v5278
        %5280 = vmatmul.bf16.gmra.mxu0 %v5096
        %v5281 = vpop.f32.mrf.mxu0
        %v5282 = vadd.f32 0.0, %v5281
        %v5283 = vpop.f32.mrf.mxu0
        %v5284 = vadd.f32 0.0, %v5283
        %5285 = vmatmul.bf16.gmra.mxu0 %v5104
        %v5286 = vpop.f32.mrf.mxu0
        %v5287 = vadd.f32 0.0, %v5286
        %v5288 = vpop.f32.mrf.mxu0
        %v5289 = vadd.f32 0.0, %v5288
        %5290 = vmatmul.bf16.gmra.mxu0 %v5112
        %v5291 = vpop.f32.mrf.mxu0
        %v5292 = vadd.f32 0.0, %v5291
        %v5293 = vpop.f32.mrf.mxu0
        %v5294 = vadd.f32 0.0, %v5293
        %5295 = vmatmul.bf16.gmra.mxu0 %v5120
        %v5296 = vpop.f32.mrf.mxu0
        %v5297 = vadd.f32 0.0, %v5296
        %v5298 = vpop.f32.mrf.mxu0
        %v5299 = vadd.f32 0.0, %v5298
        %5300 = vmatmul.bf16.gmra.mxu0 %v5128
        %v5301 = vpop.f32.mrf.mxu0
        %v5302 = vadd.f32 0.0, %v5301
        %v5303 = vpop.f32.mrf.mxu0
        %v5304 = vadd.f32 0.0, %v5303
        %5305 = vmatmul.bf16.gmra.mxu0 %v5136
        %v5306 = vpop.f32.mrf.mxu0
        %v5307 = vadd.f32 0.0, %v5306
        %v5308 = vpop.f32.mrf.mxu0
        %v5309 = vadd.f32 0.0, %v5308
        %5310 = vmatmul.bf16.gmra.mxu0 %v5144
        %v5311 = vpop.f32.mrf.mxu0
        %v5312 = vadd.f32 0.0, %v5311
        %v5313 = vpop.f32.mrf.mxu0
        %v5314 = vadd.f32 0.0, %v5313
        %5315 = vmatmul.bf16.gmra.mxu0 %v5152
        %v5316 = vpop.f32.mrf.mxu0
        %v5317 = vadd.f32 0.0, %v5316
        %v5318 = vpop.f32.mrf.mxu0
        %v5319 = vadd.f32 0.0, %v5318
        %5320 = vmatmul.bf16.gmra.mxu0 %v5160
        %v5321 = vpop.f32.mrf.mxu0
        %v5322 = vadd.f32 0.0, %v5321
        %v5323 = vpop.f32.mrf.mxu0
        %v5324 = vadd.f32 0.0, %v5323
        %5325 = vmatmul.bf16.gmra.mxu0 %v5168
        %v5326 = vpop.f32.mrf.mxu0
        %v5327 = vadd.f32 0.0, %v5326
        %v5328 = vpop.f32.mrf.mxu0
        %v5329 = vadd.f32 0.0, %v5328
        %5330 = vmatmul.bf16.gmra.mxu0 %v5176
        %v5331 = vpop.f32.mrf.mxu0
        %v5332 = vadd.f32 0.0, %v5331
        %v5333 = vpop.f32.mrf.mxu0
        %v5334 = vadd.f32 0.0, %v5333
        %5335 = vmatmul.bf16.gmra.mxu0 %v5184
        %v5336 = vpop.f32.mrf.mxu0
        %v5337 = vadd.f32 0.0, %v5336
        %v5338 = vpop.f32.mrf.mxu0
        %v5339 = vadd.f32 0.0, %v5338
        %5340 = vmatmul.bf16.gmra.mxu0 %v5192
        %v5341 = vpop.f32.mrf.mxu0
        %v5342 = vadd.f32 0.0, %v5341
        %v5343 = vpop.f32.mrf.mxu0
        %v5344 = vadd.f32 0.0, %v5343
        %5345 = vdwg.mxu0
        %v5346 = vadd.f32 %v4956, %v5267
        %v5347 = vadd.f32 %v4958, %v5269
        %v5348 = vadd.f32 %v4961, %v5272
        %v5349 = vadd.f32 %v4963, %v5274
        %v5350 = vadd.f32 %v4966, %v5277
        %v5351 = vadd.f32 %v4968, %v5279
        %v5352 = vadd.f32 %v4971, %v5282
        %v5353 = vadd.f32 %v4973, %v5284
        %v5354 = vadd.f32 %v4976, %v5287
        %v5355 = vadd.f32 %v4978, %v5289
        %v5356 = vadd.f32 %v4981, %v5292
        %v5357 = vadd.f32 %v4983, %v5294
        %v5358 = vadd.f32 %v4986, %v5297
        %v5359 = vadd.f32 %v4988, %v5299
        %v5360 = vadd.f32 %v4991, %v5302
        %v5361 = vadd.f32 %v4993, %v5304
        %v5362 = vadd.f32 %v4996, %v5307
        %v5363 = vadd.f32 %v4998, %v5309
        %v5364 = vadd.f32 %v5001, %v5312
        %v5365 = vadd.f32 %v5003, %v5314
        %v5366 = vadd.f32 %v5006, %v5317
        %v5367 = vadd.f32 %v5008, %v5319
        %v5368 = vadd.f32 %v5011, %v5322
        %v5369 = vadd.f32 %v5013, %v5324
        %v5370 = vadd.f32 %v5016, %v5327
        %v5371 = vadd.f32 %v5018, %v5329
        %v5372 = vadd.f32 %v5021, %v5332
        %v5373 = vadd.f32 %v5023, %v5334
        %v5374 = vadd.f32 %v5026, %v5337
        %v5375 = vadd.f32 %v5028, %v5339
        %v5376 = vadd.f32 %v5031, %v5342
        %v5377 = vadd.f32 %v5033, %v5344
        %v5378 = vsel %vm2583, %v4546, 0
        %v5379 = vsel %vm1239, %v4547, 0
        %v5380 = vsel %vm1246, %v4548, 0
        %v5381 = vsel %vm1253, %v4549, 0
        %v5382 = vsel %vm1260, %v4550, 0
        %v5383 = vsel %vm1267, %v4551, 0
        %v5384 = vsel %vm1274, %v4552, 0
        %v5385 = vsel %vm1281, %v4553, 0
        %v5386 = vsel %vm1288, %v4554, 0
        %v5387 = vsel %vm1295, %v4555, 0
        %v5388 = vsel %vm1302, %v4556, 0
        %v5389 = vsel %vm1309, %v4557, 0
        %v5390 = vsel %vm1316, %v4558, 0
        %v5391 = vsel %vm1323, %v4559, 0
        %v5392 = vsel %vm1330, %v4560, 0
        %v5393 = vsel %vm1337, %v4561, 0
        %s5394 = scalar_lea.vmem [#allocation7], 192
        %v5395 = vld [vmem:[%s5394] sm:$0xf]
        %v5396 = vld [vmem:[%s5394 + $0x4] sm:$0xf]
        %v5397 = vld [vmem:[%s5394 + $0x8] sm:$0xf]
        %v5398 = vld [vmem:[%s5394 + $0xc] sm:$0xf]
        %v5399 = vld [vmem:[%s5394 + $0x10] sm:$0xf]
        %v5400 = vld [vmem:[%s5394 + $0x14] sm:$0xf]
        %v5401 = vld [vmem:[%s5394 + $0x18] sm:$0xf]
        %v5402 = vld [vmem:[%s5394 + $0x1c] sm:$0xf]
        %v5403 = vld [vmem:[%s5394 + $0x20] sm:$0xf]
        %v5404 = vld [vmem:[%s5394 + $0x24] sm:$0xf]
        %v5405 = vld [vmem:[%s5394 + $0x28] sm:$0xf]
        %v5406 = vld [vmem:[%s5394 + $0x2c] sm:$0xf]
        %v5407 = vld [vmem:[%s5394 + $0x30] sm:$0xf]
        %v5408 = vld [vmem:[%s5394 + $0x34] sm:$0xf]
        %v5409 = vld [vmem:[%s5394 + $0x38] sm:$0xf]
        %v5410 = vld [vmem:[%s5394 + $0x3c] sm:$0xf]
        %v5412 = vshrl.u32 %v5378, 16
        %v5414 = vrot.slane %v5412, 7
        %v5415 = vshll.u32 %v5378, 16
        %v5417 = vor.u32 %v5414, %v5415
        %v5418 = vsel %vm1523, %v1527, %v5417
        %v5420 = vshrl.u32 %v5379, 16
        %v5422 = vrot.slane %v5420, 7
        %v5423 = vshll.u32 %v5379, 16
        %v5425 = vor.u32 %v5422, %v5423
        %v5426 = vsel %vm1523, %v5414, %v5425
        %v5428 = vshrl.u32 %v5380, 16
        %v5430 = vrot.slane %v5428, 7
        %v5431 = vshll.u32 %v5380, 16
        %v5433 = vor.u32 %v5430, %v5431
        %v5434 = vsel %vm1523, %v5422, %v5433
        %v5436 = vshrl.u32 %v5381, 16
        %v5438 = vrot.slane %v5436, 7
        %v5439 = vshll.u32 %v5381, 16
        %v5441 = vor.u32 %v5438, %v5439
        %v5442 = vsel %vm1523, %v5430, %v5441
        %v5444 = vshrl.u32 %v5382, 16
        %v5446 = vrot.slane %v5444, 7
        %v5447 = vshll.u32 %v5382, 16
        %v5449 = vor.u32 %v5446, %v5447
        %v5450 = vsel %vm1523, %v5438, %v5449
        %v5452 = vshrl.u32 %v5383, 16
        %v5454 = vrot.slane %v5452, 7
        %v5455 = vshll.u32 %v5383, 16
        %v5457 = vor.u32 %v5454, %v5455
        %v5458 = vsel %vm1523, %v5446, %v5457
        %v5460 = vshrl.u32 %v5384, 16
        %v5462 = vrot.slane %v5460, 7
        %v5463 = vshll.u32 %v5384, 16
        %v5465 = vor.u32 %v5462, %v5463
        %v5466 = vsel %vm1523, %v5454, %v5465
        %v5468 = vshrl.u32 %v5385, 16
        %v5470 = vrot.slane %v5468, 7
        %v5471 = vshll.u32 %v5385, 16
        %v5473 = vor.u32 %v5470, %v5471
        %v5474 = vsel %vm1523, %v5462, %v5473
        %v5476 = vshrl.u32 %v5386, 16
        %v5478 = vrot.slane %v5476, 7
        %v5479 = vshll.u32 %v5386, 16
        %v5481 = vor.u32 %v5478, %v5479
        %v5482 = vsel %vm1523, %v5470, %v5481
        %v5484 = vshrl.u32 %v5387, 16
        %v5486 = vrot.slane %v5484, 7
        %v5487 = vshll.u32 %v5387, 16
        %v5489 = vor.u32 %v5486, %v5487
        %v5490 = vsel %vm1523, %v5478, %v5489
        %v5492 = vshrl.u32 %v5388, 16
        %v5494 = vrot.slane %v5492, 7
        %v5495 = vshll.u32 %v5388, 16
        %v5497 = vor.u32 %v5494, %v5495
        %v5498 = vsel %vm1523, %v5486, %v5497
        %v5500 = vshrl.u32 %v5389, 16
        %v5502 = vrot.slane %v5500, 7
        %v5503 = vshll.u32 %v5389, 16
        %v5505 = vor.u32 %v5502, %v5503
        %v5506 = vsel %vm1523, %v5494, %v5505
        %v5508 = vshrl.u32 %v5390, 16
        %v5510 = vrot.slane %v5508, 7
        %v5511 = vshll.u32 %v5390, 16
        %v5513 = vor.u32 %v5510, %v5511
        %v5514 = vsel %vm1523, %v5502, %v5513
        %v5516 = vshrl.u32 %v5391, 16
        %v5518 = vrot.slane %v5516, 7
        %v5519 = vshll.u32 %v5391, 16
        %v5521 = vor.u32 %v5518, %v5519
        %v5522 = vsel %vm1523, %v5510, %v5521
        %v5524 = vshrl.u32 %v5392, 16
        %v5526 = vrot.slane %v5524, 7
        %v5527 = vshll.u32 %v5392, 16
        %v5529 = vor.u32 %v5526, %v5527
        %v5530 = vsel %vm1523, %v5518, %v5529
        %v5532 = vshrl.u32 %v5393, 16
        %v5534 = vrot.slane %v5532, 7
        %v5535 = vshll.u32 %v5393, 16
        %v5537 = vor.u32 %v5534, %v5535
        %v5538 = vsel %vm1523, %v5526, %v5537
        %v5571 = vunpack.c.l.b16 %v5395
        %v5572 = vunpack.c.l.b16 %v5396
        %v5573 = vunpack.c.l.b16 %v5397
        %v5574 = vunpack.c.l.b16 %v5398
        %v5575 = vunpack.c.l.b16 %v5399
        %v5576 = vunpack.c.l.b16 %v5400
        %v5577 = vunpack.c.l.b16 %v5401
        %v5578 = vunpack.c.l.b16 %v5402
        %v5579 = vunpack.c.l.b16 %v5403
        %v5580 = vunpack.c.l.b16 %v5404
        %v5581 = vunpack.c.l.b16 %v5405
        %v5582 = vunpack.c.l.b16 %v5406
        %v5583 = vunpack.c.l.b16 %v5407
        %v5584 = vunpack.c.l.b16 %v5408
        %v5585 = vunpack.c.l.b16 %v5409
        %v5586 = vunpack.c.l.b16 %v5410
        %v5587 = vpack.c.b16 %v5572, %v5571
        %v5588 = vpack.c.b16 %v5574, %v5573
        %v5589 = vpack.c.b16 %v5576, %v5575
        %v5590 = vpack.c.b16 %v5578, %v5577
        %v5591 = vpack.c.b16 %v5580, %v5579
        %v5592 = vpack.c.b16 %v5582, %v5581
        %v5593 = vpack.c.b16 %v5584, %v5583
        %v5594 = vpack.c.b16 %v5586, %v5585
        %5603 = vmatpush.bf16.msra.mxu0 %v5594
        %5604 = vmatpush.bf16.msra.mxu0 %v5593
        %5605 = vmatpush.bf16.msra.mxu0 %v5592
        %5606 = vmatpush.bf16.msra.mxu0 %v5591
        %5607 = vmatpush.bf16.msra.mxu0 %v5590
        %5608 = vmatpush.bf16.msra.mxu0 %v5589
        %5609 = vmatpush.bf16.msra.mxu0 %v5588
        %5610 = vmatpush.bf16.msra.mxu0 %v5587
        %5611 = vmatmul.bf16.gmra.mxu0 %v5418
        %v5612 = vpop.f32.mrf.mxu0
        %v5613 = vadd.f32 0.0, %v5612
        %v5614 = vpop.f32.mrf.mxu0
        %v5615 = vadd.f32 0.0, %v5614
        %5616 = vmatmul.bf16.gmra.mxu0 %v5426
        %v5617 = vpop.f32.mrf.mxu0
        %v5618 = vadd.f32 0.0, %v5617
        %v5619 = vpop.f32.mrf.mxu0
        %v5620 = vadd.f32 0.0, %v5619
        %5621 = vmatmul.bf16.gmra.mxu0 %v5434
        %v5622 = vpop.f32.mrf.mxu0
        %v5623 = vadd.f32 0.0, %v5622
        %v5624 = vpop.f32.mrf.mxu0
        %v5625 = vadd.f32 0.0, %v5624
        %5626 = vmatmul.bf16.gmra.mxu0 %v5442
        %v5627 = vpop.f32.mrf.mxu0
        %v5628 = vadd.f32 0.0, %v5627
        %v5629 = vpop.f32.mrf.mxu0
        %v5630 = vadd.f32 0.0, %v5629
        %5631 = vmatmul.bf16.gmra.mxu0 %v5450
        %v5632 = vpop.f32.mrf.mxu0
        %v5633 = vadd.f32 0.0, %v5632
        %v5634 = vpop.f32.mrf.mxu0
        %v5635 = vadd.f32 0.0, %v5634
        %5636 = vmatmul.bf16.gmra.mxu0 %v5458
        %v5637 = vpop.f32.mrf.mxu0
        %v5638 = vadd.f32 0.0, %v5637
        %v5639 = vpop.f32.mrf.mxu0
        %v5640 = vadd.f32 0.0, %v5639
        %5641 = vmatmul.bf16.gmra.mxu0 %v5466
        %v5642 = vpop.f32.mrf.mxu0
        %v5643 = vadd.f32 0.0, %v5642
        %v5644 = vpop.f32.mrf.mxu0
        %v5645 = vadd.f32 0.0, %v5644
        %5646 = vmatmul.bf16.gmra.mxu0 %v5474
        %v5647 = vpop.f32.mrf.mxu0
        %v5648 = vadd.f32 0.0, %v5647
        %v5649 = vpop.f32.mrf.mxu0
        %v5650 = vadd.f32 0.0, %v5649
        %5651 = vmatmul.bf16.gmra.mxu0 %v5482
        %v5652 = vpop.f32.mrf.mxu0
        %v5653 = vadd.f32 0.0, %v5652
        %v5654 = vpop.f32.mrf.mxu0
        %v5655 = vadd.f32 0.0, %v5654
        %5656 = vmatmul.bf16.gmra.mxu0 %v5490
        %v5657 = vpop.f32.mrf.mxu0
        %v5658 = vadd.f32 0.0, %v5657
        %v5659 = vpop.f32.mrf.mxu0
        %v5660 = vadd.f32 0.0, %v5659
        %5661 = vmatmul.bf16.gmra.mxu0 %v5498
        %v5662 = vpop.f32.mrf.mxu0
        %v5663 = vadd.f32 0.0, %v5662
        %v5664 = vpop.f32.mrf.mxu0
        %v5665 = vadd.f32 0.0, %v5664
        %5666 = vmatmul.bf16.gmra.mxu0 %v5506
        %v5667 = vpop.f32.mrf.mxu0
        %v5668 = vadd.f32 0.0, %v5667
        %v5669 = vpop.f32.mrf.mxu0
        %v5670 = vadd.f32 0.0, %v5669
        %5671 = vmatmul.bf16.gmra.mxu0 %v5514
        %v5672 = vpop.f32.mrf.mxu0
        %v5673 = vadd.f32 0.0, %v5672
        %v5674 = vpop.f32.mrf.mxu0
        %v5675 = vadd.f32 0.0, %v5674
        %5676 = vmatmul.bf16.gmra.mxu0 %v5522
        %v5677 = vpop.f32.mrf.mxu0
        %v5678 = vadd.f32 0.0, %v5677
        %v5679 = vpop.f32.mrf.mxu0
        %v5680 = vadd.f32 0.0, %v5679
        %5681 = vmatmul.bf16.gmra.mxu0 %v5530
        %v5682 = vpop.f32.mrf.mxu0
        %v5683 = vadd.f32 0.0, %v5682
        %v5684 = vpop.f32.mrf.mxu0
        %v5685 = vadd.f32 0.0, %v5684
        %5686 = vmatmul.bf16.gmra.mxu0 %v5538
        %v5687 = vpop.f32.mrf.mxu0
        %v5688 = vadd.f32 0.0, %v5687
        %v5689 = vpop.f32.mrf.mxu0
        %v5690 = vadd.f32 0.0, %v5689
        %5691 = vdwg.mxu0
        %v5692 = vadd.f32 %v5346, %v5613
        %v5693 = vadd.f32 %v5347, %v5615
        %v5694 = vadd.f32 %v5348, %v5618
        %v5695 = vadd.f32 %v5349, %v5620
        %v5696 = vadd.f32 %v5350, %v5623
        %v5697 = vadd.f32 %v5351, %v5625
        %v5698 = vadd.f32 %v5352, %v5628
        %v5699 = vadd.f32 %v5353, %v5630
        %v5700 = vadd.f32 %v5354, %v5633
        %v5701 = vadd.f32 %v5355, %v5635
        %v5702 = vadd.f32 %v5356, %v5638
        %v5703 = vadd.f32 %v5357, %v5640
        %v5704 = vadd.f32 %v5358, %v5643
        %v5705 = vadd.f32 %v5359, %v5645
        %v5706 = vadd.f32 %v5360, %v5648
        %v5707 = vadd.f32 %v5361, %v5650
        %v5708 = vadd.f32 %v5362, %v5653
        %v5709 = vadd.f32 %v5363, %v5655
        %v5710 = vadd.f32 %v5364, %v5658
        %v5711 = vadd.f32 %v5365, %v5660
        %v5712 = vadd.f32 %v5366, %v5663
        %v5713 = vadd.f32 %v5367, %v5665
        %v5714 = vadd.f32 %v5368, %v5668
        %v5715 = vadd.f32 %v5369, %v5670
        %v5716 = vadd.f32 %v5370, %v5673
        %v5717 = vadd.f32 %v5371, %v5675
        %v5718 = vadd.f32 %v5372, %v5678
        %v5719 = vadd.f32 %v5373, %v5680
        %v5720 = vadd.f32 %v5374, %v5683
        %v5721 = vadd.f32 %v5375, %v5685
        %v5722 = vadd.f32 %v5376, %v5688
        %v5723 = vadd.f32 %v5377, %v5690
        %s5724 = scalar_lea.vmem [#allocation7], 256
        %v5725 = vld [vmem:[%s5724] sm:$0xf]
        %v5726 = vld [vmem:[%s5724 + $0x4] sm:$0xf]
        %v5727 = vld [vmem:[%s5724 + $0x8] sm:$0xf]
        %v5728 = vld [vmem:[%s5724 + $0xc] sm:$0xf]
        %v5729 = vld [vmem:[%s5724 + $0x10] sm:$0xf]
        %v5730 = vld [vmem:[%s5724 + $0x14] sm:$0xf]
        %v5731 = vld [vmem:[%s5724 + $0x18] sm:$0xf]
        %v5732 = vld [vmem:[%s5724 + $0x1c] sm:$0xf]
        %v5733 = vld [vmem:[%s5724 + $0x20] sm:$0xf]
        %v5734 = vld [vmem:[%s5724 + $0x24] sm:$0xf]
        %v5735 = vld [vmem:[%s5724 + $0x28] sm:$0xf]
        %v5736 = vld [vmem:[%s5724 + $0x2c] sm:$0xf]
        %v5737 = vld [vmem:[%s5724 + $0x30] sm:$0xf]
        %v5738 = vld [vmem:[%s5724 + $0x34] sm:$0xf]
        %v5739 = vld [vmem:[%s5724 + $0x38] sm:$0xf]
        %v5740 = vld [vmem:[%s5724 + $0x3c] sm:$0xf]
        %v5757 = vunpack.c.l.b16 %v5725
        %v5758 = vunpack.c.l.b16 %v5726
        %v5759 = vunpack.c.l.b16 %v5727
        %v5760 = vunpack.c.l.b16 %v5728
        %v5761 = vunpack.c.l.b16 %v5729
        %v5762 = vunpack.c.l.b16 %v5730
        %v5763 = vunpack.c.l.b16 %v5731
        %v5764 = vunpack.c.l.b16 %v5732
        %v5765 = vunpack.c.l.b16 %v5733
        %v5766 = vunpack.c.l.b16 %v5734
        %v5767 = vunpack.c.l.b16 %v5735
        %v5768 = vunpack.c.l.b16 %v5736
        %v5769 = vunpack.c.l.b16 %v5737
        %v5770 = vunpack.c.l.b16 %v5738
        %v5771 = vunpack.c.l.b16 %v5739
        %v5772 = vunpack.c.l.b16 %v5740
        %v5773 = vpack.c.b16 %v5758, %v5757
        %v5774 = vpack.c.b16 %v5760, %v5759
        %v5775 = vpack.c.b16 %v5762, %v5761
        %v5776 = vpack.c.b16 %v5764, %v5763
        %v5777 = vpack.c.b16 %v5766, %v5765
        %v5778 = vpack.c.b16 %v5768, %v5767
        %v5779 = vpack.c.b16 %v5770, %v5769
        %v5780 = vpack.c.b16 %v5772, %v5771
        %5789 = vmatpush.bf16.msra.mxu0 %v5780
        %5790 = vmatpush.bf16.msra.mxu0 %v5779
        %5791 = vmatpush.bf16.msra.mxu0 %v5778
        %5792 = vmatpush.bf16.msra.mxu0 %v5777
        %5793 = vmatpush.bf16.msra.mxu0 %v5776
        %5794 = vmatpush.bf16.msra.mxu0 %v5775
        %5795 = vmatpush.bf16.msra.mxu0 %v5774
        %5796 = vmatpush.bf16.msra.mxu0 %v5773
        %5797 = vmatmul.bf16.gmra.mxu0 %v4546
        %v5798 = vpop.f32.mrf.mxu0
        %v5799 = vadd.f32 0.0, %v5798
        %v5800 = vpop.f32.mrf.mxu0
        %v5801 = vadd.f32 0.0, %v5800
        %5802 = vmatmul.bf16.gmra.mxu0 %v4547
        %v5803 = vpop.f32.mrf.mxu0
        %v5804 = vadd.f32 0.0, %v5803
        %v5805 = vpop.f32.mrf.mxu0
        %v5806 = vadd.f32 0.0, %v5805
        %5807 = vmatmul.bf16.gmra.mxu0 %v4548
        %v5808 = vpop.f32.mrf.mxu0
        %v5809 = vadd.f32 0.0, %v5808
        %v5810 = vpop.f32.mrf.mxu0
        %v5811 = vadd.f32 0.0, %v5810
        %5812 = vmatmul.bf16.gmra.mxu0 %v4549
        %v5813 = vpop.f32.mrf.mxu0
        %v5814 = vadd.f32 0.0, %v5813
        %v5815 = vpop.f32.mrf.mxu0
        %v5816 = vadd.f32 0.0, %v5815
        %5817 = vmatmul.bf16.gmra.mxu0 %v4550
        %v5818 = vpop.f32.mrf.mxu0
        %v5819 = vadd.f32 0.0, %v5818
        %v5820 = vpop.f32.mrf.mxu0
        %v5821 = vadd.f32 0.0, %v5820
        %5822 = vmatmul.bf16.gmra.mxu0 %v4551
        %v5823 = vpop.f32.mrf.mxu0
        %v5824 = vadd.f32 0.0, %v5823
        %v5825 = vpop.f32.mrf.mxu0
        %v5826 = vadd.f32 0.0, %v5825
        %5827 = vmatmul.bf16.gmra.mxu0 %v4552
        %v5828 = vpop.f32.mrf.mxu0
        %v5829 = vadd.f32 0.0, %v5828
        %v5830 = vpop.f32.mrf.mxu0
        %v5831 = vadd.f32 0.0, %v5830
        %5832 = vmatmul.bf16.gmra.mxu0 %v4553
        %v5833 = vpop.f32.mrf.mxu0
        %v5834 = vadd.f32 0.0, %v5833
        %v5835 = vpop.f32.mrf.mxu0
        %v5836 = vadd.f32 0.0, %v5835
        %5837 = vmatmul.bf16.gmra.mxu0 %v4554
        %v5838 = vpop.f32.mrf.mxu0
        %v5839 = vadd.f32 0.0, %v5838
        %v5840 = vpop.f32.mrf.mxu0
        %v5841 = vadd.f32 0.0, %v5840
        %5842 = vmatmul.bf16.gmra.mxu0 %v4555
        %v5843 = vpop.f32.mrf.mxu0
        %v5844 = vadd.f32 0.0, %v5843
        %v5845 = vpop.f32.mrf.mxu0
        %v5846 = vadd.f32 0.0, %v5845
        %5847 = vmatmul.bf16.gmra.mxu0 %v4556
        %v5848 = vpop.f32.mrf.mxu0
        %v5849 = vadd.f32 0.0, %v5848
        %v5850 = vpop.f32.mrf.mxu0
        %v5851 = vadd.f32 0.0, %v5850
        %5852 = vmatmul.bf16.gmra.mxu0 %v4557
        %v5853 = vpop.f32.mrf.mxu0
        %v5854 = vadd.f32 0.0, %v5853
        %v5855 = vpop.f32.mrf.mxu0
        %v5856 = vadd.f32 0.0, %v5855
        %5857 = vmatmul.bf16.gmra.mxu0 %v4558
        %v5858 = vpop.f32.mrf.mxu0
        %v5859 = vadd.f32 0.0, %v5858
        %v5860 = vpop.f32.mrf.mxu0
        %v5861 = vadd.f32 0.0, %v5860
        %5862 = vmatmul.bf16.gmra.mxu0 %v4559
        %v5863 = vpop.f32.mrf.mxu0
        %v5864 = vadd.f32 0.0, %v5863
        %v5865 = vpop.f32.mrf.mxu0
        %v5866 = vadd.f32 0.0, %v5865
        %5867 = vmatmul.bf16.gmra.mxu0 %v4560
        %v5868 = vpop.f32.mrf.mxu0
        %v5869 = vadd.f32 0.0, %v5868
        %v5870 = vpop.f32.mrf.mxu0
        %v5871 = vadd.f32 0.0, %v5870
        %5872 = vmatmul.bf16.gmra.mxu0 %v4561
        %v5873 = vpop.f32.mrf.mxu0
        %v5874 = vadd.f32 0.0, %v5873
        %v5875 = vpop.f32.mrf.mxu0
        %v5876 = vadd.f32 0.0, %v5875
        %5877 = vdwg.mxu0
        %v5878 = vadd.f32 %v5692, %v5799
        %v5879 = vadd.f32 %v5693, %v5801
        %v5880 = vadd.f32 %v5694, %v5804
        %v5881 = vadd.f32 %v5695, %v5806
        %v5882 = vadd.f32 %v5696, %v5809
        %v5883 = vadd.f32 %v5697, %v5811
        %v5884 = vadd.f32 %v5698, %v5814
        %v5885 = vadd.f32 %v5699, %v5816
        %v5886 = vadd.f32 %v5700, %v5819
        %v5887 = vadd.f32 %v5701, %v5821
        %v5888 = vadd.f32 %v5702, %v5824
        %v5889 = vadd.f32 %v5703, %v5826
        %v5890 = vadd.f32 %v5704, %v5829
        %v5891 = vadd.f32 %v5705, %v5831
        %v5892 = vadd.f32 %v5706, %v5834
        %v5893 = vadd.f32 %v5707, %v5836
        %v5894 = vadd.f32 %v5708, %v5839
        %v5895 = vadd.f32 %v5709, %v5841
        %v5896 = vadd.f32 %v5710, %v5844
        %v5897 = vadd.f32 %v5711, %v5846
        %v5898 = vadd.f32 %v5712, %v5849
        %v5899 = vadd.f32 %v5713, %v5851
        %v5900 = vadd.f32 %v5714, %v5854
        %v5901 = vadd.f32 %v5715, %v5856
        %v5902 = vadd.f32 %v5716, %v5859
        %v5903 = vadd.f32 %v5717, %v5861
        %v5904 = vadd.f32 %v5718, %v5864
        %v5905 = vadd.f32 %v5719, %v5866
        %v5906 = vadd.f32 %v5720, %v5869
        %v5907 = vadd.f32 %v5721, %v5871
        %v5908 = vadd.f32 %v5722, %v5874
        %v5909 = vadd.f32 %v5723, %v5876
        %v5910 = vsel %vm3125, %v4546, 0
        %v5911 = vsel %vm2111, %v4547, 0
        %v5912 = vsel %vm2118, %v4548, 0
        %v5913 = vsel %vm2125, %v4549, 0
        %v5914 = vsel %vm2132, %v4550, 0
        %v5915 = vsel %vm2139, %v4551, 0
        %v5916 = vsel %vm2146, %v4552, 0
        %v5917 = vsel %vm2153, %v4553, 0
        %v5918 = vsel %vm2160, %v4554, 0
        %v5919 = vsel %vm2167, %v4555, 0
        %v5920 = vsel %vm2174, %v4556, 0
        %v5921 = vsel %vm2181, %v4557, 0
        %v5922 = vsel %vm2188, %v4558, 0
        %v5923 = vsel %vm2195, %v4559, 0
        %v5924 = vsel %vm2202, %v4560, 0
        %v5925 = vsel %vm2209, %v4561, 0
        %s5926 = scalar_lea.vmem [#allocation7], 320
        %v5927 = vld [vmem:[%s5926] sm:$0xf]
        %v5928 = vld [vmem:[%s5926 + $0x4] sm:$0xf]
        %v5929 = vld [vmem:[%s5926 + $0x8] sm:$0xf]
        %v5930 = vld [vmem:[%s5926 + $0xc] sm:$0xf]
        %v5931 = vld [vmem:[%s5926 + $0x10] sm:$0xf]
        %v5932 = vld [vmem:[%s5926 + $0x14] sm:$0xf]
        %v5933 = vld [vmem:[%s5926 + $0x18] sm:$0xf]
        %v5934 = vld [vmem:[%s5926 + $0x1c] sm:$0xf]
        %v5935 = vld [vmem:[%s5926 + $0x20] sm:$0xf]
        %v5936 = vld [vmem:[%s5926 + $0x24] sm:$0xf]
        %v5937 = vld [vmem:[%s5926 + $0x28] sm:$0xf]
        %v5938 = vld [vmem:[%s5926 + $0x2c] sm:$0xf]
        %v5939 = vld [vmem:[%s5926 + $0x30] sm:$0xf]
        %v5940 = vld [vmem:[%s5926 + $0x34] sm:$0xf]
        %v5941 = vld [vmem:[%s5926 + $0x38] sm:$0xf]
        %v5942 = vld [vmem:[%s5926 + $0x3c] sm:$0xf]
        %v5944 = vshrl.u32 %v5910, 16
        %v5946 = vshll.u32 %v5910, 16
        %v5948 = vrot.slane %v5946, 1
        %v5949 = vor.u32 %v5944, %v5948
        %v5951 = vshll.u32 %v5911, 16
        %v5953 = vrot.slane %v5951, 1
        %v5954 = vsel %vm1113, %v5949, %v5953
        %v5955 = vshrl.u32 %v5911, 16
        %v5957 = vor.u32 %v5955, %v5953
        %v5959 = vshll.u32 %v5912, 16
        %v5961 = vrot.slane %v5959, 1
        %v5962 = vsel %vm1113, %v5957, %v5961
        %v5963 = vshrl.u32 %v5912, 16
        %v5965 = vor.u32 %v5963, %v5961
        %v5967 = vshll.u32 %v5913, 16
        %v5969 = vrot.slane %v5967, 1
        %v5970 = vsel %vm1113, %v5965, %v5969
        %v5971 = vshrl.u32 %v5913, 16
        %v5973 = vor.u32 %v5971, %v5969
        %v5975 = vshll.u32 %v5914, 16
        %v5977 = vrot.slane %v5975, 1
        %v5978 = vsel %vm1113, %v5973, %v5977
        %v5979 = vshrl.u32 %v5914, 16
        %v5981 = vor.u32 %v5979, %v5977
        %v5983 = vshll.u32 %v5915, 16
        %v5985 = vrot.slane %v5983, 1
        %v5986 = vsel %vm1113, %v5981, %v5985
        %v5987 = vshrl.u32 %v5915, 16
        %v5989 = vor.u32 %v5987, %v5985
        %v5991 = vshll.u32 %v5916, 16
        %v5993 = vrot.slane %v5991, 1
        %v5994 = vsel %vm1113, %v5989, %v5993
        %v5995 = vshrl.u32 %v5916, 16
        %v5997 = vor.u32 %v5995, %v5993
        %v5999 = vshll.u32 %v5917, 16
        %v6001 = vrot.slane %v5999, 1
        %v6002 = vsel %vm1113, %v5997, %v6001
        %v6003 = vshrl.u32 %v5917, 16
        %v6005 = vor.u32 %v6003, %v6001
        %v6007 = vshll.u32 %v5918, 16
        %v6009 = vrot.slane %v6007, 1
        %v6010 = vsel %vm1113, %v6005, %v6009
        %v6011 = vshrl.u32 %v5918, 16
        %v6013 = vor.u32 %v6011, %v6009
        %v6015 = vshll.u32 %v5919, 16
        %v6017 = vrot.slane %v6015, 1
        %v6018 = vsel %vm1113, %v6013, %v6017
        %v6019 = vshrl.u32 %v5919, 16
        %v6021 = vor.u32 %v6019, %v6017
        %v6023 = vshll.u32 %v5920, 16
        %v6025 = vrot.slane %v6023, 1
        %v6026 = vsel %vm1113, %v6021, %v6025
        %v6027 = vshrl.u32 %v5920, 16
        %v6029 = vor.u32 %v6027, %v6025
        %v6031 = vshll.u32 %v5921, 16
        %v6033 = vrot.slane %v6031, 1
        %v6034 = vsel %vm1113, %v6029, %v6033
        %v6035 = vshrl.u32 %v5921, 16
        %v6037 = vor.u32 %v6035, %v6033
        %v6039 = vshll.u32 %v5922, 16
        %v6041 = vrot.slane %v6039, 1
        %v6042 = vsel %vm1113, %v6037, %v6041
        %v6043 = vshrl.u32 %v5922, 16
        %v6045 = vor.u32 %v6043, %v6041
        %v6047 = vshll.u32 %v5923, 16
        %v6049 = vrot.slane %v6047, 1
        %v6050 = vsel %vm1113, %v6045, %v6049
        %v6051 = vshrl.u32 %v5923, 16
        %v6053 = vor.u32 %v6051, %v6049
        %v6055 = vshll.u32 %v5924, 16
        %v6057 = vrot.slane %v6055, 1
        %v6058 = vsel %vm1113, %v6053, %v6057
        %v6059 = vshrl.u32 %v5924, 16
        %v6061 = vor.u32 %v6059, %v6057
        %v6063 = vshll.u32 %v5925, 16
        %v6065 = vrot.slane %v6063, 1
        %v6066 = vsel %vm1113, %v6061, %v6065
        %v6067 = vshrl.u32 %v5925, 16
        %v6069 = vor.u32 %v6067, %v6065
        %v6070 = vsel %vm1113, %v6069, %v2250
        %v6103 = vunpack.c.l.b16 %v5927
        %v6104 = vunpack.c.l.b16 %v5928
        %v6105 = vunpack.c.l.b16 %v5929
        %v6106 = vunpack.c.l.b16 %v5930
        %v6107 = vunpack.c.l.b16 %v5931
        %v6108 = vunpack.c.l.b16 %v5932
        %v6109 = vunpack.c.l.b16 %v5933
        %v6110 = vunpack.c.l.b16 %v5934
        %v6111 = vunpack.c.l.b16 %v5935
        %v6112 = vunpack.c.l.b16 %v5936
        %v6113 = vunpack.c.l.b16 %v5937
        %v6114 = vunpack.c.l.b16 %v5938
        %v6115 = vunpack.c.l.b16 %v5939
        %v6116 = vunpack.c.l.b16 %v5940
        %v6117 = vunpack.c.l.b16 %v5941
        %v6118 = vunpack.c.l.b16 %v5942
        %v6119 = vpack.c.b16 %v6104, %v6103
        %v6120 = vpack.c.b16 %v6106, %v6105
        %v6121 = vpack.c.b16 %v6108, %v6107
        %v6122 = vpack.c.b16 %v6110, %v6109
        %v6123 = vpack.c.b16 %v6112, %v6111
        %v6124 = vpack.c.b16 %v6114, %v6113
        %v6125 = vpack.c.b16 %v6116, %v6115
        %v6126 = vpack.c.b16 %v6118, %v6117
        %6135 = vmatpush.bf16.msra.mxu0 %v6126
        %6136 = vmatpush.bf16.msra.mxu0 %v6125
        %6137 = vmatpush.bf16.msra.mxu0 %v6124
        %6138 = vmatpush.bf16.msra.mxu0 %v6123
        %6139 = vmatpush.bf16.msra.mxu0 %v6122
        %6140 = vmatpush.bf16.msra.mxu0 %v6121
        %6141 = vmatpush.bf16.msra.mxu0 %v6120
        %6142 = vmatpush.bf16.msra.mxu0 %v6119
        %6143 = vmatmul.bf16.gmra.mxu0 %v5954
        %v6144 = vpop.f32.mrf.mxu0
        %v6145 = vadd.f32 0.0, %v6144
        %v6146 = vpop.f32.mrf.mxu0
        %v6147 = vadd.f32 0.0, %v6146
        %6148 = vmatmul.bf16.gmra.mxu0 %v5962
        %v6149 = vpop.f32.mrf.mxu0
        %v6150 = vadd.f32 0.0, %v6149
        %v6151 = vpop.f32.mrf.mxu0
        %v6152 = vadd.f32 0.0, %v6151
        %6153 = vmatmul.bf16.gmra.mxu0 %v5970
        %v6154 = vpop.f32.mrf.mxu0
        %v6155 = vadd.f32 0.0, %v6154
        %v6156 = vpop.f32.mrf.mxu0
        %v6157 = vadd.f32 0.0, %v6156
        %6158 = vmatmul.bf16.gmra.mxu0 %v5978
        %v6159 = vpop.f32.mrf.mxu0
        %v6160 = vadd.f32 0.0, %v6159
        %v6161 = vpop.f32.mrf.mxu0
        %v6162 = vadd.f32 0.0, %v6161
        %6163 = vmatmul.bf16.gmra.mxu0 %v5986
        %v6164 = vpop.f32.mrf.mxu0
        %v6165 = vadd.f32 0.0, %v6164
        %v6166 = vpop.f32.mrf.mxu0
        %v6167 = vadd.f32 0.0, %v6166
        %6168 = vmatmul.bf16.gmra.mxu0 %v5994
        %v6169 = vpop.f32.mrf.mxu0
        %v6170 = vadd.f32 0.0, %v6169
        %v6171 = vpop.f32.mrf.mxu0
        %v6172 = vadd.f32 0.0, %v6171
        %6173 = vmatmul.bf16.gmra.mxu0 %v6002
        %v6174 = vpop.f32.mrf.mxu0
        %v6175 = vadd.f32 0.0, %v6174
        %v6176 = vpop.f32.mrf.mxu0
        %v6177 = vadd.f32 0.0, %v6176
        %6178 = vmatmul.bf16.gmra.mxu0 %v6010
        %v6179 = vpop.f32.mrf.mxu0
        %v6180 = vadd.f32 0.0, %v6179
        %v6181 = vpop.f32.mrf.mxu0
        %v6182 = vadd.f32 0.0, %v6181
        %6183 = vmatmul.bf16.gmra.mxu0 %v6018
        %v6184 = vpop.f32.mrf.mxu0
        %v6185 = vadd.f32 0.0, %v6184
        %v6186 = vpop.f32.mrf.mxu0
        %v6187 = vadd.f32 0.0, %v6186
        %6188 = vmatmul.bf16.gmra.mxu0 %v6026
        %v6189 = vpop.f32.mrf.mxu0
        %v6190 = vadd.f32 0.0, %v6189
        %v6191 = vpop.f32.mrf.mxu0
        %v6192 = vadd.f32 0.0, %v6191
        %6193 = vmatmul.bf16.gmra.mxu0 %v6034
        %v6194 = vpop.f32.mrf.mxu0
        %v6195 = vadd.f32 0.0, %v6194
        %v6196 = vpop.f32.mrf.mxu0
        %v6197 = vadd.f32 0.0, %v6196
        %6198 = vmatmul.bf16.gmra.mxu0 %v6042
        %v6199 = vpop.f32.mrf.mxu0
        %v6200 = vadd.f32 0.0, %v6199
        %v6201 = vpop.f32.mrf.mxu0
        %v6202 = vadd.f32 0.0, %v6201
        %6203 = vmatmul.bf16.gmra.mxu0 %v6050
        %v6204 = vpop.f32.mrf.mxu0
        %v6205 = vadd.f32 0.0, %v6204
        %v6206 = vpop.f32.mrf.mxu0
        %v6207 = vadd.f32 0.0, %v6206
        %6208 = vmatmul.bf16.gmra.mxu0 %v6058
        %v6209 = vpop.f32.mrf.mxu0
        %v6210 = vadd.f32 0.0, %v6209
        %v6211 = vpop.f32.mrf.mxu0
        %v6212 = vadd.f32 0.0, %v6211
        %6213 = vmatmul.bf16.gmra.mxu0 %v6066
        %v6214 = vpop.f32.mrf.mxu0
        %v6215 = vadd.f32 0.0, %v6214
        %v6216 = vpop.f32.mrf.mxu0
        %v6217 = vadd.f32 0.0, %v6216
        %6218 = vmatmul.bf16.gmra.mxu0 %v6070
        %v6219 = vpop.f32.mrf.mxu0
        %v6220 = vadd.f32 0.0, %v6219
        %v6221 = vpop.f32.mrf.mxu0
        %v6222 = vadd.f32 0.0, %v6221
        %6223 = vdwg.mxu0
        %v6224 = vadd.f32 %v5878, %v6145
        %v6225 = vadd.f32 %v5879, %v6147
        %v6226 = vadd.f32 %v5880, %v6150
        %v6227 = vadd.f32 %v5881, %v6152
        %v6228 = vadd.f32 %v5882, %v6155
        %v6229 = vadd.f32 %v5883, %v6157
        %v6230 = vadd.f32 %v5884, %v6160
        %v6231 = vadd.f32 %v5885, %v6162
        %v6232 = vadd.f32 %v5886, %v6165
        %v6233 = vadd.f32 %v5887, %v6167
        %v6234 = vadd.f32 %v5888, %v6170
        %v6235 = vadd.f32 %v5889, %v6172
        %v6236 = vadd.f32 %v5890, %v6175
        %v6237 = vadd.f32 %v5891, %v6177
        %v6238 = vadd.f32 %v5892, %v6180
        %v6239 = vadd.f32 %v5893, %v6182
        %v6240 = vadd.f32 %v5894, %v6185
        %v6241 = vadd.f32 %v5895, %v6187
        %v6242 = vadd.f32 %v5896, %v6190
        %v6243 = vadd.f32 %v5897, %v6192
        %v6244 = vadd.f32 %v5898, %v6195
        %v6245 = vadd.f32 %v5899, %v6197
        %v6246 = vadd.f32 %v5900, %v6200
        %v6247 = vadd.f32 %v5901, %v6202
        %v6248 = vadd.f32 %v5902, %v6205
        %v6249 = vadd.f32 %v5903, %v6207
        %v6250 = vadd.f32 %v5904, %v6210
        %v6251 = vadd.f32 %v5905, %v6212
        %v6252 = vadd.f32 %v5906, %v6215
        %v6253 = vadd.f32 %v5907, %v6217
        %v6254 = vadd.f32 %v5908, %v6220
        %v6255 = vadd.f32 %v5909, %v6222
        %v6256 = vsel %vm3478, %v4546, 0
        %v6257 = vsel %vm2583, %v4547, 0
        %v6258 = vsel %vm1239, %v4548, 0
        %v6259 = vsel %vm1246, %v4549, 0
        %v6260 = vsel %vm1253, %v4550, 0
        %v6261 = vsel %vm1260, %v4551, 0
        %v6262 = vsel %vm1267, %v4552, 0
        %v6263 = vsel %vm1274, %v4553, 0
        %v6264 = vsel %vm1281, %v4554, 0
        %v6265 = vsel %vm1288, %v4555, 0
        %v6266 = vsel %vm1295, %v4556, 0
        %v6267 = vsel %vm1302, %v4557, 0
        %v6268 = vsel %vm1309, %v4558, 0
        %v6269 = vsel %vm1316, %v4559, 0
        %v6270 = vsel %vm1323, %v4560, 0
        %v6271 = vsel %vm1330, %v4561, 0
        %s6272 = scalar_lea.vmem [#allocation7], 384
        %v6273 = vld [vmem:[%s6272] sm:$0xf]
        %v6274 = vld [vmem:[%s6272 + $0x4] sm:$0xf]
        %v6275 = vld [vmem:[%s6272 + $0x8] sm:$0xf]
        %v6276 = vld [vmem:[%s6272 + $0xc] sm:$0xf]
        %v6277 = vld [vmem:[%s6272 + $0x10] sm:$0xf]
        %v6278 = vld [vmem:[%s6272 + $0x14] sm:$0xf]
        %v6279 = vld [vmem:[%s6272 + $0x18] sm:$0xf]
        %v6280 = vld [vmem:[%s6272 + $0x1c] sm:$0xf]
        %v6281 = vld [vmem:[%s6272 + $0x20] sm:$0xf]
        %v6282 = vld [vmem:[%s6272 + $0x24] sm:$0xf]
        %v6283 = vld [vmem:[%s6272 + $0x28] sm:$0xf]
        %v6284 = vld [vmem:[%s6272 + $0x2c] sm:$0xf]
        %v6285 = vld [vmem:[%s6272 + $0x30] sm:$0xf]
        %v6286 = vld [vmem:[%s6272 + $0x34] sm:$0xf]
        %v6287 = vld [vmem:[%s6272 + $0x38] sm:$0xf]
        %v6288 = vld [vmem:[%s6272 + $0x3c] sm:$0xf]
        %v6290 = vshrl.u32 %v6256, 16
        %v6292 = vrot.slane %v6290, 7
        %v6294 = vshrl.u32 %v6257, 16
        %v6296 = vrot.slane %v6294, 7
        %v6297 = vshll.u32 %v6257, 16
        %v6299 = vor.u32 %v6296, %v6297
        %v6300 = vsel %vm1523, %v6292, %v6299
        %v6302 = vshrl.u32 %v6258, 16
        %v6304 = vrot.slane %v6302, 7
        %v6305 = vshll.u32 %v6258, 16
        %v6307 = vor.u32 %v6304, %v6305
        %v6308 = vsel %vm1523, %v6296, %v6307
        %v6310 = vshrl.u32 %v6259, 16
        %v6312 = vrot.slane %v6310, 7
        %v6313 = vshll.u32 %v6259, 16
        %v6315 = vor.u32 %v6312, %v6313
        %v6316 = vsel %vm1523, %v6304, %v6315
        %v6318 = vshrl.u32 %v6260, 16
        %v6320 = vrot.slane %v6318, 7
        %v6321 = vshll.u32 %v6260, 16
        %v6323 = vor.u32 %v6320, %v6321
        %v6324 = vsel %vm1523, %v6312, %v6323
        %v6326 = vshrl.u32 %v6261, 16
        %v6328 = vrot.slane %v6326, 7
        %v6329 = vshll.u32 %v6261, 16
        %v6331 = vor.u32 %v6328, %v6329
        %v6332 = vsel %vm1523, %v6320, %v6331
        %v6334 = vshrl.u32 %v6262, 16
        %v6336 = vrot.slane %v6334, 7
        %v6337 = vshll.u32 %v6262, 16
        %v6339 = vor.u32 %v6336, %v6337
        %v6340 = vsel %vm1523, %v6328, %v6339
        %v6342 = vshrl.u32 %v6263, 16
        %v6344 = vrot.slane %v6342, 7
        %v6345 = vshll.u32 %v6263, 16
        %v6347 = vor.u32 %v6344, %v6345
        %v6348 = vsel %vm1523, %v6336, %v6347
        %v6350 = vshrl.u32 %v6264, 16
        %v6352 = vrot.slane %v6350, 7
        %v6353 = vshll.u32 %v6264, 16
        %v6355 = vor.u32 %v6352, %v6353
        %v6356 = vsel %vm1523, %v6344, %v6355
        %v6358 = vshrl.u32 %v6265, 16
        %v6360 = vrot.slane %v6358, 7
        %v6361 = vshll.u32 %v6265, 16
        %v6363 = vor.u32 %v6360, %v6361
        %v6364 = vsel %vm1523, %v6352, %v6363
        %v6366 = vshrl.u32 %v6266, 16
        %v6368 = vrot.slane %v6366, 7
        %v6369 = vshll.u32 %v6266, 16
        %v6371 = vor.u32 %v6368, %v6369
        %v6372 = vsel %vm1523, %v6360, %v6371
        %v6374 = vshrl.u32 %v6267, 16
        %v6376 = vrot.slane %v6374, 7
        %v6377 = vshll.u32 %v6267, 16
        %v6379 = vor.u32 %v6376, %v6377
        %v6380 = vsel %vm1523, %v6368, %v6379
        %v6382 = vshrl.u32 %v6268, 16
        %v6384 = vrot.slane %v6382, 7
        %v6385 = vshll.u32 %v6268, 16
        %v6387 = vor.u32 %v6384, %v6385
        %v6388 = vsel %vm1523, %v6376, %v6387
        %v6390 = vshrl.u32 %v6269, 16
        %v6392 = vrot.slane %v6390, 7
        %v6393 = vshll.u32 %v6269, 16
        %v6395 = vor.u32 %v6392, %v6393
        %v6396 = vsel %vm1523, %v6384, %v6395
        %v6398 = vshrl.u32 %v6270, 16
        %v6400 = vrot.slane %v6398, 7
        %v6401 = vshll.u32 %v6270, 16
        %v6403 = vor.u32 %v6400, %v6401
        %v6404 = vsel %vm1523, %v6392, %v6403
        %v6406 = vshrl.u32 %v6271, 16
        %v6408 = vrot.slane %v6406, 7
        %v6409 = vshll.u32 %v6271, 16
        %v6411 = vor.u32 %v6408, %v6409
        %v6412 = vsel %vm1523, %v6400, %v6411
        %v6413 = vsel %vm1523, %v6408, %v1530
        %v6446 = vunpack.c.l.b16 %v6273
        %v6447 = vunpack.c.l.b16 %v6274
        %v6448 = vunpack.c.l.b16 %v6275
        %v6449 = vunpack.c.l.b16 %v6276
        %v6450 = vunpack.c.l.b16 %v6277
        %v6451 = vunpack.c.l.b16 %v6278
        %v6452 = vunpack.c.l.b16 %v6279
        %v6453 = vunpack.c.l.b16 %v6280
        %v6454 = vunpack.c.l.b16 %v6281
        %v6455 = vunpack.c.l.b16 %v6282
        %v6456 = vunpack.c.l.b16 %v6283
        %v6457 = vunpack.c.l.b16 %v6284
        %v6458 = vunpack.c.l.b16 %v6285
        %v6459 = vunpack.c.l.b16 %v6286
        %v6460 = vunpack.c.l.b16 %v6287
        %v6461 = vunpack.c.l.b16 %v6288
        %v6462 = vpack.c.b16 %v6447, %v6446
        %v6463 = vpack.c.b16 %v6449, %v6448
        %v6464 = vpack.c.b16 %v6451, %v6450
        %v6465 = vpack.c.b16 %v6453, %v6452
        %v6466 = vpack.c.b16 %v6455, %v6454
        %v6467 = vpack.c.b16 %v6457, %v6456
        %v6468 = vpack.c.b16 %v6459, %v6458
        %v6469 = vpack.c.b16 %v6461, %v6460
        %6478 = vmatpush.bf16.msra.mxu0 %v6469
        %6479 = vmatpush.bf16.msra.mxu0 %v6468
        %6480 = vmatpush.bf16.msra.mxu0 %v6467
        %6481 = vmatpush.bf16.msra.mxu0 %v6466
        %6482 = vmatpush.bf16.msra.mxu0 %v6465
        %6483 = vmatpush.bf16.msra.mxu0 %v6464
        %6484 = vmatpush.bf16.msra.mxu0 %v6463
        %6485 = vmatpush.bf16.msra.mxu0 %v6462
        %6486 = vmatmul.bf16.gmra.mxu0 %v6300
        %v6487 = vpop.f32.mrf.mxu0
        %v6488 = vadd.f32 0.0, %v6487
        %v6489 = vpop.f32.mrf.mxu0
        %v6490 = vadd.f32 0.0, %v6489
        %6491 = vmatmul.bf16.gmra.mxu0 %v6308
        %v6492 = vpop.f32.mrf.mxu0
        %v6493 = vadd.f32 0.0, %v6492
        %v6494 = vpop.f32.mrf.mxu0
        %v6495 = vadd.f32 0.0, %v6494
        %6496 = vmatmul.bf16.gmra.mxu0 %v6316
        %v6497 = vpop.f32.mrf.mxu0
        %v6498 = vadd.f32 0.0, %v6497
        %v6499 = vpop.f32.mrf.mxu0
        %v6500 = vadd.f32 0.0, %v6499
        %6501 = vmatmul.bf16.gmra.mxu0 %v6324
        %v6502 = vpop.f32.mrf.mxu0
        %v6503 = vadd.f32 0.0, %v6502
        %v6504 = vpop.f32.mrf.mxu0
        %v6505 = vadd.f32 0.0, %v6504
        %6506 = vmatmul.bf16.gmra.mxu0 %v6332
        %v6507 = vpop.f32.mrf.mxu0
        %v6508 = vadd.f32 0.0, %v6507
        %v6509 = vpop.f32.mrf.mxu0
        %v6510 = vadd.f32 0.0, %v6509
        %6511 = vmatmul.bf16.gmra.mxu0 %v6340
        %v6512 = vpop.f32.mrf.mxu0
        %v6513 = vadd.f32 0.0, %v6512
        %v6514 = vpop.f32.mrf.mxu0
        %v6515 = vadd.f32 0.0, %v6514
        %6516 = vmatmul.bf16.gmra.mxu0 %v6348
        %v6517 = vpop.f32.mrf.mxu0
        %v6518 = vadd.f32 0.0, %v6517
        %v6519 = vpop.f32.mrf.mxu0
        %v6520 = vadd.f32 0.0, %v6519
        %6521 = vmatmul.bf16.gmra.mxu0 %v6356
        %v6522 = vpop.f32.mrf.mxu0
        %v6523 = vadd.f32 0.0, %v6522
        %v6524 = vpop.f32.mrf.mxu0
        %v6525 = vadd.f32 0.0, %v6524
        %6526 = vmatmul.bf16.gmra.mxu0 %v6364
        %v6527 = vpop.f32.mrf.mxu0
        %v6528 = vadd.f32 0.0, %v6527
        %v6529 = vpop.f32.mrf.mxu0
        %v6530 = vadd.f32 0.0, %v6529
        %6531 = vmatmul.bf16.gmra.mxu0 %v6372
        %v6532 = vpop.f32.mrf.mxu0
        %v6533 = vadd.f32 0.0, %v6532
        %v6534 = vpop.f32.mrf.mxu0
        %v6535 = vadd.f32 0.0, %v6534
        %6536 = vmatmul.bf16.gmra.mxu0 %v6380
        %v6537 = vpop.f32.mrf.mxu0
        %v6538 = vadd.f32 0.0, %v6537
        %v6539 = vpop.f32.mrf.mxu0
        %v6540 = vadd.f32 0.0, %v6539
        %6541 = vmatmul.bf16.gmra.mxu0 %v6388
        %v6542 = vpop.f32.mrf.mxu0
        %v6543 = vadd.f32 0.0, %v6542
        %v6544 = vpop.f32.mrf.mxu0
        %v6545 = vadd.f32 0.0, %v6544
        %6546 = vmatmul.bf16.gmra.mxu0 %v6396
        %v6547 = vpop.f32.mrf.mxu0
        %v6548 = vadd.f32 0.0, %v6547
        %v6549 = vpop.f32.mrf.mxu0
        %v6550 = vadd.f32 0.0, %v6549
        %6551 = vmatmul.bf16.gmra.mxu0 %v6404
        %v6552 = vpop.f32.mrf.mxu0
        %v6553 = vadd.f32 0.0, %v6552
        %v6554 = vpop.f32.mrf.mxu0
        %v6555 = vadd.f32 0.0, %v6554
        %6556 = vmatmul.bf16.gmra.mxu0 %v6412
        %v6557 = vpop.f32.mrf.mxu0
        %v6558 = vadd.f32 0.0, %v6557
        %v6559 = vpop.f32.mrf.mxu0
        %v6560 = vadd.f32 0.0, %v6559
        %6561 = vmatmul.bf16.gmra.mxu0 %v6413
        %v6562 = vpop.f32.mrf.mxu0
        %v6563 = vadd.f32 0.0, %v6562
        %v6564 = vpop.f32.mrf.mxu0
        %v6565 = vadd.f32 0.0, %v6564
        %6566 = vdwg.mxu0
        %v6567 = vadd.f32 %v6224, %v6488
        %v6568 = vadd.f32 %v6225, %v6490
        %v6569 = vadd.f32 %v6226, %v6493
        %v6570 = vadd.f32 %v6227, %v6495
        %v6571 = vadd.f32 %v6228, %v6498
        %v6572 = vadd.f32 %v6229, %v6500
        %v6573 = vadd.f32 %v6230, %v6503
        %v6574 = vadd.f32 %v6231, %v6505
        %v6575 = vadd.f32 %v6232, %v6508
        %v6576 = vadd.f32 %v6233, %v6510
        %v6577 = vadd.f32 %v6234, %v6513
        %v6578 = vadd.f32 %v6235, %v6515
        %v6579 = vadd.f32 %v6236, %v6518
        %v6580 = vadd.f32 %v6237, %v6520
        %v6581 = vadd.f32 %v6238, %v6523
        %v6582 = vadd.f32 %v6239, %v6525
        %v6583 = vadd.f32 %v6240, %v6528
        %v6584 = vadd.f32 %v6241, %v6530
        %v6585 = vadd.f32 %v6242, %v6533
        %v6586 = vadd.f32 %v6243, %v6535
        %v6587 = vadd.f32 %v6244, %v6538
        %v6588 = vadd.f32 %v6245, %v6540
        %v6589 = vadd.f32 %v6246, %v6543
        %v6590 = vadd.f32 %v6247, %v6545
        %v6591 = vadd.f32 %v6248, %v6548
        %v6592 = vadd.f32 %v6249, %v6550
        %v6593 = vadd.f32 %v6250, %v6553
        %v6594 = vadd.f32 %v6251, %v6555
        %v6595 = vadd.f32 %v6252, %v6558
        %v6596 = vadd.f32 %v6253, %v6560
        %v6597 = vadd.f32 %v6254, %v6563
        %v6598 = vadd.f32 %v6255, %v6565
        %s6599 = scalar_lea.vmem [#allocation7], 448
        %v6600 = vld [vmem:[%s6599] sm:$0xf]
        %v6601 = vld [vmem:[%s6599 + $0x4] sm:$0xf]
        %v6602 = vld [vmem:[%s6599 + $0x8] sm:$0xf]
        %v6603 = vld [vmem:[%s6599 + $0xc] sm:$0xf]
        %v6604 = vld [vmem:[%s6599 + $0x10] sm:$0xf]
        %v6605 = vld [vmem:[%s6599 + $0x14] sm:$0xf]
        %v6606 = vld [vmem:[%s6599 + $0x18] sm:$0xf]
        %v6607 = vld [vmem:[%s6599 + $0x1c] sm:$0xf]
        %v6608 = vld [vmem:[%s6599 + $0x20] sm:$0xf]
        %v6609 = vld [vmem:[%s6599 + $0x24] sm:$0xf]
        %v6610 = vld [vmem:[%s6599 + $0x28] sm:$0xf]
        %v6611 = vld [vmem:[%s6599 + $0x2c] sm:$0xf]
        %v6612 = vld [vmem:[%s6599 + $0x30] sm:$0xf]
        %v6613 = vld [vmem:[%s6599 + $0x34] sm:$0xf]
        %v6614 = vld [vmem:[%s6599 + $0x38] sm:$0xf]
        %v6615 = vld [vmem:[%s6599 + $0x3c] sm:$0xf]
        %v6632 = vunpack.c.l.b16 %v6600
        %v6633 = vunpack.c.l.b16 %v6601
        %v6634 = vunpack.c.l.b16 %v6602
        %v6635 = vunpack.c.l.b16 %v6603
        %v6636 = vunpack.c.l.b16 %v6604
        %v6637 = vunpack.c.l.b16 %v6605
        %v6638 = vunpack.c.l.b16 %v6606
        %v6639 = vunpack.c.l.b16 %v6607
        %v6640 = vunpack.c.l.b16 %v6608
        %v6641 = vunpack.c.l.b16 %v6609
        %v6642 = vunpack.c.l.b16 %v6610
        %v6643 = vunpack.c.l.b16 %v6611
        %v6644 = vunpack.c.l.b16 %v6612
        %v6645 = vunpack.c.l.b16 %v6613
        %v6646 = vunpack.c.l.b16 %v6614
        %v6647 = vunpack.c.l.b16 %v6615
        %v6648 = vpack.c.b16 %v6633, %v6632
        %v6649 = vpack.c.b16 %v6635, %v6634
        %v6650 = vpack.c.b16 %v6637, %v6636
        %v6651 = vpack.c.b16 %v6639, %v6638
        %v6652 = vpack.c.b16 %v6641, %v6640
        %v6653 = vpack.c.b16 %v6643, %v6642
        %v6654 = vpack.c.b16 %v6645, %v6644
        %v6655 = vpack.c.b16 %v6647, %v6646
        %6664 = vmatpush.bf16.msra.mxu0 %v6655
        %6665 = vmatpush.bf16.msra.mxu0 %v6654
        %6666 = vmatpush.bf16.msra.mxu0 %v6653
        %6667 = vmatpush.bf16.msra.mxu0 %v6652
        %6668 = vmatpush.bf16.msra.mxu0 %v6651
        %6669 = vmatpush.bf16.msra.mxu0 %v6650
        %6670 = vmatpush.bf16.msra.mxu0 %v6649
        %6671 = vmatpush.bf16.msra.mxu0 %v6648
        %6672 = vmatmul.bf16.gmra.mxu0 %v4547
        %v6673 = vpop.f32.mrf.mxu0
        %v6674 = vadd.f32 0.0, %v6673
        %v6675 = vpop.f32.mrf.mxu0
        %v6676 = vadd.f32 0.0, %v6675
        %6677 = vmatmul.bf16.gmra.mxu0 %v4548
        %v6678 = vpop.f32.mrf.mxu0
        %v6679 = vadd.f32 0.0, %v6678
        %v6680 = vpop.f32.mrf.mxu0
        %v6681 = vadd.f32 0.0, %v6680
        %6682 = vmatmul.bf16.gmra.mxu0 %v4549
        %v6683 = vpop.f32.mrf.mxu0
        %v6684 = vadd.f32 0.0, %v6683
        %v6685 = vpop.f32.mrf.mxu0
        %v6686 = vadd.f32 0.0, %v6685
        %6687 = vmatmul.bf16.gmra.mxu0 %v4550
        %v6688 = vpop.f32.mrf.mxu0
        %v6689 = vadd.f32 0.0, %v6688
        %v6690 = vpop.f32.mrf.mxu0
        %v6691 = vadd.f32 0.0, %v6690
        %6692 = vmatmul.bf16.gmra.mxu0 %v4551
        %v6693 = vpop.f32.mrf.mxu0
        %v6694 = vadd.f32 0.0, %v6693
        %v6695 = vpop.f32.mrf.mxu0
        %v6696 = vadd.f32 0.0, %v6695
        %6697 = vmatmul.bf16.gmra.mxu0 %v4552
        %v6698 = vpop.f32.mrf.mxu0
        %v6699 = vadd.f32 0.0, %v6698
        %v6700 = vpop.f32.mrf.mxu0
        %v6701 = vadd.f32 0.0, %v6700
        %6702 = vmatmul.bf16.gmra.mxu0 %v4553
        %v6703 = vpop.f32.mrf.mxu0
        %v6704 = vadd.f32 0.0, %v6703
        %v6705 = vpop.f32.mrf.mxu0
        %v6706 = vadd.f32 0.0, %v6705
        %6707 = vmatmul.bf16.gmra.mxu0 %v4554
        %v6708 = vpop.f32.mrf.mxu0
        %v6709 = vadd.f32 0.0, %v6708
        %v6710 = vpop.f32.mrf.mxu0
        %v6711 = vadd.f32 0.0, %v6710
        %6712 = vmatmul.bf16.gmra.mxu0 %v4555
        %v6713 = vpop.f32.mrf.mxu0
        %v6714 = vadd.f32 0.0, %v6713
        %v6715 = vpop.f32.mrf.mxu0
        %v6716 = vadd.f32 0.0, %v6715
        %6717 = vmatmul.bf16.gmra.mxu0 %v4556
        %v6718 = vpop.f32.mrf.mxu0
        %v6719 = vadd.f32 0.0, %v6718
        %v6720 = vpop.f32.mrf.mxu0
        %v6721 = vadd.f32 0.0, %v6720
        %6722 = vmatmul.bf16.gmra.mxu0 %v4557
        %v6723 = vpop.f32.mrf.mxu0
        %v6724 = vadd.f32 0.0, %v6723
        %v6725 = vpop.f32.mrf.mxu0
        %v6726 = vadd.f32 0.0, %v6725
        %6727 = vmatmul.bf16.gmra.mxu0 %v4558
        %v6728 = vpop.f32.mrf.mxu0
        %v6729 = vadd.f32 0.0, %v6728
        %v6730 = vpop.f32.mrf.mxu0
        %v6731 = vadd.f32 0.0, %v6730
        %6732 = vmatmul.bf16.gmra.mxu0 %v4559
        %v6733 = vpop.f32.mrf.mxu0
        %v6734 = vadd.f32 0.0, %v6733
        %v6735 = vpop.f32.mrf.mxu0
        %v6736 = vadd.f32 0.0, %v6735
        %6737 = vmatmul.bf16.gmra.mxu0 %v4560
        %v6738 = vpop.f32.mrf.mxu0
        %v6739 = vadd.f32 0.0, %v6738
        %v6740 = vpop.f32.mrf.mxu0
        %v6741 = vadd.f32 0.0, %v6740
        %6742 = vmatmul.bf16.gmra.mxu0 %v4561
        %v6743 = vpop.f32.mrf.mxu0
        %v6744 = vadd.f32 0.0, %v6743
        %v6745 = vpop.f32.mrf.mxu0
        %v6746 = vadd.f32 0.0, %v6745
        %6747 = vmatmul.bf16.gmra.mxu0 0
        %v6748 = vpop.f32.mrf.mxu0
        %v6749 = vadd.f32 0.0, %v6748
        %v6750 = vpop.f32.mrf.mxu0
        %v6751 = vadd.f32 0.0, %v6750
        %6752 = vdwg.mxu0
        %v6753 = vadd.f32 %v6567, %v6674
        %v6754 = vadd.f32 %v6568, %v6676
        %v6755 = vadd.f32 %v6569, %v6679
        %v6756 = vadd.f32 %v6570, %v6681
        %v6757 = vadd.f32 %v6571, %v6684
        %v6758 = vadd.f32 %v6572, %v6686
        %v6759 = vadd.f32 %v6573, %v6689
        %v6760 = vadd.f32 %v6574, %v6691
        %v6761 = vadd.f32 %v6575, %v6694
        %v6762 = vadd.f32 %v6576, %v6696
        %v6763 = vadd.f32 %v6577, %v6699
        %v6764 = vadd.f32 %v6578, %v6701
        %v6765 = vadd.f32 %v6579, %v6704
        %v6766 = vadd.f32 %v6580, %v6706
        %v6767 = vadd.f32 %v6581, %v6709
        %v6768 = vadd.f32 %v6582, %v6711
        %v6769 = vadd.f32 %v6583, %v6714
        %v6770 = vadd.f32 %v6584, %v6716
        %v6771 = vadd.f32 %v6585, %v6719
        %v6772 = vadd.f32 %v6586, %v6721
        %v6773 = vadd.f32 %v6587, %v6724
        %v6774 = vadd.f32 %v6588, %v6726
        %v6775 = vadd.f32 %v6589, %v6729
        %v6776 = vadd.f32 %v6590, %v6731
        %v6777 = vadd.f32 %v6591, %v6734
        %v6778 = vadd.f32 %v6592, %v6736
        %v6779 = vadd.f32 %v6593, %v6739
        %v6780 = vadd.f32 %v6594, %v6741
        %v6781 = vadd.f32 %v6595, %v6744
        %v6782 = vadd.f32 %v6596, %v6746
        %v6783 = vadd.f32 %v6597, %v6749
        %v6784 = vadd.f32 %v6598, %v6751
        %v6785 = vsel %vm3125, %v4547, 0
        %v6786 = vsel %vm2111, %v4548, 0
        %v6787 = vsel %vm2118, %v4549, 0
        %v6788 = vsel %vm2125, %v4550, 0
        %v6789 = vsel %vm2132, %v4551, 0
        %v6790 = vsel %vm2139, %v4552, 0
        %v6791 = vsel %vm2146, %v4553, 0
        %v6792 = vsel %vm2153, %v4554, 0
        %v6793 = vsel %vm2160, %v4555, 0
        %v6794 = vsel %vm2167, %v4556, 0
        %v6795 = vsel %vm2174, %v4557, 0
        %v6796 = vsel %vm2181, %v4558, 0
        %v6797 = vsel %vm2188, %v4559, 0
        %v6798 = vsel %vm2195, %v4560, 0
        %v6799 = vsel %vm2202, %v4561, 0
        %s6800 = scalar_lea.vmem [#allocation7], 512
        %v6801 = vld [vmem:[%s6800] sm:$0xf]
        %v6802 = vld [vmem:[%s6800 + $0x4] sm:$0xf]
        %v6803 = vld [vmem:[%s6800 + $0x8] sm:$0xf]
        %v6804 = vld [vmem:[%s6800 + $0xc] sm:$0xf]
        %v6805 = vld [vmem:[%s6800 + $0x10] sm:$0xf]
        %v6806 = vld [vmem:[%s6800 + $0x14] sm:$0xf]
        %v6807 = vld [vmem:[%s6800 + $0x18] sm:$0xf]
        %v6808 = vld [vmem:[%s6800 + $0x1c] sm:$0xf]
        %v6809 = vld [vmem:[%s6800 + $0x20] sm:$0xf]
        %v6810 = vld [vmem:[%s6800 + $0x24] sm:$0xf]
        %v6811 = vld [vmem:[%s6800 + $0x28] sm:$0xf]
        %v6812 = vld [vmem:[%s6800 + $0x2c] sm:$0xf]
        %v6813 = vld [vmem:[%s6800 + $0x30] sm:$0xf]
        %v6814 = vld [vmem:[%s6800 + $0x34] sm:$0xf]
        %v6815 = vld [vmem:[%s6800 + $0x38] sm:$0xf]
        %v6816 = vld [vmem:[%s6800 + $0x3c] sm:$0xf]
        %v6818 = vshrl.u32 %v6785, 16
        %v6820 = vshll.u32 %v6785, 16
        %v6822 = vrot.slane %v6820, 1
        %v6823 = vor.u32 %v6818, %v6822
        %v6825 = vshll.u32 %v6786, 16
        %v6827 = vrot.slane %v6825, 1
        %v6828 = vsel %vm1113, %v6823, %v6827
        %v6829 = vshrl.u32 %v6786, 16
        %v6831 = vor.u32 %v6829, %v6827
        %v6833 = vshll.u32 %v6787, 16
        %v6835 = vrot.slane %v6833, 1
        %v6836 = vsel %vm1113, %v6831, %v6835
        %v6837 = vshrl.u32 %v6787, 16
        %v6839 = vor.u32 %v6837, %v6835
        %v6841 = vshll.u32 %v6788, 16
        %v6843 = vrot.slane %v6841, 1
        %v6844 = vsel %vm1113, %v6839, %v6843
        %v6845 = vshrl.u32 %v6788, 16
        %v6847 = vor.u32 %v6845, %v6843
        %v6849 = vshll.u32 %v6789, 16
        %v6851 = vrot.slane %v6849, 1
        %v6852 = vsel %vm1113, %v6847, %v6851
        %v6853 = vshrl.u32 %v6789, 16
        %v6855 = vor.u32 %v6853, %v6851
        %v6857 = vshll.u32 %v6790, 16
        %v6859 = vrot.slane %v6857, 1
        %v6860 = vsel %vm1113, %v6855, %v6859
        %v6861 = vshrl.u32 %v6790, 16
        %v6863 = vor.u32 %v6861, %v6859
        %v6865 = vshll.u32 %v6791, 16
        %v6867 = vrot.slane %v6865, 1
        %v6868 = vsel %vm1113, %v6863, %v6867
        %v6869 = vshrl.u32 %v6791, 16
        %v6871 = vor.u32 %v6869, %v6867
        %v6873 = vshll.u32 %v6792, 16
        %v6875 = vrot.slane %v6873, 1
        %v6876 = vsel %vm1113, %v6871, %v6875
        %v6877 = vshrl.u32 %v6792, 16
        %v6879 = vor.u32 %v6877, %v6875
        %v6881 = vshll.u32 %v6793, 16
        %v6883 = vrot.slane %v6881, 1
        %v6884 = vsel %vm1113, %v6879, %v6883
        %v6885 = vshrl.u32 %v6793, 16
        %v6887 = vor.u32 %v6885, %v6883
        %v6889 = vshll.u32 %v6794, 16
        %v6891 = vrot.slane %v6889, 1
        %v6892 = vsel %vm1113, %v6887, %v6891
        %v6893 = vshrl.u32 %v6794, 16
        %v6895 = vor.u32 %v6893, %v6891
        %v6897 = vshll.u32 %v6795, 16
        %v6899 = vrot.slane %v6897, 1
        %v6900 = vsel %vm1113, %v6895, %v6899
        %v6901 = vshrl.u32 %v6795, 16
        %v6903 = vor.u32 %v6901, %v6899
        %v6905 = vshll.u32 %v6796, 16
        %v6907 = vrot.slane %v6905, 1
        %v6908 = vsel %vm1113, %v6903, %v6907
        %v6909 = vshrl.u32 %v6796, 16
        %v6911 = vor.u32 %v6909, %v6907
        %v6913 = vshll.u32 %v6797, 16
        %v6915 = vrot.slane %v6913, 1
        %v6916 = vsel %vm1113, %v6911, %v6915
        %v6917 = vshrl.u32 %v6797, 16
        %v6919 = vor.u32 %v6917, %v6915
        %v6921 = vshll.u32 %v6798, 16
        %v6923 = vrot.slane %v6921, 1
        %v6924 = vsel %vm1113, %v6919, %v6923
        %v6925 = vshrl.u32 %v6798, 16
        %v6927 = vor.u32 %v6925, %v6923
        %v6929 = vshll.u32 %v6799, 16
        %v6931 = vrot.slane %v6929, 1
        %v6932 = vsel %vm1113, %v6927, %v6931
        %v6933 = vshrl.u32 %v6799, 16
        %v6935 = vor.u32 %v6933, %v6931
        %v6936 = vsel %vm1113, %v6935, %v2250
        %v6968 = vunpack.c.l.b16 %v6801
        %v6969 = vunpack.c.l.b16 %v6802
        %v6970 = vunpack.c.l.b16 %v6803
        %v6971 = vunpack.c.l.b16 %v6804
        %v6972 = vunpack.c.l.b16 %v6805
        %v6973 = vunpack.c.l.b16 %v6806
        %v6974 = vunpack.c.l.b16 %v6807
        %v6975 = vunpack.c.l.b16 %v6808
        %v6976 = vunpack.c.l.b16 %v6809
        %v6977 = vunpack.c.l.b16 %v6810
        %v6978 = vunpack.c.l.b16 %v6811
        %v6979 = vunpack.c.l.b16 %v6812
        %v6980 = vunpack.c.l.b16 %v6813
        %v6981 = vunpack.c.l.b16 %v6814
        %v6982 = vunpack.c.l.b16 %v6815
        %v6983 = vunpack.c.l.b16 %v6816
        %v6984 = vpack.c.b16 %v6969, %v6968
        %v6985 = vpack.c.b16 %v6971, %v6970
        %v6986 = vpack.c.b16 %v6973, %v6972
        %v6987 = vpack.c.b16 %v6975, %v6974
        %v6988 = vpack.c.b16 %v6977, %v6976
        %v6989 = vpack.c.b16 %v6979, %v6978
        %v6990 = vpack.c.b16 %v6981, %v6980
        %v6991 = vpack.c.b16 %v6983, %v6982
        %7000 = vmatpush.bf16.msra.mxu0 %v6991
        %7001 = vmatpush.bf16.msra.mxu0 %v6990
        %7002 = vmatpush.bf16.msra.mxu0 %v6989
        %7003 = vmatpush.bf16.msra.mxu0 %v6988
        %7004 = vmatpush.bf16.msra.mxu0 %v6987
        %7005 = vmatpush.bf16.msra.mxu0 %v6986
        %7006 = vmatpush.bf16.msra.mxu0 %v6985
        %7007 = vmatpush.bf16.msra.mxu0 %v6984
        %7008 = vmatmul.bf16.gmra.mxu0 %v6828
        %v7009 = vpop.f32.mrf.mxu0
        %v7010 = vadd.f32 0.0, %v7009
        %v7011 = vpop.f32.mrf.mxu0
        %v7012 = vadd.f32 0.0, %v7011
        %7013 = vmatmul.bf16.gmra.mxu0 %v6836
        %v7014 = vpop.f32.mrf.mxu0
        %v7015 = vadd.f32 0.0, %v7014
        %v7016 = vpop.f32.mrf.mxu0
        %v7017 = vadd.f32 0.0, %v7016
        %7018 = vmatmul.bf16.gmra.mxu0 %v6844
        %v7019 = vpop.f32.mrf.mxu0
        %v7020 = vadd.f32 0.0, %v7019
        %v7021 = vpop.f32.mrf.mxu0
        %v7022 = vadd.f32 0.0, %v7021
        %7023 = vmatmul.bf16.gmra.mxu0 %v6852
        %v7024 = vpop.f32.mrf.mxu0
        %v7025 = vadd.f32 0.0, %v7024
        %v7026 = vpop.f32.mrf.mxu0
        %v7027 = vadd.f32 0.0, %v7026
        %7028 = vmatmul.bf16.gmra.mxu0 %v6860
        %v7029 = vpop.f32.mrf.mxu0
        %v7030 = vadd.f32 0.0, %v7029
        %v7031 = vpop.f32.mrf.mxu0
        %v7032 = vadd.f32 0.0, %v7031
        %7033 = vmatmul.bf16.gmra.mxu0 %v6868
        %v7034 = vpop.f32.mrf.mxu0
        %v7035 = vadd.f32 0.0, %v7034
        %v7036 = vpop.f32.mrf.mxu0
        %v7037 = vadd.f32 0.0, %v7036
        %7038 = vmatmul.bf16.gmra.mxu0 %v6876
        %v7039 = vpop.f32.mrf.mxu0
        %v7040 = vadd.f32 0.0, %v7039
        %v7041 = vpop.f32.mrf.mxu0
        %v7042 = vadd.f32 0.0, %v7041
        %7043 = vmatmul.bf16.gmra.mxu0 %v6884
        %v7044 = vpop.f32.mrf.mxu0
        %v7045 = vadd.f32 0.0, %v7044
        %v7046 = vpop.f32.mrf.mxu0
        %v7047 = vadd.f32 0.0, %v7046
        %7048 = vmatmul.bf16.gmra.mxu0 %v6892
        %v7049 = vpop.f32.mrf.mxu0
        %v7050 = vadd.f32 0.0, %v7049
        %v7051 = vpop.f32.mrf.mxu0
        %v7052 = vadd.f32 0.0, %v7051
        %7053 = vmatmul.bf16.gmra.mxu0 %v6900
        %v7054 = vpop.f32.mrf.mxu0
        %v7055 = vadd.f32 0.0, %v7054
        %v7056 = vpop.f32.mrf.mxu0
        %v7057 = vadd.f32 0.0, %v7056
        %7058 = vmatmul.bf16.gmra.mxu0 %v6908
        %v7059 = vpop.f32.mrf.mxu0
        %v7060 = vadd.f32 0.0, %v7059
        %v7061 = vpop.f32.mrf.mxu0
        %v7062 = vadd.f32 0.0, %v7061
        %7063 = vmatmul.bf16.gmra.mxu0 %v6916
        %v7064 = vpop.f32.mrf.mxu0
        %v7065 = vadd.f32 0.0, %v7064
        %v7066 = vpop.f32.mrf.mxu0
        %v7067 = vadd.f32 0.0, %v7066
        %7068 = vmatmul.bf16.gmra.mxu0 %v6924
        %v7069 = vpop.f32.mrf.mxu0
        %v7070 = vadd.f32 0.0, %v7069
        %v7071 = vpop.f32.mrf.mxu0
        %v7072 = vadd.f32 0.0, %v7071
        %7073 = vmatmul.bf16.gmra.mxu0 %v6932
        %v7074 = vpop.f32.mrf.mxu0
        %v7075 = vadd.f32 0.0, %v7074
        %v7076 = vpop.f32.mrf.mxu0
        %v7077 = vadd.f32 0.0, %v7076
        %7078 = vmatmul.bf16.gmra.mxu0 %v6936
        %v7079 = vpop.f32.mrf.mxu0
        %v7080 = vadd.f32 0.0, %v7079
        %v7081 = vpop.f32.mrf.mxu0
        %v7082 = vadd.f32 0.0, %v7081
        %7083 = vmatmul.bf16.gmra.mxu0 %v4160
        %v7084 = vpop.f32.mrf.mxu0
        %v7085 = vadd.f32 0.0, %v7084
        %v7086 = vpop.f32.mrf.mxu0
        %v7087 = vadd.f32 0.0, %v7086
        %7088 = vdwg.mxu0
        %v7089 = vadd.f32 %v6753, %v7010
        %v7090 = vadd.f32 %v6754, %v7012
        %v7091 = vadd.f32 %v6755, %v7015
        %v7092 = vadd.f32 %v6756, %v7017
        %v7093 = vadd.f32 %v6757, %v7020
        %v7094 = vadd.f32 %v6758, %v7022
        %v7095 = vadd.f32 %v6759, %v7025
        %v7096 = vadd.f32 %v6760, %v7027
        %v7097 = vadd.f32 %v6761, %v7030
        %v7098 = vadd.f32 %v6762, %v7032
        %v7099 = vadd.f32 %v6763, %v7035
        %v7100 = vadd.f32 %v6764, %v7037
        %v7101 = vadd.f32 %v6765, %v7040
        %v7102 = vadd.f32 %v6766, %v7042
        %v7103 = vadd.f32 %v6767, %v7045
        %v7104 = vadd.f32 %v6768, %v7047
        %v7105 = vadd.f32 %v6769, %v7050
        %v7106 = vadd.f32 %v6770, %v7052
        %v7107 = vadd.f32 %v6771, %v7055
        %v7108 = vadd.f32 %v6772, %v7057
        %v7109 = vadd.f32 %v6773, %v7060
        %v7110 = vadd.f32 %v6774, %v7062
        %v7111 = vadd.f32 %v6775, %v7065
        %v7112 = vadd.f32 %v6776, %v7067
        %v7113 = vadd.f32 %v6777, %v7070
        %v7114 = vadd.f32 %v6778, %v7072
        %v7115 = vadd.f32 %v6779, %v7075
        %v7116 = vadd.f32 %v6780, %v7077
        %v7117 = vadd.f32 %v6781, %v7080
        %v7118 = vadd.f32 %v6782, %v7082
        %v7119 = vadd.f32 %v6783, %v7085
        %v7120 = vadd.f32 %v6784, %v7087
        %v7121 = vld [vmem:[%s5] sm:$0x1]
        %v7123 = vperm.slane %v7121, 0
        %v7125 = vmul.f32 %v7089, %v7123
        %v7126 = vmul.f32 %v7090, %v7123
        %v7127 = vmul.f32 %v7091, %v7123
        %v7128 = vmul.f32 %v7092, %v7123
        %v7129 = vmul.f32 %v7093, %v7123
        %v7130 = vmul.f32 %v7094, %v7123
        %v7131 = vmul.f32 %v7095, %v7123
        %v7132 = vmul.f32 %v7096, %v7123
        %v7133 = vmul.f32 %v7097, %v7123
        %v7134 = vmul.f32 %v7098, %v7123
        %v7135 = vmul.f32 %v7099, %v7123
        %v7136 = vmul.f32 %v7100, %v7123
        %v7137 = vmul.f32 %v7101, %v7123
        %v7138 = vmul.f32 %v7102, %v7123
        %v7139 = vmul.f32 %v7103, %v7123
        %v7140 = vmul.f32 %v7104, %v7123
        %v7141 = vmul.f32 %v7105, %v7123
        %v7142 = vmul.f32 %v7106, %v7123
        %v7143 = vmul.f32 %v7107, %v7123
        %v7144 = vmul.f32 %v7108, %v7123
        %v7145 = vmul.f32 %v7109, %v7123
        %v7146 = vmul.f32 %v7110, %v7123
        %v7147 = vmul.f32 %v7111, %v7123
        %v7148 = vmul.f32 %v7112, %v7123
        %v7149 = vmul.f32 %v7113, %v7123
        %v7150 = vmul.f32 %v7114, %v7123
        %v7151 = vmul.f32 %v7115, %v7123
        %v7152 = vmul.f32 %v7116, %v7123
        %v7153 = vmul.f32 %v7117, %v7123
        %v7154 = vmul.f32 %v7118, %v7123
        %v7155 = vmul.f32 %v7119, %v7123
        %v7156 = vmul.f32 %v7120, %v7123
        %v7157 = vld [vmem:[%s6] sm:$0x1]
        %v7159 = vperm.slane %v7157, 0
        %v7161 = vadd.f32 %v7125, %v7159
        %v7162 = vadd.f32 %v7126, %v7159
        %v7163 = vadd.f32 %v7127, %v7159
        %v7164 = vadd.f32 %v7128, %v7159
        %v7165 = vadd.f32 %v7129, %v7159
        %v7166 = vadd.f32 %v7130, %v7159
        %v7167 = vadd.f32 %v7131, %v7159
        %v7168 = vadd.f32 %v7132, %v7159
        %v7169 = vadd.f32 %v7133, %v7159
        %v7170 = vadd.f32 %v7134, %v7159
        %v7171 = vadd.f32 %v7135, %v7159
        %v7172 = vadd.f32 %v7136, %v7159
        %v7173 = vadd.f32 %v7137, %v7159
        %v7174 = vadd.f32 %v7138, %v7159
        %v7175 = vadd.f32 %v7139, %v7159
        %v7176 = vadd.f32 %v7140, %v7159
        %v7177 = vadd.f32 %v7141, %v7159
        %v7178 = vadd.f32 %v7142, %v7159
        %v7179 = vadd.f32 %v7143, %v7159
        %v7180 = vadd.f32 %v7144, %v7159
        %v7181 = vadd.f32 %v7145, %v7159
        %v7182 = vadd.f32 %v7146, %v7159
        %v7183 = vadd.f32 %v7147, %v7159
        %v7184 = vadd.f32 %v7148, %v7159
        %v7185 = vadd.f32 %v7149, %v7159
        %v7186 = vadd.f32 %v7150, %v7159
        %v7187 = vadd.f32 %v7151, %v7159
        %v7188 = vadd.f32 %v7152, %v7159
        %v7189 = vadd.f32 %v7153, %v7159
        %v7190 = vadd.f32 %v7154, %v7159
        %v7191 = vadd.f32 %v7155, %v7159
        %v7192 = vadd.f32 %v7156, %v7159
        %v7193 = vunpack.c.l.bf16 %v816
        %v7194 = vunpack.c.l.bf16 %v817
        %v7195 = vunpack.c.l.bf16 %v818
        %v7196 = vunpack.c.l.bf16 %v819
        %v7197 = vunpack.c.l.bf16 %v820
        %v7198 = vunpack.c.l.bf16 %v821
        %v7199 = vunpack.c.l.bf16 %v822
        %v7200 = vunpack.c.l.bf16 %v823
        %v7201 = vunpack.c.l.bf16 %v824
        %v7202 = vunpack.c.l.bf16 %v825
        %v7203 = vunpack.c.l.bf16 %v826
        %v7204 = vunpack.c.l.bf16 %v827
        %v7205 = vunpack.c.l.bf16 %v828
        %v7206 = vunpack.c.l.bf16 %v829
        %v7207 = vunpack.c.l.bf16 %v830
        %v7208 = vunpack.c.l.bf16 %v831
        %v7209 = vunpack.c.l.bf16 %v832
        %v7210 = vunpack.c.l.bf16 %v833
        %v7211 = vunpack.c.l.bf16 %v834
        %v7212 = vunpack.c.l.bf16 %v835
        %v7213 = vunpack.c.l.bf16 %v836
        %v7214 = vunpack.c.l.bf16 %v837
        %v7215 = vunpack.c.l.bf16 %v838
        %v7216 = vunpack.c.l.bf16 %v839
        %v7217 = vunpack.c.l.bf16 %v840
        %v7218 = vunpack.c.l.bf16 %v841
        %v7219 = vunpack.c.l.bf16 %v842
        %v7220 = vunpack.c.l.bf16 %v843
        %v7221 = vunpack.c.l.bf16 %v844
        %v7222 = vunpack.c.l.bf16 %v845
        %v7223 = vunpack.c.l.bf16 %v846
        %v7224 = vunpack.c.l.bf16 %v847
        %v7225 = vadd.f32 %v7161, %v7193
        %v7226 = vadd.f32 %v7162, %v7194
        %v7227 = vadd.f32 %v7163, %v7195
        %v7228 = vadd.f32 %v7164, %v7196
        %v7229 = vadd.f32 %v7165, %v7197
        %v7230 = vadd.f32 %v7166, %v7198
        %v7231 = vadd.f32 %v7167, %v7199
        %v7232 = vadd.f32 %v7168, %v7200
        %v7233 = vadd.f32 %v7169, %v7201
        %v7234 = vadd.f32 %v7170, %v7202
        %v7235 = vadd.f32 %v7171, %v7203
        %v7236 = vadd.f32 %v7172, %v7204
        %v7237 = vadd.f32 %v7173, %v7205
        %v7238 = vadd.f32 %v7174, %v7206
        %v7239 = vadd.f32 %v7175, %v7207
        %v7240 = vadd.f32 %v7176, %v7208
        %v7241 = vadd.f32 %v7177, %v7209
        %v7242 = vadd.f32 %v7178, %v7210
        %v7243 = vadd.f32 %v7179, %v7211
        %v7244 = vadd.f32 %v7180, %v7212
        %v7245 = vadd.f32 %v7181, %v7213
        %v7246 = vadd.f32 %v7182, %v7214
        %v7247 = vadd.f32 %v7183, %v7215
        %v7248 = vadd.f32 %v7184, %v7216
        %v7249 = vadd.f32 %v7185, %v7217
        %v7250 = vadd.f32 %v7186, %v7218
        %v7251 = vadd.f32 %v7187, %v7219
        %v7252 = vadd.f32 %v7188, %v7220
        %v7253 = vadd.f32 %v7189, %v7221
        %v7254 = vadd.f32 %v7190, %v7222
        %v7255 = vadd.f32 %v7191, %v7223
        %v7256 = vadd.f32 %v7192, %v7224
        %v7257 = vmax.f32 %v7225, 0.0
        %v7258 = vmax.f32 %v7226, 0.0
        %v7259 = vmax.f32 %v7227, 0.0
        %v7260 = vmax.f32 %v7228, 0.0
        %v7261 = vmax.f32 %v7229, 0.0
        %v7262 = vmax.f32 %v7230, 0.0
        %v7263 = vmax.f32 %v7231, 0.0
        %v7264 = vmax.f32 %v7232, 0.0
        %v7265 = vmax.f32 %v7233, 0.0
        %v7266 = vmax.f32 %v7234, 0.0
        %v7267 = vmax.f32 %v7235, 0.0
        %v7268 = vmax.f32 %v7236, 0.0
        %v7269 = vmax.f32 %v7237, 0.0
        %v7270 = vmax.f32 %v7238, 0.0
        %v7271 = vmax.f32 %v7239, 0.0
        %v7272 = vmax.f32 %v7240, 0.0
        %v7273 = vmax.f32 %v7241, 0.0
        %v7274 = vmax.f32 %v7242, 0.0
        %v7275 = vmax.f32 %v7243, 0.0
        %v7276 = vmax.f32 %v7244, 0.0
        %v7277 = vmax.f32 %v7245, 0.0
        %v7278 = vmax.f32 %v7246, 0.0
        %v7279 = vmax.f32 %v7247, 0.0
        %v7280 = vmax.f32 %v7248, 0.0
        %v7281 = vmax.f32 %v7249, 0.0
        %v7282 = vmax.f32 %v7250, 0.0
        %v7283 = vmax.f32 %v7251, 0.0
        %v7284 = vmax.f32 %v7252, 0.0
        %v7285 = vmax.f32 %v7253, 0.0
        %v7286 = vmax.f32 %v7254, 0.0
        %v7287 = vmax.f32 %v7255, 0.0
        %v7288 = vmax.f32 %v7256, 0.0
        %v7289 = vpack.c.bf16 %v7257, %v7257
        %v7290 = vpack.c.bf16 %v7258, %v7258
        %v7291 = vpack.c.bf16 %v7259, %v7259
        %v7292 = vpack.c.bf16 %v7260, %v7260
        %v7293 = vpack.c.bf16 %v7261, %v7261
        %v7294 = vpack.c.bf16 %v7262, %v7262
        %v7295 = vpack.c.bf16 %v7263, %v7263
        %v7296 = vpack.c.bf16 %v7264, %v7264
        %v7297 = vpack.c.bf16 %v7265, %v7265
        %v7298 = vpack.c.bf16 %v7266, %v7266
        %v7299 = vpack.c.bf16 %v7267, %v7267
        %v7300 = vpack.c.bf16 %v7268, %v7268
        %v7301 = vpack.c.bf16 %v7269, %v7269
        %v7302 = vpack.c.bf16 %v7270, %v7270
        %v7303 = vpack.c.bf16 %v7271, %v7271
        %v7304 = vpack.c.bf16 %v7272, %v7272
        %v7305 = vpack.c.bf16 %v7273, %v7273
        %v7306 = vpack.c.bf16 %v7274, %v7274
        %v7307 = vpack.c.bf16 %v7275, %v7275
        %v7308 = vpack.c.bf16 %v7276, %v7276
        %v7309 = vpack.c.bf16 %v7277, %v7277
        %v7310 = vpack.c.bf16 %v7278, %v7278
        %v7311 = vpack.c.bf16 %v7279, %v7279
        %v7312 = vpack.c.bf16 %v7280, %v7280
        %v7313 = vpack.c.bf16 %v7281, %v7281
        %v7314 = vpack.c.bf16 %v7282, %v7282
        %v7315 = vpack.c.bf16 %v7283, %v7283
        %v7316 = vpack.c.bf16 %v7284, %v7284
        %v7317 = vpack.c.bf16 %v7285, %v7285
        %v7318 = vpack.c.bf16 %v7286, %v7286
        %v7319 = vpack.c.bf16 %v7287, %v7287
        %v7320 = vpack.c.bf16 %v7288, %v7288
        %7321 = vst [vmem:[%s331] sm:$0xf] %v7289
        %7322 = vst [vmem:[%s331 + $0x4] sm:$0xf] %v7290
        %7323 = vst [vmem:[%s331 + $0x8] sm:$0xf] %v7291
        %7324 = vst [vmem:[%s331 + $0xc] sm:$0xf] %v7292
        %7325 = vst [vmem:[%s331 + $0x10] sm:$0xf] %v7293
        %7326 = vst [vmem:[%s331 + $0x14] sm:$0xf] %v7294
        %7327 = vst [vmem:[%s331 + $0x18] sm:$0xf] %v7295
        %7328 = vst [vmem:[%s331 + $0x1c] sm:$0xf] %v7296
        %7329 = vst [vmem:[%s331 + $0x20] sm:$0xf] %v7297
        %7330 = vst [vmem:[%s331 + $0x24] sm:$0xf] %v7298
        %7331 = vst [vmem:[%s331 + $0x28] sm:$0xf] %v7299
        %7332 = vst [vmem:[%s331 + $0x2c] sm:$0xf] %v7300
        %7333 = vst [vmem:[%s331 + $0x30] sm:$0xf] %v7301
        %7334 = vst [vmem:[%s331 + $0x34] sm:$0xf] %v7302
        %7335 = vst [vmem:[%s331 + $0x38] sm:$0xf] %v7303
        %7336 = vst [vmem:[%s331 + $0x3c] sm:$0xf] %v7304
        %7337 = vst [vmem:[%s331 + $0x40] sm:$0xf] %v7305
        %7338 = vst [vmem:[%s331 + $0x44] sm:$0xf] %v7306
        %7339 = vst [vmem:[%s331 + $0x48] sm:$0xf] %v7307
        %7340 = vst [vmem:[%s331 + $0x4c] sm:$0xf] %v7308
        %7341 = vst [vmem:[%s331 + $0x50] sm:$0xf] %v7309
        %7342 = vst [vmem:[%s331 + $0x54] sm:$0xf] %v7310
        %7343 = vst [vmem:[%s331 + $0x58] sm:$0xf] %v7311
        %7344 = vst [vmem:[%s331 + $0x5c] sm:$0xf] %v7312
        %7345 = vst [vmem:[%s331 + $0x60] sm:$0xf] %v7313
        %7346 = vst [vmem:[%s331 + $0x64] sm:$0xf] %v7314
        %7347 = vst [vmem:[%s331 + $0x68] sm:$0xf] %v7315
        %7348 = vst [vmem:[%s331 + $0x6c] sm:$0xf] %v7316
        %7349 = vst [vmem:[%s331 + $0x70] sm:$0xf] %v7317
        %7350 = vst [vmem:[%s331 + $0x74] sm:$0xf] %v7318
        %7351 = vst [vmem:[%s331 + $0x78] sm:$0xf] %v7319
        %7352 = vst [vmem:[%s331 + $0x7c] sm:$0xf] %v7320
        %s7353 = sand.u32 %s185, 1
        %s7354 = scalar_lea.sflag [#allocation4], %s7353
        %s7355 = sand.u32 %s185, 1
        %s7356 = smul.addr %s7355, 128
        %s7357 = scalar_lea.vmem [#allocation8], %s7356
        // Predicated region
        $region61: #{tpu_custom_call.1} parent=47 // pred_check
          %p7358 = pneg %p195
        $region62: #{tpu_custom_call.1} parent=47 // pred_check_branch
          %7360 = sbr.rel (%p7358) target = $region64
        $region63: #{tpu_custom_call.1} parent=47 // pred_region
          %7362 = vsyncadd %s7354, 0
          %s7363 = smul.addr %s25, 32
          %s7364 = smul.addr %s7363, 4
          %s7365 = scalar_lea.hbm %s7, %s7364
          %s7366 = sshll.u32 %s7357, 4
          %s7367 = int_to_ptr.vmem [resolvable:$true] %s7366
          %s7368 = sshll.u32 %s7365, 4
          %s7369 = int_to_ptr.hbm [resolvable:$true] %s7368
          %7374 = dma.vmem_to_hbm [thread:$0]  %s7367, 2048, %s7369, %s7354, 64, 64, 4
        $region64: #{tpu_custom_call.1} parent=47 // pred_fallthru
          _
      $region48: #{tpu_custom_call.1} parent=5 // pred_fallthru
        _
      %p7375 = scmp.le.s32.totalorder 2, %s20
      // Predicated region
      $region65: #{tpu_custom_call.1} parent=5 // pred_check
        %p7376 = pneg %p7375
      $region66: #{tpu_custom_call.1} parent=5 // pred_check_branch
        %7378 = sbr.rel (%p7376) target = $region68
      $region67: #{tpu_custom_call.1} parent=5 // pred_region
        %s7379 = ssub.s32 %s20, 2
        // Predicated region
        $region69: #{tpu_custom_call.1} parent=67 // pred_check
          %p7380 = pneg %p201
        $region70: #{tpu_custom_call.1} parent=67 // pred_check_branch
          %7382 = sbr.rel (%p7380) target = $region72
        $region71: #{tpu_custom_call.1} parent=67 // pred_region
          %s7383 = sand.u32 %s186, 1
          %s7384 = scalar_lea.sflag [#allocation4], %s7383
          %s7385 = sand.u32 %s186, 1
          %s7386 = smul.addr %s7385, 128
          %s7387 = scalar_lea.vmem [#allocation8], %s7386
          %7389 = dma.done %s7384, 2048
        $region72: #{tpu_custom_call.1} parent=67 // pred_fallthru
          _
      $region68: #{tpu_custom_call.1} parent=5 // pred_fallthru
        _
    $region6: #{tpu_custom_call.1} parent=1 // loop_footer
      %s24 = sadd.s32 1, %s20
    $region7: #{tpu_custom_call.1} parent=1 // loop_footer_branch
      %19 = sbr.rel target = $region3
    $region8: #{tpu_custom_call.1} parent=1 // loop_exit
      _
    %7390 = vsyncpa [#allocation3], 1
    %s7391 = scalar_lea.sflag [#allocation3], 1
    %7392 = vsyncpa %s7391, 1
    %7393 = vsyncpa [#allocation6], 1
    %7394 = vsyncpa [#allocation4], 1
    %s7395 = scalar_lea.sflag [#allocation4], 1
    %7396 = vsyncpa %s7395, 1

</llo_original>
